<compile_context>
chip_gen: v6e
topology: v6e:2x2x1
jax: 0.10.0
libtpu: 0.0.40
codegen_flags: <defaults>
</compile_context>

<pallas_src>
import functools

import jax
import jax.numpy as jnp
from jax.experimental import pallas as pl
from jax.experimental.pallas import tpu as pltpu

MNIST_SIZE = 28
IMG = MNIST_SIZE ** 2          # 784
IMG_P = 896                    # 7 * 128
H200, H200_P = 200, 256
H100, H100_P = 100, 128
H50, H50_P = 50, 128

# (fan_in, fan_out) for every Linear, in PyTorch module order.
_LAYER_DIMS = [
    (IMG, 200), (200, 200),              # q1
    (200, 100), (200, 100),              # q1_mu, q1_log_std
    (100, 100), (100, 100),              # q2
    (100, 50), (100, 50),                # q2_mu, q2_log_std
    (50, 100), (100, 100),               # p1
    (100, 100), (100, 100),              # p1_mu, p1_log_std
    (100, 200), (200, 200), (200, IMG),  # p0
]


def _round_up(a, b):
    return (a + b - 1) // b * b


def _linear(x, w_ref, b_ref):
    return jnp.dot(x, w_ref[...], preferred_element_type=jnp.float32) + b_ref[...]


def iwae_kernel(
    # data (x: batch-tiled, reused across k; eps: per (k, batch-tile))
    x_ref, eps1_ref, eps2_ref,
    # parameters (full padded blocks, resident in VMEM)
    q1_w1, q1_b1, q1_w2, q1_b2, q1h_w, q1h_b,
    q2_w1, q2_b1, q2_w2, q2_b2, q2h_w, q2h_b,
    p1_w1, p1_b1, p1_w2, p1_b2, p1h_w, p1h_b,
    p0_w1, p0_b1, p0_w2, p0_b2, p0_w3, p0_b3,
    # outputs (per (k, batch-tile), lane-dense padded widths)
    q1s_out, muq1_out, stdq1_out,
    q2s_out, muq2_out, stdq2_out,
    mup1_out, stdp1_out, mup0_out,
):
    x = x_ref[...]                                   # (tb, 896)

    # q1 encoder; mu/log_std heads fused into one (256 -> 256) matmul.
    h = jnp.tanh(_linear(x, q1_w1, q1_b1))           # (tb, 256)
    l1 = jnp.tanh(_linear(h, q1_w2, q1_b2))          # (tb, 256)
    hd1 = _linear(l1, q1h_w, q1h_b)                  # (tb, 256) = [mu | log_std]
    mu_q1 = hd1[:, :H100_P]
    std_q1 = jnp.exp(hd1[:, H100_P:])
    q1s = mu_q1 + eps1_ref[...] * std_q1 + 1e-6      # (tb, 128)

    # q2 encoder; fused heads (128 -> 256).
    h2 = jnp.tanh(_linear(q1s, q2_w1, q2_b1))        # (tb, 128)
    l2 = jnp.tanh(_linear(h2, q2_w2, q2_b2))         # (tb, 128)
    hd2 = _linear(l2, q2h_w, q2h_b)                  # (tb, 256)
    mu_q2 = hd2[:, :H50_P]
    std_q2 = jnp.exp(hd2[:, H50_P:])
    q2s = mu_q2 + eps2_ref[...] * std_q2 + 1e-6      # (tb, 128)

    # p1 decoder (q2 -> q1 space); fused heads (128 -> 256).
    h3 = jnp.tanh(_linear(q2s, p1_w1, p1_b1))        # (tb, 128)
    l3 = jnp.tanh(_linear(h3, p1_w2, p1_b2))         # (tb, 128)
    hd3 = _linear(l3, p1h_w, p1h_b)                  # (tb, 256)
    mu_p1 = hd3[:, :H100_P]
    std_p1 = jnp.exp(hd3[:, H100_P:])

    # p0 decoder (q1 -> pixel space).
    g = jnp.tanh(_linear(q1s, p0_w1, p0_b1))         # (tb, 256)
    g = jnp.tanh(_linear(g, p0_w2, p0_b2))           # (tb, 256)
    mu_p0 = jax.nn.sigmoid(_linear(g, p0_w3, p0_b3)) # (tb, 896)

    q1s_out[...] = q1s
    muq1_out[...] = mu_q1
    stdq1_out[...] = std_q1
    q2s_out[...] = q2s
    muq2_out[...] = mu_q2
    stdq2_out[...] = std_q2
    mup1_out[...] = mu_p1
    stdp1_out[...] = std_p1
    mup0_out[...] = mu_p0


def init_params(key):
    """Deterministic PyTorch-style (uniform +-1/sqrt(fan_in)) init, W stored (in, out)."""
    params = []
    for fan_in, fan_out in _LAYER_DIMS:
        key, kw, kb = jax.random.split(key, 3)
        bound = 1.0 / (fan_in ** 0.5)
        w = jax.random.uniform(kw, (fan_in, fan_out), jnp.float32, -bound, bound)
        b = jax.random.uniform(kb, (1, fan_out), jnp.float32, -bound, bound)
        params += [w, b]
    return params


def _pack_params(params):
    """Zero-pad every layer to lane/MXU-aligned shapes and fuse mu||log_std heads."""
    p = params

    def pad_wb(w, b, pin, pout):
        w = jnp.pad(w, ((0, pin - w.shape[0]), (0, pout - w.shape[1])))
        b = jnp.pad(b, ((0, 0), (0, pout - b.shape[1])))
        return [w, b]

    def fuse(mu_w, mu_b, ls_w, ls_b, pin, peach):
        mw = jnp.pad(mu_w, ((0, pin - mu_w.shape[0]), (0, peach - mu_w.shape[1])))
        lw = jnp.pad(ls_w, ((0, pin - ls_w.shape[0]), (0, peach - ls_w.shape[1])))
        mb = jnp.pad(mu_b, ((0, 0), (0, peach - mu_b.shape[1])))
        lb = jnp.pad(ls_b, ((0, 0), (0, peach - ls_b.shape[1])))
        return [jnp.concatenate([mw, lw], axis=1), jnp.concatenate([mb, lb], axis=1)]

    packed = []
    packed += pad_wb(p[0], p[1], IMG_P, H200_P)                 # q1 layer 1
    packed += pad_wb(p[2], p[3], H200_P, H200_P)                # q1 layer 2
    packed += fuse(p[4], p[5], p[6], p[7], H200_P, H100_P)      # q1 mu||log_std
    packed += pad_wb(p[8], p[9], H100_P, H100_P)                # q2 layer 1
    packed += pad_wb(p[10], p[11], H100_P, H100_P)              # q2 layer 2
    packed += fuse(p[12], p[13], p[14], p[15], H100_P, H50_P)   # q2 mu||log_std
    packed += pad_wb(p[16], p[17], H50_P, H100_P)               # p1 layer 1
    packed += pad_wb(p[18], p[19], H100_P, H100_P)              # p1 layer 2
    packed += fuse(p[20], p[21], p[22], p[23], H100_P, H100_P)  # p1 mu||log_std
    packed += pad_wb(p[24], p[25], H100_P, H200_P)              # p0 layer 1
    packed += pad_wb(p[26], p[27], H200_P, H200_P)              # p0 layer 2
    packed += pad_wb(p[28], p[29], H200_P, IMG_P)               # p0 layer 3
    return packed


@functools.partial(jax.jit, static_argnames=("k", "row_tile"))
def iwae_forward(x, eps1, eps2, params, *, k, row_tile=256):
    """x: (B,1,28,28); eps1: (B,k,100); eps2: (B,k,50). Returns 9 dparams (B,k,-1)."""
    batch = x.shape[0]
    x = x.reshape(batch, -1).astype(jnp.float32)          # nn.Flatten

    tile_b = min(row_tile, _round_up(batch, 8))
    batch_pad = _round_up(batch, tile_b)

    # x is NOT replicated k times; padded once and reused across the k grid axis.
    xp = jnp.pad(x, ((0, batch_pad - batch), (0, IMG_P - IMG)))

    # eps: (B, k, d) -> (k, batch_pad, d_pad) (zero padding -> inert in the math).
    def prep_eps(e, d, dp):
        e = jnp.transpose(e.astype(jnp.float32), (1, 0, 2))
        return jnp.pad(e, ((0, 0), (0, batch_pad - batch), (0, dp - d)))

    e1 = prep_eps(eps1, H100, H100_P)
    e2 = prep_eps(eps2, H50, H50_P)

    packed = _pack_params(params)

    grid = (batch_pad // tile_b, k)

    x_spec = pl.BlockSpec((tile_b, IMG_P), lambda i, j: (i, 0))   # reused over k

    def kb_spec(d):   # (k, batch_pad, d) arrays; leading k dim squeezed in-kernel
        return pl.BlockSpec((None, tile_b, d), lambda i, j: (j, i, 0))

    def w_spec(p):    # full resident parameter block
        return pl.BlockSpec(p.shape, lambda i, j: (0, 0))

    in_specs = [x_spec, kb_spec(H100_P), kb_spec(H50_P)]
    in_specs += [w_spec(p) for p in packed]

    out_pad_dims = [H100_P] * 3 + [H50_P] * 3 + [H100_P] * 2 + [IMG_P]
    out_specs = tuple(kb_spec(d) for d in out_pad_dims)
    out_shapes = tuple(
        jax.ShapeDtypeStruct((k, batch_pad, d), jnp.float32) for d in out_pad_dims
    )

    outs = pl.pallas_call(
        iwae_kernel,
        out_shape=out_shapes,
        grid_spec=pltpu.PrefetchScalarGridSpec(
            num_scalar_prefetch=0,
            grid=grid,
            in_specs=in_specs,
            out_specs=out_specs,
        ),
        compiler_params=pltpu.CompilerParams(
            dimension_semantics=("parallel", "parallel"),
            vmem_limit_bytes=48 * 1024 * 1024,   # fits v7x's 64 MiB VMEM
        ),
    )(xp, e1, e2, *packed)

    # dparams order: q1, mu_q1, std_q1, q2, mu_q2, std_q2, mu_p1, std_p1, mu_p0
    real_dims = [H100] * 3 + [H50] * 3 + [H100] * 2 + [IMG]
    return [
        jnp.transpose(o[:, :batch, :d], (1, 0, 2)) for o, d in zip(outs, real_dims)
    ]


def iwae_forward_ref(x, eps1, eps2, params, *, k):
    """Pure-JAX reference (mirrors the PyTorch forward) for correctness checking."""
    batch = x.shape[0]
    x = x.reshape(batch, -1).astype(jnp.float32)
    xr = jnp.repeat(x, k, axis=0)                 # torch.repeat_interleave
    e1 = eps1.reshape(batch * k, -1)
    e2 = eps2.reshape(batch * k, -1)
    p = params
    lin = lambda a, w, b: a @ w + b
    h = jnp.tanh(lin(xr, p[0], p[1])); l1 = jnp.tanh(lin(h, p[2], p[3]))
    mu_q1 = lin(l1, p[4], p[5]); std_q1 = jnp.exp(lin(l1, p[6], p[7]))
    q1s = mu_q1 + e1 * std_q1 + 1e-6
    h2 = jnp.tanh(lin(q1s, p[8], p[9])); l2 = jnp.tanh(lin(h2, p[10], p[11]))
    mu_q2 = lin(l2, p[12], p[13]); std_q2 = jnp.exp(lin(l2, p[14], p[15]))
    q2s = mu_q2 + e2 * std_q2 + 1e-6
    h3 = jnp.tanh(lin(q2s, p[16], p[17])); l3 = jnp.tanh(lin(h3, p[18], p[19]))
    mu_p1 = lin(l3, p[20], p[21]); std_p1 = jnp.exp(lin(l3, p[22], p[23]))
    g = jnp.tanh(lin(q1s, p[24], p[25])); g = jnp.tanh(lin(g, p[26], p[27]))
    mu_p0 = jax.nn.sigmoid(lin(g, p[28], p[29]))
    outs = [q1s, mu_q1, std_q1, q2s, mu_q2, std_q2, mu_p1, std_p1, mu_p0]
    return [o.reshape(batch, k, -1) for o in outs]


if __name__ == "__main__":
    batch, k = 2, 4
    key = jax.random.PRNGKey(0)
    k_param, k_x, k_e1, k_e2 = jax.random.split(key, 4)

    params = init_params(k_param)
    # NCHW MNIST-like input (values in [0,1]); flattened inside the wrapper.
    x = jax.random.uniform(k_x, (batch, 1, MNIST_SIZE, MNIST_SIZE), jnp.float32)
    eps1 = jax.random.normal(k_e1, (batch, k, 100), jnp.float32)
    eps2 = jax.random.normal(k_e2, (batch, k, 50), jnp.float32)

    dparams = iwae_forward(x, eps1, eps2, params, k=k)
    dparams = jax.block_until_ready(dparams)

    ref = iwae_forward_ref(x, eps1, eps2, params, k=k)
    for got, want in zip(dparams, ref):
        assert got.shape == want.shape, (got.shape, want.shape)
        assert jnp.allclose(got, want, rtol=1e-3, atol=1e-3), float(
            jnp.max(jnp.abs(got - want))
        )

    print("KERNEL_OK")
</pallas_src>

<mosaic_0001>
module attributes {stable_mosaic.version = 11 : i64} {
  func.func @iwae_kernel(%arg0: i32, %arg1: i32, %arg2: memref<8x896xf32, #tpu.memory_space<vmem>>, %arg3: memref<1x8x128xf32, #tpu.memory_space<vmem>>, %arg4: memref<1x8x128xf32, #tpu.memory_space<vmem>>, %arg5: memref<896x256xf32, #tpu.memory_space<vmem>>, %arg6: memref<1x256xf32, #tpu.memory_space<vmem>>, %arg7: memref<256x256xf32, #tpu.memory_space<vmem>>, %arg8: memref<1x256xf32, #tpu.memory_space<vmem>>, %arg9: memref<256x256xf32, #tpu.memory_space<vmem>>, %arg10: memref<1x256xf32, #tpu.memory_space<vmem>>, %arg11: memref<128x128xf32, #tpu.memory_space<vmem>>, %arg12: memref<1x128xf32, #tpu.memory_space<vmem>>, %arg13: memref<128x128xf32, #tpu.memory_space<vmem>>, %arg14: memref<1x128xf32, #tpu.memory_space<vmem>>, %arg15: memref<128x256xf32, #tpu.memory_space<vmem>>, %arg16: memref<1x256xf32, #tpu.memory_space<vmem>>, %arg17: memref<128x128xf32, #tpu.memory_space<vmem>>, %arg18: memref<1x128xf32, #tpu.memory_space<vmem>>, %arg19: memref<128x128xf32, #tpu.memory_space<vmem>>, %arg20: memref<1x128xf32, #tpu.memory_space<vmem>>, %arg21: memref<128x256xf32, #tpu.memory_space<vmem>>, %arg22: memref<1x256xf32, #tpu.memory_space<vmem>>, %arg23: memref<128x256xf32, #tpu.memory_space<vmem>>, %arg24: memref<1x256xf32, #tpu.memory_space<vmem>>, %arg25: memref<256x256xf32, #tpu.memory_space<vmem>>, %arg26: memref<1x256xf32, #tpu.memory_space<vmem>>, %arg27: memref<256x896xf32, #tpu.memory_space<vmem>>, %arg28: memref<1x896xf32, #tpu.memory_space<vmem>>, %arg29: memref<1x8x128xf32, #tpu.memory_space<vmem>>, %arg30: memref<1x8x128xf32, #tpu.memory_space<vmem>>, %arg31: memref<1x8x128xf32, #tpu.memory_space<vmem>>, %arg32: memref<1x8x128xf32, #tpu.memory_space<vmem>>, %arg33: memref<1x8x128xf32, #tpu.memory_space<vmem>>, %arg34: memref<1x8x128xf32, #tpu.memory_space<vmem>>, %arg35: memref<1x8x128xf32, #tpu.memory_space<vmem>>, %arg36: memref<1x8x128xf32, #tpu.memory_space<vmem>>, %arg37: memref<1x8x896xf32, #tpu.memory_space<vmem>>) attributes {dimension_semantics = [#tpu.dimension_semantics<parallel>, #tpu.dimension_semantics<parallel>], iteration_bounds = array<i64: 1, 4>, scalar_prefetch = 0 : i64, scratch_operands = 0 : i64, tpu.core_type = #tpu.core_type<tc>, window_params = [{transform_indices = @transform_0, window_bounds = array<i64: 8, 896>}, {transform_indices = @transform_1, window_bounds = array<i64: 1, 8, 128>}, {transform_indices = @transform_2, window_bounds = array<i64: 1, 8, 128>}, {pipeline_mode = #tpu.pipeline_mode<synchronous>, transform_indices = @transform_3, window_bounds = array<i64: 896, 256>}, {pipeline_mode = #tpu.pipeline_mode<synchronous>, transform_indices = @transform_4, window_bounds = array<i64: 1, 256>}, {pipeline_mode = #tpu.pipeline_mode<synchronous>, transform_indices = @transform_5, window_bounds = array<i64: 256, 256>}, {pipeline_mode = #tpu.pipeline_mode<synchronous>, transform_indices = @transform_6, window_bounds = array<i64: 1, 256>}, {pipeline_mode = #tpu.pipeline_mode<synchronous>, transform_indices = @transform_7, window_bounds = array<i64: 256, 256>}, {pipeline_mode = #tpu.pipeline_mode<synchronous>, transform_indices = @transform_8, window_bounds = array<i64: 1, 256>}, {pipeline_mode = #tpu.pipeline_mode<synchronous>, transform_indices = @transform_9, window_bounds = array<i64: 128, 128>}, {pipeline_mode = #tpu.pipeline_mode<synchronous>, transform_indices = @transform_10, window_bounds = array<i64: 1, 128>}, {pipeline_mode = #tpu.pipeline_mode<synchronous>, transform_indices = @transform_11, window_bounds = array<i64: 128, 128>}, {pipeline_mode = #tpu.pipeline_mode<synchronous>, transform_indices = @transform_12, window_bounds = array<i64: 1, 128>}, {pipeline_mode = #tpu.pipeline_mode<synchronous>, transform_indices = @transform_13, window_bounds = array<i64: 128, 256>}, {pipeline_mode = #tpu.pipeline_mode<synchronous>, transform_indices = @transform_14, window_bounds = array<i64: 1, 256>}, {pipeline_mode = #tpu.pipeline_mode<synchronous>, transform_indices = @transform_15, window_bounds = array<i64: 128, 128>}, {pipeline_mode = #tpu.pipeline_mode<synchronous>, transform_indices = @transform_16, window_bounds = array<i64: 1, 128>}, {pipeline_mode = #tpu.pipeline_mode<synchronous>, transform_indices = @transform_17, window_bounds = array<i64: 128, 128>}, {pipeline_mode = #tpu.pipeline_mode<synchronous>, transform_indices = @transform_18, window_bounds = array<i64: 1, 128>}, {pipeline_mode = #tpu.pipeline_mode<synchronous>, transform_indices = @transform_19, window_bounds = array<i64: 128, 256>}, {pipeline_mode = #tpu.pipeline_mode<synchronous>, transform_indices = @transform_20, window_bounds = array<i64: 1, 256>}, {pipeline_mode = #tpu.pipeline_mode<synchronous>, transform_indices = @transform_21, window_bounds = array<i64: 128, 256>}, {pipeline_mode = #tpu.pipeline_mode<synchronous>, transform_indices = @transform_22, window_bounds = array<i64: 1, 256>}, {pipeline_mode = #tpu.pipeline_mode<synchronous>, transform_indices = @transform_23, window_bounds = array<i64: 256, 256>}, {pipeline_mode = #tpu.pipeline_mode<synchronous>, transform_indices = @transform_24, window_bounds = array<i64: 1, 256>}, {pipeline_mode = #tpu.pipeline_mode<synchronous>, transform_indices = @transform_25, window_bounds = array<i64: 256, 896>}, {pipeline_mode = #tpu.pipeline_mode<synchronous>, transform_indices = @transform_26, window_bounds = array<i64: 1, 896>}, {transform_indices = @transform_27, window_bounds = array<i64: 1, 8, 128>}, {transform_indices = @transform_28, window_bounds = array<i64: 1, 8, 128>}, {transform_indices = @transform_29, window_bounds = array<i64: 1, 8, 128>}, {transform_indices = @transform_30, window_bounds = array<i64: 1, 8, 128>}, {transform_indices = @transform_31, window_bounds = array<i64: 1, 8, 128>}, {transform_indices = @transform_32, window_bounds = array<i64: 1, 8, 128>}, {transform_indices = @transform_33, window_bounds = array<i64: 1, 8, 128>}, {transform_indices = @transform_34, window_bounds = array<i64: 1, 8, 128>}, {transform_indices = @transform_35, window_bounds = array<i64: 1, 8, 896>}]} {
    %c0 = arith.constant 0 : index
    %c0_0 = arith.constant 0 : index
    %0 = vector.load %arg2[%c0, %c0_0] : memref<8x896xf32, #tpu.memory_space<vmem>>, vector<8x896xf32>
    %c0_1 = arith.constant 0 : index
    %c0_2 = arith.constant 0 : index
    %1 = vector.load %arg5[%c0_1, %c0_2] : memref<896x256xf32, #tpu.memory_space<vmem>>, vector<896x256xf32>
    %cst = arith.constant dense<0.000000e+00> : vector<8x256xf32>
    %2 = tpu.matmul %0, %1, %cst {dimension_numbers = #tpu.dot_dimension_numbers<[1], [0], [0], [1], [0, 0, 1, 1], [], []>} : vector<8x896xf32>, vector<896x256xf32>, vector<8x256xf32> -> vector<8x256xf32>
    %c0_3 = arith.constant 0 : index
    %c0_4 = arith.constant 0 : index
    %3 = vector.load %arg6[%c0_3, %c0_4] : memref<1x256xf32, #tpu.memory_space<vmem>>, vector<1x256xf32>
    %4 = vector.broadcast %3 : vector<1x256xf32> to vector<8x256xf32>
    %5 = arith.addf %2, %4 : vector<8x256xf32>
    %6 = math.tanh %5 : vector<8x256xf32>
    %c0_5 = arith.constant 0 : index
    %c0_6 = arith.constant 0 : index
    %7 = vector.load %arg7[%c0_5, %c0_6] : memref<256x256xf32, #tpu.memory_space<vmem>>, vector<256x256xf32>
    %cst_7 = arith.constant dense<0.000000e+00> : vector<8x256xf32>
    %8 = tpu.matmul %6, %7, %cst_7 {dimension_numbers = #tpu.dot_dimension_numbers<[1], [0], [0], [1], [0, 0, 1, 1], [], []>} : vector<8x256xf32>, vector<256x256xf32>, vector<8x256xf32> -> vector<8x256xf32>
    %c0_8 = arith.constant 0 : index
    %c0_9 = arith.constant 0 : index
    %9 = vector.load %arg8[%c0_8, %c0_9] : memref<1x256xf32, #tpu.memory_space<vmem>>, vector<1x256xf32>
    %10 = vector.broadcast %9 : vector<1x256xf32> to vector<8x256xf32>
    %11 = arith.addf %8, %10 : vector<8x256xf32>
    %12 = math.tanh %11 : vector<8x256xf32>
    %c0_10 = arith.constant 0 : index
    %c0_11 = arith.constant 0 : index
    %13 = vector.load %arg9[%c0_10, %c0_11] : memref<256x256xf32, #tpu.memory_space<vmem>>, vector<256x256xf32>
    %cst_12 = arith.constant dense<0.000000e+00> : vector<8x256xf32>
    %14 = tpu.matmul %12, %13, %cst_12 {dimension_numbers = #tpu.dot_dimension_numbers<[1], [0], [0], [1], [0, 0, 1, 1], [], []>} : vector<8x256xf32>, vector<256x256xf32>, vector<8x256xf32> -> vector<8x256xf32>
    %c0_13 = arith.constant 0 : index
    %c0_14 = arith.constant 0 : index
    %15 = vector.load %arg10[%c0_13, %c0_14] : memref<1x256xf32, #tpu.memory_space<vmem>>, vector<1x256xf32>
    %16 = vector.broadcast %15 : vector<1x256xf32> to vector<8x256xf32>
    %17 = arith.addf %14, %16 : vector<8x256xf32>
    %18 = vector.extract_strided_slice %17 {offsets = [0, 0], sizes = [8, 128], strides = [1, 1]} : vector<8x256xf32> to vector<8x128xf32>
    %19 = vector.extract_strided_slice %17 {offsets = [0, 128], sizes = [8, 128], strides = [1, 1]} : vector<8x256xf32> to vector<8x128xf32>
    %20 = math.exp %19 : vector<8x128xf32>
    %c0_15 = arith.constant 0 : index
    %c0_16 = arith.constant 0 : index
    %c0_17 = arith.constant 0 : index
    %21 = vector.load %arg3[%c0_15, %c0_16, %c0_17] : memref<1x8x128xf32, #tpu.memory_space<vmem>>, vector<1x8x128xf32>
    %22 = vector.shape_cast %21 : vector<1x8x128xf32> to vector<8x128xf32>
    %23 = arith.mulf %22, %20 : vector<8x128xf32>
    %24 = arith.addf %18, %23 : vector<8x128xf32>
    %cst_18 = arith.constant 9.99999997E-7 : f32
    %25 = vector.broadcast %cst_18 : f32 to vector<8x128xf32>
    %26 = arith.addf %24, %25 : vector<8x128xf32>
    %c0_19 = arith.constant 0 : index
    %c0_20 = arith.constant 0 : index
    %27 = vector.load %arg11[%c0_19, %c0_20] : memref<128x128xf32, #tpu.memory_space<vmem>>, vector<128x128xf32>
    %cst_21 = arith.constant dense<0.000000e+00> : vector<8x128xf32>
    %28 = tpu.matmul %26, %27, %cst_21 {dimension_numbers = #tpu.dot_dimension_numbers<[1], [0], [0], [1], [0, 0, 1, 1], [], []>} : vector<8x128xf32>, vector<128x128xf32>, vector<8x128xf32> -> vector<8x128xf32>
    %c0_22 = arith.constant 0 : index
    %c0_23 = arith.constant 0 : index
    %29 = vector.load %arg12[%c0_22, %c0_23] : memref<1x128xf32, #tpu.memory_space<vmem>>, vector<1x128xf32>
    %30 = vector.broadcast %29 : vector<1x128xf32> to vector<8x128xf32>
    %31 = arith.addf %28, %30 : vector<8x128xf32>
    %32 = math.tanh %31 : vector<8x128xf32>
    %c0_24 = arith.constant 0 : index
    %c0_25 = arith.constant 0 : index
    %33 = vector.load %arg13[%c0_24, %c0_25] : memref<128x128xf32, #tpu.memory_space<vmem>>, vector<128x128xf32>
    %cst_26 = arith.constant dense<0.000000e+00> : vector<8x128xf32>
    %34 = tpu.matmul %32, %33, %cst_26 {dimension_numbers = #tpu.dot_dimension_numbers<[1], [0], [0], [1], [0, 0, 1, 1], [], []>} : vector<8x128xf32>, vector<128x128xf32>, vector<8x128xf32> -> vector<8x128xf32>
    %c0_27 = arith.constant 0 : index
    %c0_28 = arith.constant 0 : index
    %35 = vector.load %arg14[%c0_27, %c0_28] : memref<1x128xf32, #tpu.memory_space<vmem>>, vector<1x128xf32>
    %36 = vector.broadcast %35 : vector<1x128xf32> to vector<8x128xf32>
    %37 = arith.addf %34, %36 : vector<8x128xf32>
    %38 = math.tanh %37 : vector<8x128xf32>
    %c0_29 = arith.constant 0 : index
    %c0_30 = arith.constant 0 : index
    %39 = vector.load %arg15[%c0_29, %c0_30] : memref<128x256xf32, #tpu.memory_space<vmem>>, vector<128x256xf32>
    %cst_31 = arith.constant dense<0.000000e+00> : vector<8x256xf32>
    %40 = tpu.matmul %38, %39, %cst_31 {dimension_numbers = #tpu.dot_dimension_numbers<[1], [0], [0], [1], [0, 0, 1, 1], [], []>} : vector<8x128xf32>, vector<128x256xf32>, vector<8x256xf32> -> vector<8x256xf32>
    %c0_32 = arith.constant 0 : index
    %c0_33 = arith.constant 0 : index
    %41 = vector.load %arg16[%c0_32, %c0_33] : memref<1x256xf32, #tpu.memory_space<vmem>>, vector<1x256xf32>
    %42 = vector.broadcast %41 : vector<1x256xf32> to vector<8x256xf32>
    %43 = arith.addf %40, %42 : vector<8x256xf32>
    %44 = vector.extract_strided_slice %43 {offsets = [0, 0], sizes = [8, 128], strides = [1, 1]} : vector<8x256xf32> to vector<8x128xf32>
    %45 = vector.extract_strided_slice %43 {offsets = [0, 128], sizes = [8, 128], strides = [1, 1]} : vector<8x256xf32> to vector<8x128xf32>
    %46 = math.exp %45 : vector<8x128xf32>
    %c0_34 = arith.constant 0 : index
    %c0_35 = arith.constant 0 : index
    %c0_36 = arith.constant 0 : index
    %47 = vector.load %arg4[%c0_34, %c0_35, %c0_36] : memref<1x8x128xf32, #tpu.memory_space<vmem>>, vector<1x8x128xf32>
    %48 = vector.shape_cast %47 : vector<1x8x128xf32> to vector<8x128xf32>
    %49 = arith.mulf %48, %46 : vector<8x128xf32>
    %50 = arith.addf %44, %49 : vector<8x128xf32>
    %cst_37 = arith.constant 9.99999997E-7 : f32
    %51 = vector.broadcast %cst_37 : f32 to vector<8x128xf32>
    %52 = arith.addf %50, %51 : vector<8x128xf32>
    %c0_38 = arith.constant 0 : index
    %c0_39 = arith.constant 0 : index
    %53 = vector.load %arg17[%c0_38, %c0_39] : memref<128x128xf32, #tpu.memory_space<vmem>>, vector<128x128xf32>
    %cst_40 = arith.constant dense<0.000000e+00> : vector<8x128xf32>
    %54 = tpu.matmul %52, %53, %cst_40 {dimension_numbers = #tpu.dot_dimension_numbers<[1], [0], [0], [1], [0, 0, 1, 1], [], []>} : vector<8x128xf32>, vector<128x128xf32>, vector<8x128xf32> -> vector<8x128xf32>
    %c0_41 = arith.constant 0 : index
    %c0_42 = arith.constant 0 : index
    %55 = vector.load %arg18[%c0_41, %c0_42] : memref<1x128xf32, #tpu.memory_space<vmem>>, vector<1x128xf32>
    %56 = vector.broadcast %55 : vector<1x128xf32> to vector<8x128xf32>
    %57 = arith.addf %54, %56 : vector<8x128xf32>
    %58 = math.tanh %57 : vector<8x128xf32>
    %c0_43 = arith.constant 0 : index
    %c0_44 = arith.constant 0 : index
    %59 = vector.load %arg19[%c0_43, %c0_44] : memref<128x128xf32, #tpu.memory_space<vmem>>, vector<128x128xf32>
    %cst_45 = arith.constant dense<0.000000e+00> : vector<8x128xf32>
    %60 = tpu.matmul %58, %59, %cst_45 {dimension_numbers = #tpu.dot_dimension_numbers<[1], [0], [0], [1], [0, 0, 1, 1], [], []>} : vector<8x128xf32>, vector<128x128xf32>, vector<8x128xf32> -> vector<8x128xf32>
    %c0_46 = arith.constant 0 : index
    %c0_47 = arith.constant 0 : index
    %61 = vector.load %arg20[%c0_46, %c0_47] : memref<1x128xf32, #tpu.memory_space<vmem>>, vector<1x128xf32>
    %62 = vector.broadcast %61 : vector<1x128xf32> to vector<8x128xf32>
    %63 = arith.addf %60, %62 : vector<8x128xf32>
    %64 = math.tanh %63 : vector<8x128xf32>
    %c0_48 = arith.constant 0 : index
    %c0_49 = arith.constant 0 : index
    %65 = vector.load %arg21[%c0_48, %c0_49] : memref<128x256xf32, #tpu.memory_space<vmem>>, vector<128x256xf32>
    %cst_50 = arith.constant dense<0.000000e+00> : vector<8x256xf32>
    %66 = tpu.matmul %64, %65, %cst_50 {dimension_numbers = #tpu.dot_dimension_numbers<[1], [0], [0], [1], [0, 0, 1, 1], [], []>} : vector<8x128xf32>, vector<128x256xf32>, vector<8x256xf32> -> vector<8x256xf32>
    %c0_51 = arith.constant 0 : index
    %c0_52 = arith.constant 0 : index
    %67 = vector.load %arg22[%c0_51, %c0_52] : memref<1x256xf32, #tpu.memory_space<vmem>>, vector<1x256xf32>
    %68 = vector.broadcast %67 : vector<1x256xf32> to vector<8x256xf32>
    %69 = arith.addf %66, %68 : vector<8x256xf32>
    %70 = vector.extract_strided_slice %69 {offsets = [0, 0], sizes = [8, 128], strides = [1, 1]} : vector<8x256xf32> to vector<8x128xf32>
    %71 = vector.extract_strided_slice %69 {offsets = [0, 128], sizes = [8, 128], strides = [1, 1]} : vector<8x256xf32> to vector<8x128xf32>
    %72 = math.exp %71 : vector<8x128xf32>
    %c0_53 = arith.constant 0 : index
    %c0_54 = arith.constant 0 : index
    %73 = vector.load %arg23[%c0_53, %c0_54] : memref<128x256xf32, #tpu.memory_space<vmem>>, vector<128x256xf32>
    %cst_55 = arith.constant dense<0.000000e+00> : vector<8x256xf32>
    %74 = tpu.matmul %26, %73, %cst_55 {dimension_numbers = #tpu.dot_dimension_numbers<[1], [0], [0], [1], [0, 0, 1, 1], [], []>} : vector<8x128xf32>, vector<128x256xf32>, vector<8x256xf32> -> vector<8x256xf32>
    %c0_56 = arith.constant 0 : index
    %c0_57 = arith.constant 0 : index
    %75 = vector.load %arg24[%c0_56, %c0_57] : memref<1x256xf32, #tpu.memory_space<vmem>>, vector<1x256xf32>
    %76 = vector.broadcast %75 : vector<1x256xf32> to vector<8x256xf32>
    %77 = arith.addf %74, %76 : vector<8x256xf32>
    %78 = math.tanh %77 : vector<8x256xf32>
    %c0_58 = arith.constant 0 : index
    %c0_59 = arith.constant 0 : index
    %79 = vector.load %arg25[%c0_58, %c0_59] : memref<256x256xf32, #tpu.memory_space<vmem>>, vector<256x256xf32>
    %cst_60 = arith.constant dense<0.000000e+00> : vector<8x256xf32>
    %80 = tpu.matmul %78, %79, %cst_60 {dimension_numbers = #tpu.dot_dimension_numbers<[1], [0], [0], [1], [0, 0, 1, 1], [], []>} : vector<8x256xf32>, vector<256x256xf32>, vector<8x256xf32> -> vector<8x256xf32>
    %c0_61 = arith.constant 0 : index
    %c0_62 = arith.constant 0 : index
    %81 = vector.load %arg26[%c0_61, %c0_62] : memref<1x256xf32, #tpu.memory_space<vmem>>, vector<1x256xf32>
    %82 = vector.broadcast %81 : vector<1x256xf32> to vector<8x256xf32>
    %83 = arith.addf %80, %82 : vector<8x256xf32>
    %84 = math.tanh %83 : vector<8x256xf32>
    %c0_63 = arith.constant 0 : index
    %c0_64 = arith.constant 0 : index
    %85 = vector.load %arg27[%c0_63, %c0_64] : memref<256x896xf32, #tpu.memory_space<vmem>>, vector<256x896xf32>
    %cst_65 = arith.constant dense<0.000000e+00> : vector<8x896xf32>
    %86 = tpu.matmul %84, %85, %cst_65 {dimension_numbers = #tpu.dot_dimension_numbers<[1], [0], [0], [1], [0, 0, 1, 1], [], []>} : vector<8x256xf32>, vector<256x896xf32>, vector<8x896xf32> -> vector<8x896xf32>
    %c0_66 = arith.constant 0 : index
    %c0_67 = arith.constant 0 : index
    %87 = vector.load %arg28[%c0_66, %c0_67] : memref<1x896xf32, #tpu.memory_space<vmem>>, vector<1x896xf32>
    %88 = vector.broadcast %87 : vector<1x896xf32> to vector<8x896xf32>
    %89 = arith.addf %86, %88 : vector<8x896xf32>
    %90 = arith.negf %89 : vector<8x896xf32>
    %91 = math.exp %90 : vector<8x896xf32>
    %cst_68 = arith.constant 1.000000e+00 : f32
    %92 = vector.broadcast %cst_68 : f32 to vector<8x896xf32>
    %93 = arith.addf %92, %91 : vector<8x896xf32>
    %94 = arith.divf %92, %93 : vector<8x896xf32>
    %c0_69 = arith.constant 0 : index
    %c0_70 = arith.constant 0 : index
    %c0_71 = arith.constant 0 : index
    %95 = vector.load %arg29[%c0_69, %c0_70, %c0_71] : memref<1x8x128xf32, #tpu.memory_space<vmem>>, vector<1x8x128xf32>
    %96 = vector.shape_cast %95 : vector<1x8x128xf32> to vector<8x128xf32>
    %97 = vector.shape_cast %26 : vector<8x128xf32> to vector<1x8x128xf32>
    tpu.vector_store %arg29[%c0_69, %c0_70, %c0_71], %97 {strides = array<i32>} : memref<1x8x128xf32, #tpu.memory_space<vmem>>, vector<1x8x128xf32>,
    %c0_72 = arith.constant 0 : index
    %c0_73 = arith.constant 0 : index
    %c0_74 = arith.constant 0 : index
    %98 = vector.load %arg30[%c0_72, %c0_73, %c0_74] : memref<1x8x128xf32, #tpu.memory_space<vmem>>, vector<1x8x128xf32>
    %99 = vector.shape_cast %98 : vector<1x8x128xf32> to vector<8x128xf32>
    %100 = vector.shape_cast %18 : vector<8x128xf32> to vector<1x8x128xf32>
    tpu.vector_store %arg30[%c0_72, %c0_73, %c0_74], %100 {strides = array<i32>} : memref<1x8x128xf32, #tpu.memory_space<vmem>>, vector<1x8x128xf32>,
    %c0_75 = arith.constant 0 : index
    %c0_76 = arith.constant 0 : index
    %c0_77 = arith.constant 0 : index
    %101 = vector.load %arg31[%c0_75, %c0_76, %c0_77] : memref<1x8x128xf32, #tpu.memory_space<vmem>>, vector<1x8x128xf32>
    %102 = vector.shape_cast %101 : vector<1x8x128xf32> to vector<8x128xf32>
    %103 = vector.shape_cast %20 : vector<8x128xf32> to vector<1x8x128xf32>
    tpu.vector_store %arg31[%c0_75, %c0_76, %c0_77], %103 {strides = array<i32>} : memref<1x8x128xf32, #tpu.memory_space<vmem>>, vector<1x8x128xf32>,
    %c0_78 = arith.constant 0 : index
    %c0_79 = arith.constant 0 : index
    %c0_80 = arith.constant 0 : index
    %104 = vector.load %arg32[%c0_78, %c0_79, %c0_80] : memref<1x8x128xf32, #tpu.memory_space<vmem>>, vector<1x8x128xf32>
    %105 = vector.shape_cast %104 : vector<1x8x128xf32> to vector<8x128xf32>
    %106 = vector.shape_cast %52 : vector<8x128xf32> to vector<1x8x128xf32>
    tpu.vector_store %arg32[%c0_78, %c0_79, %c0_80], %106 {strides = array<i32>} : memref<1x8x128xf32, #tpu.memory_space<vmem>>, vector<1x8x128xf32>,
    %c0_81 = arith.constant 0 : index
    %c0_82 = arith.constant 0 : index
    %c0_83 = arith.constant 0 : index
    %107 = vector.load %arg33[%c0_81, %c0_82, %c0_83] : memref<1x8x128xf32, #tpu.memory_space<vmem>>, vector<1x8x128xf32>
    %108 = vector.shape_cast %107 : vector<1x8x128xf32> to vector<8x128xf32>
    %109 = vector.shape_cast %44 : vector<8x128xf32> to vector<1x8x128xf32>
    tpu.vector_store %arg33[%c0_81, %c0_82, %c0_83], %109 {strides = array<i32>} : memref<1x8x128xf32, #tpu.memory_space<vmem>>, vector<1x8x128xf32>,
    %c0_84 = arith.constant 0 : index
    %c0_85 = arith.constant 0 : index
    %c0_86 = arith.constant 0 : index
    %110 = vector.load %arg34[%c0_84, %c0_85, %c0_86] : memref<1x8x128xf32, #tpu.memory_space<vmem>>, vector<1x8x128xf32>
    %111 = vector.shape_cast %110 : vector<1x8x128xf32> to vector<8x128xf32>
    %112 = vector.shape_cast %46 : vector<8x128xf32> to vector<1x8x128xf32>
    tpu.vector_store %arg34[%c0_84, %c0_85, %c0_86], %112 {strides = array<i32>} : memref<1x8x128xf32, #tpu.memory_space<vmem>>, vector<1x8x128xf32>,
    %c0_87 = arith.constant 0 : index
    %c0_88 = arith.constant 0 : index
    %c0_89 = arith.constant 0 : index
    %113 = vector.load %arg35[%c0_87, %c0_88, %c0_89] : memref<1x8x128xf32, #tpu.memory_space<vmem>>, vector<1x8x128xf32>
    %114 = vector.shape_cast %113 : vector<1x8x128xf32> to vector<8x128xf32>
    %115 = vector.shape_cast %70 : vector<8x128xf32> to vector<1x8x128xf32>
    tpu.vector_store %arg35[%c0_87, %c0_88, %c0_89], %115 {strides = array<i32>} : memref<1x8x128xf32, #tpu.memory_space<vmem>>, vector<1x8x128xf32>,
    %c0_90 = arith.constant 0 : index
    %c0_91 = arith.constant 0 : index
    %c0_92 = arith.constant 0 : index
    %116 = vector.load %arg36[%c0_90, %c0_91, %c0_92] : memref<1x8x128xf32, #tpu.memory_space<vmem>>, vector<1x8x128xf32>
    %117 = vector.shape_cast %116 : vector<1x8x128xf32> to vector<8x128xf32>
    %118 = vector.shape_cast %72 : vector<8x128xf32> to vector<1x8x128xf32>
    tpu.vector_store %arg36[%c0_90, %c0_91, %c0_92], %118 {strides = array<i32>} : memref<1x8x128xf32, #tpu.memory_space<vmem>>, vector<1x8x128xf32>,
    %c0_93 = arith.constant 0 : index
    %c0_94 = arith.constant 0 : index
    %c0_95 = arith.constant 0 : index
    %119 = vector.load %arg37[%c0_93, %c0_94, %c0_95] : memref<1x8x896xf32, #tpu.memory_space<vmem>>, vector<1x8x896xf32>
    %120 = vector.shape_cast %119 : vector<1x8x896xf32> to vector<8x896xf32>
    %121 = vector.shape_cast %94 : vector<8x896xf32> to vector<1x8x896xf32>
    tpu.vector_store %arg37[%c0_93, %c0_94, %c0_95], %121 {strides = array<i32>} : memref<1x8x896xf32, #tpu.memory_space<vmem>>, vector<1x8x896xf32>,
    return
  }
  func.func @transform_0(%arg0: i32, %arg1: i32) -> (i32, i32) {
    %c0_i32 = arith.constant 0 : i32
    %c0_i32_0 = arith.constant 0 : i32
    return %arg0, %c0_i32 : i32, i32
  }
  func.func @transform_1(%arg0: i32, %arg1: i32) -> (i32, i32, i32) {
    %c0_i32 = arith.constant 0 : i32
    %c0_i32_0 = arith.constant 0 : i32
    return %arg1, %arg0, %c0_i32 : i32, i32, i32
  }
  func.func @transform_2(%arg0: i32, %arg1: i32) -> (i32, i32, i32) {
    %c0_i32 = arith.constant 0 : i32
    %c0_i32_0 = arith.constant 0 : i32
    return %arg1, %arg0, %c0_i32 : i32, i32, i32
  }
  func.func @transform_3(%arg0: i32, %arg1: i32) -> (i32, i32) {
    %c0_i32 = arith.constant 0 : i32
    %c0_i32_0 = arith.constant 0 : i32
    %c0_i32_1 = arith.constant 0 : i32
    return %c0_i32, %c0_i32_0 : i32, i32
  }
  func.func @transform_4(%arg0: i32, %arg1: i32) -> (i32, i32) {
    %c0_i32 = arith.constant 0 : i32
    %c0_i32_0 = arith.constant 0 : i32
    %c0_i32_1 = arith.constant 0 : i32
    return %c0_i32, %c0_i32_0 : i32, i32
  }
  func.func @transform_5(%arg0: i32, %arg1: i32) -> (i32, i32) {
    %c0_i32 = arith.constant 0 : i32
    %c0_i32_0 = arith.constant 0 : i32
    %c0_i32_1 = arith.constant 0 : i32
    return %c0_i32, %c0_i32_0 : i32, i32
  }
  func.func @transform_6(%arg0: i32, %arg1: i32) -> (i32, i32) {
    %c0_i32 = arith.constant 0 : i32
    %c0_i32_0 = arith.constant 0 : i32
    %c0_i32_1 = arith.constant 0 : i32
    return %c0_i32, %c0_i32_0 : i32, i32
  }
  func.func @transform_7(%arg0: i32, %arg1: i32) -> (i32, i32) {
    %c0_i32 = arith.constant 0 : i32
    %c0_i32_0 = arith.constant 0 : i32
    %c0_i32_1 = arith.constant 0 : i32
    return %c0_i32, %c0_i32_0 : i32, i32
  }
  func.func @transform_8(%arg0: i32, %arg1: i32) -> (i32, i32) {
    %c0_i32 = arith.constant 0 : i32
    %c0_i32_0 = arith.constant 0 : i32
    %c0_i32_1 = arith.constant 0 : i32
    return %c0_i32, %c0_i32_0 : i32, i32
  }
  func.func @transform_9(%arg0: i32, %arg1: i32) -> (i32, i32) {
    %c0_i32 = arith.constant 0 : i32
    %c0_i32_0 = arith.constant 0 : i32
    %c0_i32_1 = arith.constant 0 : i32
    return %c0_i32, %c0_i32_0 : i32, i32
  }
  func.func @transform_10(%arg0: i32, %arg1: i32) -> (i32, i32) {
    %c0_i32 = arith.constant 0 : i32
    %c0_i32_0 = arith.constant 0 : i32
    %c0_i32_1 = arith.constant 0 : i32
    return %c0_i32, %c0_i32_0 : i32, i32
  }
  func.func @transform_11(%arg0: i32, %arg1: i32) -> (i32, i32) {
    %c0_i32 = arith.constant 0 : i32
    %c0_i32_0 = arith.constant 0 : i32
    %c0_i32_1 = arith.constant 0 : i32
    return %c0_i32, %c0_i32_0 : i32, i32
  }
  func.func @transform_12(%arg0: i32, %arg1: i32) -> (i32, i32) {
    %c0_i32 = arith.constant 0 : i32
    %c0_i32_0 = arith.constant 0 : i32
    %c0_i32_1 = arith.constant 0 : i32
    return %c0_i32, %c0_i32_0 : i32, i32
  }
  func.func @transform_13(%arg0: i32, %arg1: i32) -> (i32, i32) {
    %c0_i32 = arith.constant 0 : i32
    %c0_i32_0 = arith.constant 0 : i32
    %c0_i32_1 = arith.constant 0 : i32
    return %c0_i32, %c0_i32_0 : i32, i32
  }
  func.func @transform_14(%arg0: i32, %arg1: i32) -> (i32, i32) {
    %c0_i32 = arith.constant 0 : i32
    %c0_i32_0 = arith.constant 0 : i32
    %c0_i32_1 = arith.constant 0 : i32
    return %c0_i32, %c0_i32_0 : i32, i32
  }
  func.func @transform_15(%arg0: i32, %arg1: i32) -> (i32, i32) {
    %c0_i32 = arith.constant 0 : i32
    %c0_i32_0 = arith.constant 0 : i32
    %c0_i32_1 = arith.constant 0 : i32
    return %c0_i32, %c0_i32_0 : i32, i32
  }
  func.func @transform_16(%arg0: i32, %arg1: i32) -> (i32, i32) {
    %c0_i32 = arith.constant 0 : i32
    %c0_i32_0 = arith.constant 0 : i32
    %c0_i32_1 = arith.constant 0 : i32
    return %c0_i32, %c0_i32_0 : i32, i32
  }
  func.func @transform_17(%arg0: i32, %arg1: i32) -> (i32, i32) {
    %c0_i32 = arith.constant 0 : i32
    %c0_i32_0 = arith.constant 0 : i32
    %c0_i32_1 = arith.constant 0 : i32
    return %c0_i32, %c0_i32_0 : i32, i32
  }
  func.func @transform_18(%arg0: i32, %arg1: i32) -> (i32, i32) {
    %c0_i32 = arith.constant 0 : i32
    %c0_i32_0 = arith.constant 0 : i32
    %c0_i32_1 = arith.constant 0 : i32
    return %c0_i32, %c0_i32_0 : i32, i32
  }
  func.func @transform_19(%arg0: i32, %arg1: i32) -> (i32, i32) {
    %c0_i32 = arith.constant 0 : i32
    %c0_i32_0 = arith.constant 0 : i32
    %c0_i32_1 = arith.constant 0 : i32
    return %c0_i32, %c0_i32_0 : i32, i32
  }
  func.func @transform_20(%arg0: i32, %arg1: i32) -> (i32, i32) {
    %c0_i32 = arith.constant 0 : i32
    %c0_i32_0 = arith.constant 0 : i32
    %c0_i32_1 = arith.constant 0 : i32
    return %c0_i32, %c0_i32_0 : i32, i32
  }
  func.func @transform_21(%arg0: i32, %arg1: i32) -> (i32, i32) {
    %c0_i32 = arith.constant 0 : i32
    %c0_i32_0 = arith.constant 0 : i32
    %c0_i32_1 = arith.constant 0 : i32
    return %c0_i32, %c0_i32_0 : i32, i32
  }
  func.func @transform_22(%arg0: i32, %arg1: i32) -> (i32, i32) {
    %c0_i32 = arith.constant 0 : i32
    %c0_i32_0 = arith.constant 0 : i32
    %c0_i32_1 = arith.constant 0 : i32
    return %c0_i32, %c0_i32_0 : i32, i32
  }
  func.func @transform_23(%arg0: i32, %arg1: i32) -> (i32, i32) {
    %c0_i32 = arith.constant 0 : i32
    %c0_i32_0 = arith.constant 0 : i32
    %c0_i32_1 = arith.constant 0 : i32
    return %c0_i32, %c0_i32_0 : i32, i32
  }
  func.func @transform_24(%arg0: i32, %arg1: i32) -> (i32, i32) {
    %c0_i32 = arith.constant 0 : i32
    %c0_i32_0 = arith.constant 0 : i32
    %c0_i32_1 = arith.constant 0 : i32
    return %c0_i32, %c0_i32_0 : i32, i32
  }
  func.func @transform_25(%arg0: i32, %arg1: i32) -> (i32, i32) {
    %c0_i32 = arith.constant 0 : i32
    %c0_i32_0 = arith.constant 0 : i32
    %c0_i32_1 = arith.constant 0 : i32
    return %c0_i32, %c0_i32_0 : i32, i32
  }
  func.func @transform_26(%arg0: i32, %arg1: i32) -> (i32, i32) {
    %c0_i32 = arith.constant 0 : i32
    %c0_i32_0 = arith.constant 0 : i32
    %c0_i32_1 = arith.constant 0 : i32
    return %c0_i32, %c0_i32_0 : i32, i32
  }
  func.func @transform_27(%arg0: i32, %arg1: i32) -> (i32, i32, i32) {
    %c0_i32 = arith.constant 0 : i32
    %c0_i32_0 = arith.constant 0 : i32
    return %arg1, %arg0, %c0_i32 : i32, i32, i32
  }
  func.func @transform_28(%arg0: i32, %arg1: i32) -> (i32, i32, i32) {
    %c0_i32 = arith.constant 0 : i32
    %c0_i32_0 = arith.constant 0 : i32
    return %arg1, %arg0, %c0_i32 : i32, i32, i32
  }
  func.func @transform_29(%arg0: i32, %arg1: i32) -> (i32, i32, i32) {
    %c0_i32 = arith.constant 0 : i32
    %c0_i32_0 = arith.constant 0 : i32
    return %arg1, %arg0, %c0_i32 : i32, i32, i32
  }
  func.func @transform_30(%arg0: i32, %arg1: i32) -> (i32, i32, i32) {
    %c0_i32 = arith.constant 0 : i32
    %c0_i32_0 = arith.constant 0 : i32
    return %arg1, %arg0, %c0_i32 : i32, i32, i32
  }
  func.func @transform_31(%arg0: i32, %arg1: i32) -> (i32, i32, i32) {
    %c0_i32 = arith.constant 0 : i32
    %c0_i32_0 = arith.constant 0 : i32
    return %arg1, %arg0, %c0_i32 : i32, i32, i32
  }
  func.func @transform_32(%arg0: i32, %arg1: i32) -> (i32, i32, i32) {
    %c0_i32 = arith.constant 0 : i32
    %c0_i32_0 = arith.constant 0 : i32
    return %arg1, %arg0, %c0_i32 : i32, i32, i32
  }
  func.func @transform_33(%arg0: i32, %arg1: i32) -> (i32, i32, i32) {
    %c0_i32 = arith.constant 0 : i32
    %c0_i32_0 = arith.constant 0 : i32
    return %arg1, %arg0, %c0_i32 : i32, i32, i32
  }
  func.func @transform_34(%arg0: i32, %arg1: i32) -> (i32, i32, i32) {
    %c0_i32 = arith.constant 0 : i32
    %c0_i32_0 = arith.constant 0 : i32
    return %arg1, %arg0, %c0_i32 : i32, i32, i32
  }
  func.func @transform_35(%arg0: i32, %arg1: i32) -> (i32, i32, i32) {
    %c0_i32 = arith.constant 0 : i32
    %c0_i32_0 = arith.constant 0 : i32
    return %arg1, %arg0, %c0_i32 : i32, i32, i32
  }
}

</mosaic_0001>

<llo_original>
// kernel: iwae_forward.1
$region0: #{iwae_forward.1}
  #allocation0 [shape = 'u32[]', space=smem, size = 0x4, offset = 0x4, fixed_abs, tag = 'smem constant byte address 0x4 - core index']
  #allocation1 [shape = 'u32[144,128]{1,0:T(1,128)}', space=vmem, size = 0x12000, scoped, tag = 'internal scratch']
  %s0 = inlined_call_operand.smem [shape: u32[36], index: -1, kind: input, shape index: {}]
  %s1 = sld [smem:[%s0]]
  %s2 = scalar_lea.smem %s0, 1
  %s3 = sld [smem:[%s2]]
  %s4 = scalar_lea.smem %s0, 2
  %s5 = sld [smem:[%s4]]
  %s6 = scalar_lea.smem %s0, 3
  %s7 = sld [smem:[%s6]]
  %s8 = scalar_lea.smem %s0, 4
  %s9 = sld [smem:[%s8]]
  %s10 = scalar_lea.smem %s0, 5
  %s11 = sld [smem:[%s10]]
  %s12 = scalar_lea.smem %s0, 6
  %s13 = sld [smem:[%s12]]
  %s14 = scalar_lea.smem %s0, 7
  %s15 = sld [smem:[%s14]]
  %s16 = scalar_lea.smem %s0, 8
  %s17 = sld [smem:[%s16]]
  %s18 = scalar_lea.smem %s0, 9
  %s19 = sld [smem:[%s18]]
  %s20 = scalar_lea.smem %s0, 10
  %s21 = sld [smem:[%s20]]
  %s22 = scalar_lea.smem %s0, 11
  %s23 = sld [smem:[%s22]]
  %s24 = scalar_lea.smem %s0, 12
  %s25 = sld [smem:[%s24]]
  %s26 = scalar_lea.smem %s0, 13
  %s27 = sld [smem:[%s26]]
  %s28 = scalar_lea.smem %s0, 14
  %s29 = sld [smem:[%s28]]
  %s30 = scalar_lea.smem %s0, 15
  %s31 = sld [smem:[%s30]]
  %s32 = scalar_lea.smem %s0, 16
  %s33 = sld [smem:[%s32]]
  %s34 = scalar_lea.smem %s0, 17
  %s35 = sld [smem:[%s34]]
  %s36 = scalar_lea.smem %s0, 18
  %s37 = sld [smem:[%s36]]
  %s38 = scalar_lea.smem %s0, 19
  %s39 = sld [smem:[%s38]]
  %s40 = scalar_lea.smem %s0, 20
  %s41 = sld [smem:[%s40]]
  %s42 = scalar_lea.smem %s0, 21
  %s43 = sld [smem:[%s42]]
  %s44 = scalar_lea.smem %s0, 22
  %s45 = sld [smem:[%s44]]
  %s46 = scalar_lea.smem %s0, 23
  %s47 = sld [smem:[%s46]]
  %s48 = scalar_lea.smem %s0, 24
  %s49 = sld [smem:[%s48]]
  %s50 = scalar_lea.smem %s0, 25
  %s51 = sld [smem:[%s50]]
  %s52 = scalar_lea.smem %s0, 26
  %s53 = sld [smem:[%s52]]
  %s54 = scalar_lea.smem %s0, 27
  %s55 = sld [smem:[%s54]]
  %s56 = scalar_lea.smem %s0, 28
  %s57 = sld [smem:[%s56]]
  %s58 = scalar_lea.smem %s0, 29
  %s59 = sld [smem:[%s58]]
  %s60 = scalar_lea.smem %s0, 30
  %s61 = sld [smem:[%s60]]
  %s62 = scalar_lea.smem %s0, 31
  %s63 = sld [smem:[%s62]]
  %s64 = scalar_lea.smem %s0, 32
  %s65 = sld [smem:[%s64]]
  %s66 = scalar_lea.smem %s0, 33
  %s67 = sld [smem:[%s66]]
  %s68 = scalar_lea.smem %s0, 34
  %s69 = sld [smem:[%s68]]
  %s70 = scalar_lea.smem %s0, 35
  %s71 = sld [smem:[%s70]]
  %72 = xla_tuple %s55, %s57, %s59, %s61, %s63, %s65, %s67, %s69, %s71
  %s73 = sld [smem:[#allocation0]]
  $region205: #{iwae_forward.1} parent=0
    _
  %s75 = ssub.s32 1, %s73
  %s76 = scalar_select 0, %s75, %s73
  loop: start=0, step=1, limit=6
  $region2: #{iwae_forward.1} parent=0 // loop_pre_header
    _
  $region3: #{iwae_forward.1} parent=0 // loop_header
    %s78 = sphi 0, %s82
    %p79 = scmp.ge.s32.totalorder %s78, 6
    %s85 = sphi 0, %s97
    %s86 = sphi 0, %s93
    %s87 = sphi 0, %s85
    %s88 = sphi 0, %s86
    %s89 = sphi 0, %s87
    %s90 = sphi 0, %s88
    %s100 = sphi 0, %s102
    %s103 = sphi 0, %s100
    %s104 = sphi 0, %s103
    %s120 = sphi 0, %s104
    %s128 = sphi 0, %s130
    %s131 = sphi 0, %s128
    %s132 = sphi 0, %s131
    %s148 = sphi 0, %s132
    %s156 = sphi 0, %s158
    %s159 = sphi 0, %s156
    %s160 = sphi 0, %s159
    %s176 = sphi 0, %s160
    %s180 = sphi 0, %s180
    %s182 = sphi 0, %s180
    %s183 = sphi 0, %s182
    %s197 = sphi 0, %s183
    %s201 = sphi 0, %s201
    %s203 = sphi 0, %s201
    %s204 = sphi 0, %s203
    %s218 = sphi 0, %s204
    %s222 = sphi 0, %s222
    %s224 = sphi 0, %s222
    %s225 = sphi 0, %s224
    %s239 = sphi 0, %s225
    %s243 = sphi 0, %s243
    %s245 = sphi 0, %s243
    %s246 = sphi 0, %s245
    %s260 = sphi 0, %s246
    %s264 = sphi 0, %s264
    %s266 = sphi 0, %s264
    %s267 = sphi 0, %s266
    %s281 = sphi 0, %s267
    %s285 = sphi 0, %s285
    %s287 = sphi 0, %s285
    %s288 = sphi 0, %s287
    %s302 = sphi 0, %s288
    %s306 = sphi 0, %s306
    %s308 = sphi 0, %s306
    %s309 = sphi 0, %s308
    %s323 = sphi 0, %s309
    %s327 = sphi 0, %s327
    %s329 = sphi 0, %s327
    %s330 = sphi 0, %s329
    %s344 = sphi 0, %s330
    %s348 = sphi 0, %s348
    %s350 = sphi 0, %s348
    %s351 = sphi 0, %s350
    %s365 = sphi 0, %s351
    %s369 = sphi 0, %s369
    %s371 = sphi 0, %s369
    %s372 = sphi 0, %s371
    %s386 = sphi 0, %s372
    %s390 = sphi 0, %s390
    %s392 = sphi 0, %s390
    %s393 = sphi 0, %s392
    %s407 = sphi 0, %s393
    %s411 = sphi 0, %s411
    %s413 = sphi 0, %s411
    %s414 = sphi 0, %s413
    %s428 = sphi 0, %s414
    %s432 = sphi 0, %s432
    %s434 = sphi 0, %s432
    %s435 = sphi 0, %s434
    %s449 = sphi 0, %s435
    %s453 = sphi 0, %s453
    %s455 = sphi 0, %s453
    %s456 = sphi 0, %s455
    %s470 = sphi 0, %s456
    %s474 = sphi 0, %s474
    %s476 = sphi 0, %s474
    %s477 = sphi 0, %s476
    %s491 = sphi 0, %s477
    %s495 = sphi 0, %s495
    %s497 = sphi 0, %s495
    %s498 = sphi 0, %s497
    %s512 = sphi 0, %s498
    %s516 = sphi 0, %s516
    %s518 = sphi 0, %s516
    %s519 = sphi 0, %s518
    %s533 = sphi 0, %s519
    %s537 = sphi 0, %s537
    %s539 = sphi 0, %s537
    %s540 = sphi 0, %s539
    %s554 = sphi 0, %s540
    %s558 = sphi 0, %s558
    %s560 = sphi 0, %s558
    %s561 = sphi 0, %s560
    %s575 = sphi 0, %s561
    %s579 = sphi 0, %s579
    %s581 = sphi 0, %s579
    %s582 = sphi 0, %s581
    %s596 = sphi 0, %s582
    %s600 = sphi 0, %s600
    %s602 = sphi 0, %s600
    %s603 = sphi 0, %s602
    %s617 = sphi 0, %s603
    %s621 = sphi 0, %s621
    %s623 = sphi 0, %s621
    %s624 = sphi 0, %s623
    %s638 = sphi 0, %s624
    %s642 = sphi 0, %s642
    %s644 = sphi 0, %s642
    %s645 = sphi 0, %s644
    %s659 = sphi 0, %s645
    %s663 = sphi 0, %s663
    %s665 = sphi 0, %s663
    %s666 = sphi 0, %s665
    %s680 = sphi 0, %s666
    %s688 = sphi 0, %s690
    %s691 = sphi 0, %s688
    %s692 = sphi 0, %s691
    %s708 = sphi 0, %s692
    %s716 = sphi 0, %s718
    %s719 = sphi 0, %s716
    %s720 = sphi 0, %s719
    %s736 = sphi 0, %s720
    %s744 = sphi 0, %s746
    %s747 = sphi 0, %s744
    %s748 = sphi 0, %s747
    %s764 = sphi 0, %s748
    %s772 = sphi 0, %s774
    %s775 = sphi 0, %s772
    %s776 = sphi 0, %s775
    %s792 = sphi 0, %s776
    %s800 = sphi 0, %s802
    %s803 = sphi 0, %s800
    %s804 = sphi 0, %s803
    %s820 = sphi 0, %s804
    %s828 = sphi 0, %s830
    %s831 = sphi 0, %s828
    %s832 = sphi 0, %s831
    %s848 = sphi 0, %s832
    %s856 = sphi 0, %s858
    %s859 = sphi 0, %s856
    %s860 = sphi 0, %s859
    %s876 = sphi 0, %s860
    %s884 = sphi 0, %s886
    %s887 = sphi 0, %s884
    %s888 = sphi 0, %s887
    %s904 = sphi 0, %s888
    %s912 = sphi 0, %s914
    %s915 = sphi 0, %s912
    %s916 = sphi 0, %s915
    %s932 = sphi 0, %s916
  $region4: #{iwae_forward.1} parent=0 // loop_header_branch
    %81 = sbr.rel (%p79) target = $region8
  $region5: #{iwae_forward.1} parent=0 // loop_body
    %s83 = ssub.s32 %s78, 1
    %s84 = ssub.s32 %s78, 2
    %s91 = sadd.s32 1, %s86
    %p92 = scmp.ge.s32.totalorder %s91, 4
    %s93 = scalar_select %p92, 0, %s91
    %s94 = sadd.s32 1, %s85
    %s95 = scalar_select %p92, %s94, %s85
    %p96 = scmp.ge.s32.totalorder %s95, 1
    %s97 = scalar_select %p96, 0, %s95
    %s98 = ssub.s32 %s85, %s97
    %p99 = scmp.eq.s32.totalorder %s98, 0
    %s101 = sadd.s32 %s100, 1
    %s102 = scalar_select %p99, %s100, %s101
    %p105 = pneg %p99
    %p106 = scmp.eq.s32.totalorder %s78, 3
    %p107 = por %p105, %p106
    %p108 = scmp.ne.s32.totalorder %s100, %s103
    %p109 = scmp.eq.s32.totalorder %s78, 0
    %p110 = por %p108, %p109
    %p111 = scmp.ne.s32.totalorder %s100, %s103
    %p112 = scmp.eq.s32.totalorder %s83, 3
    %p113 = por %p111, %p112
    %p114 = scmp.ne.s32.totalorder %s103, %s104
    %p115 = scmp.eq.s32.totalorder %s83, 0
    %p116 = por %p114, %p115
    %p117 = scmp.ne.s32.totalorder %s103, %s104
    %p118 = scmp.eq.s32.totalorder %s84, 3
    %p119 = por %p117, %p118
    %p121 = scmp.ne.s32.totalorder %s104, %s120
    %p122 = scmp.eq.s32.totalorder %s84, 0
    %p123 = por %p121, %p122
    %s124 = ssub.s32 %s86, %s93
    %s125 = ssub.s32 %s85, %s97
    %s126 = sor.u32 %s124, %s125
    %p127 = scmp.eq.s32.totalorder %s126, 0
    %s129 = sadd.s32 %s128, 1
    %s130 = scalar_select %p127, %s128, %s129
    %p133 = pneg %p127
    %p134 = scmp.eq.s32.totalorder %s78, 3
    %p135 = por %p133, %p134
    %p136 = scmp.ne.s32.totalorder %s128, %s131
    %p137 = scmp.eq.s32.totalorder %s78, 0
    %p138 = por %p136, %p137
    %p139 = scmp.ne.s32.totalorder %s128, %s131
    %p140 = scmp.eq.s32.totalorder %s83, 3
    %p141 = por %p139, %p140
    %p142 = scmp.ne.s32.totalorder %s131, %s132
    %p143 = scmp.eq.s32.totalorder %s83, 0
    %p144 = por %p142, %p143
    %p145 = scmp.ne.s32.totalorder %s131, %s132
    %p146 = scmp.eq.s32.totalorder %s84, 3
    %p147 = por %p145, %p146
    %p149 = scmp.ne.s32.totalorder %s132, %s148
    %p150 = scmp.eq.s32.totalorder %s84, 0
    %p151 = por %p149, %p150
    %s152 = ssub.s32 %s86, %s93
    %s153 = ssub.s32 %s85, %s97
    %s154 = sor.u32 %s152, %s153
    %p155 = scmp.eq.s32.totalorder %s154, 0
    %s157 = sadd.s32 %s156, 1
    %s158 = scalar_select %p155, %s156, %s157
    %p161 = pneg %p155
    %p162 = scmp.eq.s32.totalorder %s78, 3
    %p163 = por %p161, %p162
    %p164 = scmp.ne.s32.totalorder %s156, %s159
    %p165 = scmp.eq.s32.totalorder %s78, 0
    %p166 = por %p164, %p165
    %p167 = scmp.ne.s32.totalorder %s156, %s159
    %p168 = scmp.eq.s32.totalorder %s83, 3
    %p169 = por %p167, %p168
    %p170 = scmp.ne.s32.totalorder %s159, %s160
    %p171 = scmp.eq.s32.totalorder %s83, 0
    %p172 = por %p170, %p171
    %p173 = scmp.ne.s32.totalorder %s159, %s160
    %p174 = scmp.eq.s32.totalorder %s84, 3
    %p175 = por %p173, %p174
    %p177 = scmp.ne.s32.totalorder %s160, %s176
    %p178 = scmp.eq.s32.totalorder %s84, 0
    %p179 = por %p177, %p178
    %s181 = sadd.s32 %s180, 1
    %p184 = scmp.eq.s32.totalorder %s78, 3
    %p185 = scmp.ne.s32.totalorder %s180, %s182
    %p186 = scmp.eq.s32.totalorder %s78, 0
    %p187 = por %p185, %p186
    %p188 = scmp.ne.s32.totalorder %s180, %s182
    %p189 = scmp.eq.s32.totalorder %s83, 3
    %p190 = por %p188, %p189
    %p191 = scmp.ne.s32.totalorder %s182, %s183
    %p192 = scmp.eq.s32.totalorder %s83, 0
    %p193 = por %p191, %p192
    %p194 = scmp.ne.s32.totalorder %s182, %s183
    %p195 = scmp.eq.s32.totalorder %s84, 3
    %p196 = por %p194, %p195
    %p198 = scmp.ne.s32.totalorder %s183, %s197
    %p199 = scmp.eq.s32.totalorder %s84, 0
    %p200 = por %p198, %p199
    %s202 = sadd.s32 %s201, 1
    %p205 = scmp.eq.s32.totalorder %s78, 3
    %p206 = scmp.ne.s32.totalorder %s201, %s203
    %p207 = scmp.eq.s32.totalorder %s78, 0
    %p208 = por %p206, %p207
    %p209 = scmp.ne.s32.totalorder %s201, %s203
    %p210 = scmp.eq.s32.totalorder %s83, 3
    %p211 = por %p209, %p210
    %p212 = scmp.ne.s32.totalorder %s203, %s204
    %p213 = scmp.eq.s32.totalorder %s83, 0
    %p214 = por %p212, %p213
    %p215 = scmp.ne.s32.totalorder %s203, %s204
    %p216 = scmp.eq.s32.totalorder %s84, 3
    %p217 = por %p215, %p216
    %p219 = scmp.ne.s32.totalorder %s204, %s218
    %p220 = scmp.eq.s32.totalorder %s84, 0
    %p221 = por %p219, %p220
    %s223 = sadd.s32 %s222, 1
    %p226 = scmp.eq.s32.totalorder %s78, 3
    %p227 = scmp.ne.s32.totalorder %s222, %s224
    %p228 = scmp.eq.s32.totalorder %s78, 0
    %p229 = por %p227, %p228
    %p230 = scmp.ne.s32.totalorder %s222, %s224
    %p231 = scmp.eq.s32.totalorder %s83, 3
    %p232 = por %p230, %p231
    %p233 = scmp.ne.s32.totalorder %s224, %s225
    %p234 = scmp.eq.s32.totalorder %s83, 0
    %p235 = por %p233, %p234
    %p236 = scmp.ne.s32.totalorder %s224, %s225
    %p237 = scmp.eq.s32.totalorder %s84, 3
    %p238 = por %p236, %p237
    %p240 = scmp.ne.s32.totalorder %s225, %s239
    %p241 = scmp.eq.s32.totalorder %s84, 0
    %p242 = por %p240, %p241
    %s244 = sadd.s32 %s243, 1
    %p247 = scmp.eq.s32.totalorder %s78, 3
    %p248 = scmp.ne.s32.totalorder %s243, %s245
    %p249 = scmp.eq.s32.totalorder %s78, 0
    %p250 = por %p248, %p249
    %p251 = scmp.ne.s32.totalorder %s243, %s245
    %p252 = scmp.eq.s32.totalorder %s83, 3
    %p253 = por %p251, %p252
    %p254 = scmp.ne.s32.totalorder %s245, %s246
    %p255 = scmp.eq.s32.totalorder %s83, 0
    %p256 = por %p254, %p255
    %p257 = scmp.ne.s32.totalorder %s245, %s246
    %p258 = scmp.eq.s32.totalorder %s84, 3
    %p259 = por %p257, %p258
    %p261 = scmp.ne.s32.totalorder %s246, %s260
    %p262 = scmp.eq.s32.totalorder %s84, 0
    %p263 = por %p261, %p262
    %s265 = sadd.s32 %s264, 1
    %p268 = scmp.eq.s32.totalorder %s78, 3
    %p269 = scmp.ne.s32.totalorder %s264, %s266
    %p270 = scmp.eq.s32.totalorder %s78, 0
    %p271 = por %p269, %p270
    %p272 = scmp.ne.s32.totalorder %s264, %s266
    %p273 = scmp.eq.s32.totalorder %s83, 3
    %p274 = por %p272, %p273
    %p275 = scmp.ne.s32.totalorder %s266, %s267
    %p276 = scmp.eq.s32.totalorder %s83, 0
    %p277 = por %p275, %p276
    %p278 = scmp.ne.s32.totalorder %s266, %s267
    %p279 = scmp.eq.s32.totalorder %s84, 3
    %p280 = por %p278, %p279
    %p282 = scmp.ne.s32.totalorder %s267, %s281
    %p283 = scmp.eq.s32.totalorder %s84, 0
    %p284 = por %p282, %p283
    %s286 = sadd.s32 %s285, 1
    %p289 = scmp.eq.s32.totalorder %s78, 3
    %p290 = scmp.ne.s32.totalorder %s285, %s287
    %p291 = scmp.eq.s32.totalorder %s78, 0
    %p292 = por %p290, %p291
    %p293 = scmp.ne.s32.totalorder %s285, %s287
    %p294 = scmp.eq.s32.totalorder %s83, 3
    %p295 = por %p293, %p294
    %p296 = scmp.ne.s32.totalorder %s287, %s288
    %p297 = scmp.eq.s32.totalorder %s83, 0
    %p298 = por %p296, %p297
    %p299 = scmp.ne.s32.totalorder %s287, %s288
    %p300 = scmp.eq.s32.totalorder %s84, 3
    %p301 = por %p299, %p300
    %p303 = scmp.ne.s32.totalorder %s288, %s302
    %p304 = scmp.eq.s32.totalorder %s84, 0
    %p305 = por %p303, %p304
    %s307 = sadd.s32 %s306, 1
    %p310 = scmp.eq.s32.totalorder %s78, 3
    %p311 = scmp.ne.s32.totalorder %s306, %s308
    %p312 = scmp.eq.s32.totalorder %s78, 0
    %p313 = por %p311, %p312
    %p314 = scmp.ne.s32.totalorder %s306, %s308
    %p315 = scmp.eq.s32.totalorder %s83, 3
    %p316 = por %p314, %p315
    %p317 = scmp.ne.s32.totalorder %s308, %s309
    %p318 = scmp.eq.s32.totalorder %s83, 0
    %p319 = por %p317, %p318
    %p320 = scmp.ne.s32.totalorder %s308, %s309
    %p321 = scmp.eq.s32.totalorder %s84, 3
    %p322 = por %p320, %p321
    %p324 = scmp.ne.s32.totalorder %s309, %s323
    %p325 = scmp.eq.s32.totalorder %s84, 0
    %p326 = por %p324, %p325
    %s328 = sadd.s32 %s327, 1
    %p331 = scmp.eq.s32.totalorder %s78, 3
    %p332 = scmp.ne.s32.totalorder %s327, %s329
    %p333 = scmp.eq.s32.totalorder %s78, 0
    %p334 = por %p332, %p333
    %p335 = scmp.ne.s32.totalorder %s327, %s329
    %p336 = scmp.eq.s32.totalorder %s83, 3
    %p337 = por %p335, %p336
    %p338 = scmp.ne.s32.totalorder %s329, %s330
    %p339 = scmp.eq.s32.totalorder %s83, 0
    %p340 = por %p338, %p339
    %p341 = scmp.ne.s32.totalorder %s329, %s330
    %p342 = scmp.eq.s32.totalorder %s84, 3
    %p343 = por %p341, %p342
    %p345 = scmp.ne.s32.totalorder %s330, %s344
    %p346 = scmp.eq.s32.totalorder %s84, 0
    %p347 = por %p345, %p346
    %s349 = sadd.s32 %s348, 1
    %p352 = scmp.eq.s32.totalorder %s78, 3
    %p353 = scmp.ne.s32.totalorder %s348, %s350
    %p354 = scmp.eq.s32.totalorder %s78, 0
    %p355 = por %p353, %p354
    %p356 = scmp.ne.s32.totalorder %s348, %s350
    %p357 = scmp.eq.s32.totalorder %s83, 3
    %p358 = por %p356, %p357
    %p359 = scmp.ne.s32.totalorder %s350, %s351
    %p360 = scmp.eq.s32.totalorder %s83, 0
    %p361 = por %p359, %p360
    %p362 = scmp.ne.s32.totalorder %s350, %s351
    %p363 = scmp.eq.s32.totalorder %s84, 3
    %p364 = por %p362, %p363
    %p366 = scmp.ne.s32.totalorder %s351, %s365
    %p367 = scmp.eq.s32.totalorder %s84, 0
    %p368 = por %p366, %p367
    %s370 = sadd.s32 %s369, 1
    %p373 = scmp.eq.s32.totalorder %s78, 3
    %p374 = scmp.ne.s32.totalorder %s369, %s371
    %p375 = scmp.eq.s32.totalorder %s78, 0
    %p376 = por %p374, %p375
    %p377 = scmp.ne.s32.totalorder %s369, %s371
    %p378 = scmp.eq.s32.totalorder %s83, 3
    %p379 = por %p377, %p378
    %p380 = scmp.ne.s32.totalorder %s371, %s372
    %p381 = scmp.eq.s32.totalorder %s83, 0
    %p382 = por %p380, %p381
    %p383 = scmp.ne.s32.totalorder %s371, %s372
    %p384 = scmp.eq.s32.totalorder %s84, 3
    %p385 = por %p383, %p384
    %p387 = scmp.ne.s32.totalorder %s372, %s386
    %p388 = scmp.eq.s32.totalorder %s84, 0
    %p389 = por %p387, %p388
    %s391 = sadd.s32 %s390, 1
    %p394 = scmp.eq.s32.totalorder %s78, 3
    %p395 = scmp.ne.s32.totalorder %s390, %s392
    %p396 = scmp.eq.s32.totalorder %s78, 0
    %p397 = por %p395, %p396
    %p398 = scmp.ne.s32.totalorder %s390, %s392
    %p399 = scmp.eq.s32.totalorder %s83, 3
    %p400 = por %p398, %p399
    %p401 = scmp.ne.s32.totalorder %s392, %s393
    %p402 = scmp.eq.s32.totalorder %s83, 0
    %p403 = por %p401, %p402
    %p404 = scmp.ne.s32.totalorder %s392, %s393
    %p405 = scmp.eq.s32.totalorder %s84, 3
    %p406 = por %p404, %p405
    %p408 = scmp.ne.s32.totalorder %s393, %s407
    %p409 = scmp.eq.s32.totalorder %s84, 0
    %p410 = por %p408, %p409
    %s412 = sadd.s32 %s411, 1
    %p415 = scmp.eq.s32.totalorder %s78, 3
    %p416 = scmp.ne.s32.totalorder %s411, %s413
    %p417 = scmp.eq.s32.totalorder %s78, 0
    %p418 = por %p416, %p417
    %p419 = scmp.ne.s32.totalorder %s411, %s413
    %p420 = scmp.eq.s32.totalorder %s83, 3
    %p421 = por %p419, %p420
    %p422 = scmp.ne.s32.totalorder %s413, %s414
    %p423 = scmp.eq.s32.totalorder %s83, 0
    %p424 = por %p422, %p423
    %p425 = scmp.ne.s32.totalorder %s413, %s414
    %p426 = scmp.eq.s32.totalorder %s84, 3
    %p427 = por %p425, %p426
    %p429 = scmp.ne.s32.totalorder %s414, %s428
    %p430 = scmp.eq.s32.totalorder %s84, 0
    %p431 = por %p429, %p430
    %s433 = sadd.s32 %s432, 1
    %p436 = scmp.eq.s32.totalorder %s78, 3
    %p437 = scmp.ne.s32.totalorder %s432, %s434
    %p438 = scmp.eq.s32.totalorder %s78, 0
    %p439 = por %p437, %p438
    %p440 = scmp.ne.s32.totalorder %s432, %s434
    %p441 = scmp.eq.s32.totalorder %s83, 3
    %p442 = por %p440, %p441
    %p443 = scmp.ne.s32.totalorder %s434, %s435
    %p444 = scmp.eq.s32.totalorder %s83, 0
    %p445 = por %p443, %p444
    %p446 = scmp.ne.s32.totalorder %s434, %s435
    %p447 = scmp.eq.s32.totalorder %s84, 3
    %p448 = por %p446, %p447
    %p450 = scmp.ne.s32.totalorder %s435, %s449
    %p451 = scmp.eq.s32.totalorder %s84, 0
    %p452 = por %p450, %p451
    %s454 = sadd.s32 %s453, 1
    %p457 = scmp.eq.s32.totalorder %s78, 3
    %p458 = scmp.ne.s32.totalorder %s453, %s455
    %p459 = scmp.eq.s32.totalorder %s78, 0
    %p460 = por %p458, %p459
    %p461 = scmp.ne.s32.totalorder %s453, %s455
    %p462 = scmp.eq.s32.totalorder %s83, 3
    %p463 = por %p461, %p462
    %p464 = scmp.ne.s32.totalorder %s455, %s456
    %p465 = scmp.eq.s32.totalorder %s83, 0
    %p466 = por %p464, %p465
    %p467 = scmp.ne.s32.totalorder %s455, %s456
    %p468 = scmp.eq.s32.totalorder %s84, 3
    %p469 = por %p467, %p468
    %p471 = scmp.ne.s32.totalorder %s456, %s470
    %p472 = scmp.eq.s32.totalorder %s84, 0
    %p473 = por %p471, %p472
    %s475 = sadd.s32 %s474, 1
    %p478 = scmp.eq.s32.totalorder %s78, 3
    %p479 = scmp.ne.s32.totalorder %s474, %s476
    %p480 = scmp.eq.s32.totalorder %s78, 0
    %p481 = por %p479, %p480
    %p482 = scmp.ne.s32.totalorder %s474, %s476
    %p483 = scmp.eq.s32.totalorder %s83, 3
    %p484 = por %p482, %p483
    %p485 = scmp.ne.s32.totalorder %s476, %s477
    %p486 = scmp.eq.s32.totalorder %s83, 0
    %p487 = por %p485, %p486
    %p488 = scmp.ne.s32.totalorder %s476, %s477
    %p489 = scmp.eq.s32.totalorder %s84, 3
    %p490 = por %p488, %p489
    %p492 = scmp.ne.s32.totalorder %s477, %s491
    %p493 = scmp.eq.s32.totalorder %s84, 0
    %p494 = por %p492, %p493
    %s496 = sadd.s32 %s495, 1
    %p499 = scmp.eq.s32.totalorder %s78, 3
    %p500 = scmp.ne.s32.totalorder %s495, %s497
    %p501 = scmp.eq.s32.totalorder %s78, 0
    %p502 = por %p500, %p501
    %p503 = scmp.ne.s32.totalorder %s495, %s497
    %p504 = scmp.eq.s32.totalorder %s83, 3
    %p505 = por %p503, %p504
    %p506 = scmp.ne.s32.totalorder %s497, %s498
    %p507 = scmp.eq.s32.totalorder %s83, 0
    %p508 = por %p506, %p507
    %p509 = scmp.ne.s32.totalorder %s497, %s498
    %p510 = scmp.eq.s32.totalorder %s84, 3
    %p511 = por %p509, %p510
    %p513 = scmp.ne.s32.totalorder %s498, %s512
    %p514 = scmp.eq.s32.totalorder %s84, 0
    %p515 = por %p513, %p514
    %s517 = sadd.s32 %s516, 1
    %p520 = scmp.eq.s32.totalorder %s78, 3
    %p521 = scmp.ne.s32.totalorder %s516, %s518
    %p522 = scmp.eq.s32.totalorder %s78, 0
    %p523 = por %p521, %p522
    %p524 = scmp.ne.s32.totalorder %s516, %s518
    %p525 = scmp.eq.s32.totalorder %s83, 3
    %p526 = por %p524, %p525
    %p527 = scmp.ne.s32.totalorder %s518, %s519
    %p528 = scmp.eq.s32.totalorder %s83, 0
    %p529 = por %p527, %p528
    %p530 = scmp.ne.s32.totalorder %s518, %s519
    %p531 = scmp.eq.s32.totalorder %s84, 3
    %p532 = por %p530, %p531
    %p534 = scmp.ne.s32.totalorder %s519, %s533
    %p535 = scmp.eq.s32.totalorder %s84, 0
    %p536 = por %p534, %p535
    %s538 = sadd.s32 %s537, 1
    %p541 = scmp.eq.s32.totalorder %s78, 3
    %p542 = scmp.ne.s32.totalorder %s537, %s539
    %p543 = scmp.eq.s32.totalorder %s78, 0
    %p544 = por %p542, %p543
    %p545 = scmp.ne.s32.totalorder %s537, %s539
    %p546 = scmp.eq.s32.totalorder %s83, 3
    %p547 = por %p545, %p546
    %p548 = scmp.ne.s32.totalorder %s539, %s540
    %p549 = scmp.eq.s32.totalorder %s83, 0
    %p550 = por %p548, %p549
    %p551 = scmp.ne.s32.totalorder %s539, %s540
    %p552 = scmp.eq.s32.totalorder %s84, 3
    %p553 = por %p551, %p552
    %p555 = scmp.ne.s32.totalorder %s540, %s554
    %p556 = scmp.eq.s32.totalorder %s84, 0
    %p557 = por %p555, %p556
    %s559 = sadd.s32 %s558, 1
    %p562 = scmp.eq.s32.totalorder %s78, 3
    %p563 = scmp.ne.s32.totalorder %s558, %s560
    %p564 = scmp.eq.s32.totalorder %s78, 0
    %p565 = por %p563, %p564
    %p566 = scmp.ne.s32.totalorder %s558, %s560
    %p567 = scmp.eq.s32.totalorder %s83, 3
    %p568 = por %p566, %p567
    %p569 = scmp.ne.s32.totalorder %s560, %s561
    %p570 = scmp.eq.s32.totalorder %s83, 0
    %p571 = por %p569, %p570
    %p572 = scmp.ne.s32.totalorder %s560, %s561
    %p573 = scmp.eq.s32.totalorder %s84, 3
    %p574 = por %p572, %p573
    %p576 = scmp.ne.s32.totalorder %s561, %s575
    %p577 = scmp.eq.s32.totalorder %s84, 0
    %p578 = por %p576, %p577
    %s580 = sadd.s32 %s579, 1
    %p583 = scmp.eq.s32.totalorder %s78, 3
    %p584 = scmp.ne.s32.totalorder %s579, %s581
    %p585 = scmp.eq.s32.totalorder %s78, 0
    %p586 = por %p584, %p585
    %p587 = scmp.ne.s32.totalorder %s579, %s581
    %p588 = scmp.eq.s32.totalorder %s83, 3
    %p589 = por %p587, %p588
    %p590 = scmp.ne.s32.totalorder %s581, %s582
    %p591 = scmp.eq.s32.totalorder %s83, 0
    %p592 = por %p590, %p591
    %p593 = scmp.ne.s32.totalorder %s581, %s582
    %p594 = scmp.eq.s32.totalorder %s84, 3
    %p595 = por %p593, %p594
    %p597 = scmp.ne.s32.totalorder %s582, %s596
    %p598 = scmp.eq.s32.totalorder %s84, 0
    %p599 = por %p597, %p598
    %s601 = sadd.s32 %s600, 1
    %p604 = scmp.eq.s32.totalorder %s78, 3
    %p605 = scmp.ne.s32.totalorder %s600, %s602
    %p606 = scmp.eq.s32.totalorder %s78, 0
    %p607 = por %p605, %p606
    %p608 = scmp.ne.s32.totalorder %s600, %s602
    %p609 = scmp.eq.s32.totalorder %s83, 3
    %p610 = por %p608, %p609
    %p611 = scmp.ne.s32.totalorder %s602, %s603
    %p612 = scmp.eq.s32.totalorder %s83, 0
    %p613 = por %p611, %p612
    %p614 = scmp.ne.s32.totalorder %s602, %s603
    %p615 = scmp.eq.s32.totalorder %s84, 3
    %p616 = por %p614, %p615
    %p618 = scmp.ne.s32.totalorder %s603, %s617
    %p619 = scmp.eq.s32.totalorder %s84, 0
    %p620 = por %p618, %p619
    %s622 = sadd.s32 %s621, 1
    %p625 = scmp.eq.s32.totalorder %s78, 3
    %p626 = scmp.ne.s32.totalorder %s621, %s623
    %p627 = scmp.eq.s32.totalorder %s78, 0
    %p628 = por %p626, %p627
    %p629 = scmp.ne.s32.totalorder %s621, %s623
    %p630 = scmp.eq.s32.totalorder %s83, 3
    %p631 = por %p629, %p630
    %p632 = scmp.ne.s32.totalorder %s623, %s624
    %p633 = scmp.eq.s32.totalorder %s83, 0
    %p634 = por %p632, %p633
    %p635 = scmp.ne.s32.totalorder %s623, %s624
    %p636 = scmp.eq.s32.totalorder %s84, 3
    %p637 = por %p635, %p636
    %p639 = scmp.ne.s32.totalorder %s624, %s638
    %p640 = scmp.eq.s32.totalorder %s84, 0
    %p641 = por %p639, %p640
    %s643 = sadd.s32 %s642, 1
    %p646 = scmp.eq.s32.totalorder %s78, 3
    %p647 = scmp.ne.s32.totalorder %s642, %s644
    %p648 = scmp.eq.s32.totalorder %s78, 0
    %p649 = por %p647, %p648
    %p650 = scmp.ne.s32.totalorder %s642, %s644
    %p651 = scmp.eq.s32.totalorder %s83, 3
    %p652 = por %p650, %p651
    %p653 = scmp.ne.s32.totalorder %s644, %s645
    %p654 = scmp.eq.s32.totalorder %s83, 0
    %p655 = por %p653, %p654
    %p656 = scmp.ne.s32.totalorder %s644, %s645
    %p657 = scmp.eq.s32.totalorder %s84, 3
    %p658 = por %p656, %p657
    %p660 = scmp.ne.s32.totalorder %s645, %s659
    %p661 = scmp.eq.s32.totalorder %s84, 0
    %p662 = por %p660, %p661
    %s664 = sadd.s32 %s663, 1
    %p667 = scmp.eq.s32.totalorder %s78, 3
    %p668 = scmp.ne.s32.totalorder %s663, %s665
    %p669 = scmp.eq.s32.totalorder %s78, 0
    %p670 = por %p668, %p669
    %p671 = scmp.ne.s32.totalorder %s663, %s665
    %p672 = scmp.eq.s32.totalorder %s83, 3
    %p673 = por %p671, %p672
    %p674 = scmp.ne.s32.totalorder %s665, %s666
    %p675 = scmp.eq.s32.totalorder %s83, 0
    %p676 = por %p674, %p675
    %p677 = scmp.ne.s32.totalorder %s665, %s666
    %p678 = scmp.eq.s32.totalorder %s84, 3
    %p679 = por %p677, %p678
    %p681 = scmp.ne.s32.totalorder %s666, %s680
    %p682 = scmp.eq.s32.totalorder %s84, 0
    %p683 = por %p681, %p682
    %s684 = ssub.s32 %s86, %s93
    %s685 = ssub.s32 %s85, %s97
    %s686 = sor.u32 %s684, %s685
    %p687 = scmp.eq.s32.totalorder %s686, 0
    %s689 = sadd.s32 %s688, 1
    %s690 = scalar_select %p687, %s688, %s689
    %p693 = pneg %p687
    %p694 = scmp.eq.s32.totalorder %s78, 3
    %p695 = por %p693, %p694
    %p696 = scmp.ne.s32.totalorder %s688, %s691
    %p697 = scmp.eq.s32.totalorder %s78, 0
    %p698 = por %p696, %p697
    %p699 = scmp.ne.s32.totalorder %s688, %s691
    %p700 = scmp.eq.s32.totalorder %s83, 3
    %p701 = por %p699, %p700
    %p702 = scmp.ne.s32.totalorder %s691, %s692
    %p703 = scmp.eq.s32.totalorder %s83, 0
    %p704 = por %p702, %p703
    %p705 = scmp.ne.s32.totalorder %s691, %s692
    %p706 = scmp.eq.s32.totalorder %s84, 3
    %p707 = por %p705, %p706
    %p709 = scmp.ne.s32.totalorder %s692, %s708
    %p710 = scmp.eq.s32.totalorder %s84, 0
    %p711 = por %p709, %p710
    %s712 = ssub.s32 %s86, %s93
    %s713 = ssub.s32 %s85, %s97
    %s714 = sor.u32 %s712, %s713
    %p715 = scmp.eq.s32.totalorder %s714, 0
    %s717 = sadd.s32 %s716, 1
    %s718 = scalar_select %p715, %s716, %s717
    %p721 = pneg %p715
    %p722 = scmp.eq.s32.totalorder %s78, 3
    %p723 = por %p721, %p722
    %p724 = scmp.ne.s32.totalorder %s716, %s719
    %p725 = scmp.eq.s32.totalorder %s78, 0
    %p726 = por %p724, %p725
    %p727 = scmp.ne.s32.totalorder %s716, %s719
    %p728 = scmp.eq.s32.totalorder %s83, 3
    %p729 = por %p727, %p728
    %p730 = scmp.ne.s32.totalorder %s719, %s720
    %p731 = scmp.eq.s32.totalorder %s83, 0
    %p732 = por %p730, %p731
    %p733 = scmp.ne.s32.totalorder %s719, %s720
    %p734 = scmp.eq.s32.totalorder %s84, 3
    %p735 = por %p733, %p734
    %p737 = scmp.ne.s32.totalorder %s720, %s736
    %p738 = scmp.eq.s32.totalorder %s84, 0
    %p739 = por %p737, %p738
    %s740 = ssub.s32 %s86, %s93
    %s741 = ssub.s32 %s85, %s97
    %s742 = sor.u32 %s740, %s741
    %p743 = scmp.eq.s32.totalorder %s742, 0
    %s745 = sadd.s32 %s744, 1
    %s746 = scalar_select %p743, %s744, %s745
    %p749 = pneg %p743
    %p750 = scmp.eq.s32.totalorder %s78, 3
    %p751 = por %p749, %p750
    %p752 = scmp.ne.s32.totalorder %s744, %s747
    %p753 = scmp.eq.s32.totalorder %s78, 0
    %p754 = por %p752, %p753
    %p755 = scmp.ne.s32.totalorder %s744, %s747
    %p756 = scmp.eq.s32.totalorder %s83, 3
    %p757 = por %p755, %p756
    %p758 = scmp.ne.s32.totalorder %s747, %s748
    %p759 = scmp.eq.s32.totalorder %s83, 0
    %p760 = por %p758, %p759
    %p761 = scmp.ne.s32.totalorder %s747, %s748
    %p762 = scmp.eq.s32.totalorder %s84, 3
    %p763 = por %p761, %p762
    %p765 = scmp.ne.s32.totalorder %s748, %s764
    %p766 = scmp.eq.s32.totalorder %s84, 0
    %p767 = por %p765, %p766
    %s768 = ssub.s32 %s86, %s93
    %s769 = ssub.s32 %s85, %s97
    %s770 = sor.u32 %s768, %s769
    %p771 = scmp.eq.s32.totalorder %s770, 0
    %s773 = sadd.s32 %s772, 1
    %s774 = scalar_select %p771, %s772, %s773
    %p777 = pneg %p771
    %p778 = scmp.eq.s32.totalorder %s78, 3
    %p779 = por %p777, %p778
    %p780 = scmp.ne.s32.totalorder %s772, %s775
    %p781 = scmp.eq.s32.totalorder %s78, 0
    %p782 = por %p780, %p781
    %p783 = scmp.ne.s32.totalorder %s772, %s775
    %p784 = scmp.eq.s32.totalorder %s83, 3
    %p785 = por %p783, %p784
    %p786 = scmp.ne.s32.totalorder %s775, %s776
    %p787 = scmp.eq.s32.totalorder %s83, 0
    %p788 = por %p786, %p787
    %p789 = scmp.ne.s32.totalorder %s775, %s776
    %p790 = scmp.eq.s32.totalorder %s84, 3
    %p791 = por %p789, %p790
    %p793 = scmp.ne.s32.totalorder %s776, %s792
    %p794 = scmp.eq.s32.totalorder %s84, 0
    %p795 = por %p793, %p794
    %s796 = ssub.s32 %s86, %s93
    %s797 = ssub.s32 %s85, %s97
    %s798 = sor.u32 %s796, %s797
    %p799 = scmp.eq.s32.totalorder %s798, 0
    %s801 = sadd.s32 %s800, 1
    %s802 = scalar_select %p799, %s800, %s801
    %p805 = pneg %p799
    %p806 = scmp.eq.s32.totalorder %s78, 3
    %p807 = por %p805, %p806
    %p808 = scmp.ne.s32.totalorder %s800, %s803
    %p809 = scmp.eq.s32.totalorder %s78, 0
    %p810 = por %p808, %p809
    %p811 = scmp.ne.s32.totalorder %s800, %s803
    %p812 = scmp.eq.s32.totalorder %s83, 3
    %p813 = por %p811, %p812
    %p814 = scmp.ne.s32.totalorder %s803, %s804
    %p815 = scmp.eq.s32.totalorder %s83, 0
    %p816 = por %p814, %p815
    %p817 = scmp.ne.s32.totalorder %s803, %s804
    %p818 = scmp.eq.s32.totalorder %s84, 3
    %p819 = por %p817, %p818
    %p821 = scmp.ne.s32.totalorder %s804, %s820
    %p822 = scmp.eq.s32.totalorder %s84, 0
    %p823 = por %p821, %p822
    %s824 = ssub.s32 %s86, %s93
    %s825 = ssub.s32 %s85, %s97
    %s826 = sor.u32 %s824, %s825
    %p827 = scmp.eq.s32.totalorder %s826, 0
    %s829 = sadd.s32 %s828, 1
    %s830 = scalar_select %p827, %s828, %s829
    %p833 = pneg %p827
    %p834 = scmp.eq.s32.totalorder %s78, 3
    %p835 = por %p833, %p834
    %p836 = scmp.ne.s32.totalorder %s828, %s831
    %p837 = scmp.eq.s32.totalorder %s78, 0
    %p838 = por %p836, %p837
    %p839 = scmp.ne.s32.totalorder %s828, %s831
    %p840 = scmp.eq.s32.totalorder %s83, 3
    %p841 = por %p839, %p840
    %p842 = scmp.ne.s32.totalorder %s831, %s832
    %p843 = scmp.eq.s32.totalorder %s83, 0
    %p844 = por %p842, %p843
    %p845 = scmp.ne.s32.totalorder %s831, %s832
    %p846 = scmp.eq.s32.totalorder %s84, 3
    %p847 = por %p845, %p846
    %p849 = scmp.ne.s32.totalorder %s832, %s848
    %p850 = scmp.eq.s32.totalorder %s84, 0
    %p851 = por %p849, %p850
    %s852 = ssub.s32 %s86, %s93
    %s853 = ssub.s32 %s85, %s97
    %s854 = sor.u32 %s852, %s853
    %p855 = scmp.eq.s32.totalorder %s854, 0
    %s857 = sadd.s32 %s856, 1
    %s858 = scalar_select %p855, %s856, %s857
    %p861 = pneg %p855
    %p862 = scmp.eq.s32.totalorder %s78, 3
    %p863 = por %p861, %p862
    %p864 = scmp.ne.s32.totalorder %s856, %s859
    %p865 = scmp.eq.s32.totalorder %s78, 0
    %p866 = por %p864, %p865
    %p867 = scmp.ne.s32.totalorder %s856, %s859
    %p868 = scmp.eq.s32.totalorder %s83, 3
    %p869 = por %p867, %p868
    %p870 = scmp.ne.s32.totalorder %s859, %s860
    %p871 = scmp.eq.s32.totalorder %s83, 0
    %p872 = por %p870, %p871
    %p873 = scmp.ne.s32.totalorder %s859, %s860
    %p874 = scmp.eq.s32.totalorder %s84, 3
    %p875 = por %p873, %p874
    %p877 = scmp.ne.s32.totalorder %s860, %s876
    %p878 = scmp.eq.s32.totalorder %s84, 0
    %p879 = por %p877, %p878
    %s880 = ssub.s32 %s86, %s93
    %s881 = ssub.s32 %s85, %s97
    %s882 = sor.u32 %s880, %s881
    %p883 = scmp.eq.s32.totalorder %s882, 0
    %s885 = sadd.s32 %s884, 1
    %s886 = scalar_select %p883, %s884, %s885
    %p889 = pneg %p883
    %p890 = scmp.eq.s32.totalorder %s78, 3
    %p891 = por %p889, %p890
    %p892 = scmp.ne.s32.totalorder %s884, %s887
    %p893 = scmp.eq.s32.totalorder %s78, 0
    %p894 = por %p892, %p893
    %p895 = scmp.ne.s32.totalorder %s884, %s887
    %p896 = scmp.eq.s32.totalorder %s83, 3
    %p897 = por %p895, %p896
    %p898 = scmp.ne.s32.totalorder %s887, %s888
    %p899 = scmp.eq.s32.totalorder %s83, 0
    %p900 = por %p898, %p899
    %p901 = scmp.ne.s32.totalorder %s887, %s888
    %p902 = scmp.eq.s32.totalorder %s84, 3
    %p903 = por %p901, %p902
    %p905 = scmp.ne.s32.totalorder %s888, %s904
    %p906 = scmp.eq.s32.totalorder %s84, 0
    %p907 = por %p905, %p906
    %s908 = ssub.s32 %s86, %s93
    %s909 = ssub.s32 %s85, %s97
    %s910 = sor.u32 %s908, %s909
    %p911 = scmp.eq.s32.totalorder %s910, 0
    %s913 = sadd.s32 %s912, 1
    %s914 = scalar_select %p911, %s912, %s913
    %p917 = pneg %p911
    %p918 = scmp.eq.s32.totalorder %s78, 3
    %p919 = por %p917, %p918
    %p920 = scmp.ne.s32.totalorder %s912, %s915
    %p921 = scmp.eq.s32.totalorder %s78, 0
    %p922 = por %p920, %p921
    %p923 = scmp.ne.s32.totalorder %s912, %s915
    %p924 = scmp.eq.s32.totalorder %s83, 3
    %p925 = por %p923, %p924
    %p926 = scmp.ne.s32.totalorder %s915, %s916
    %p927 = scmp.eq.s32.totalorder %s83, 0
    %p928 = por %p926, %p927
    %p929 = scmp.ne.s32.totalorder %s915, %s916
    %p930 = scmp.eq.s32.totalorder %s84, 3
    %p931 = por %p929, %p930
    %p933 = scmp.ne.s32.totalorder %s916, %s932
    %p934 = scmp.eq.s32.totalorder %s84, 0
    %p935 = por %p933, %p934
    %p936 = scmp.le.s32.totalorder 1, %s78
    %p937 = scmp.lt.s32.totalorder %s78, 5
    %p938 = pnand %p936, %p937
    %p939 = pneg %p938
    // Predicated region
    $region9: #{iwae_forward.1} parent=5 // pred_check
      _
    $region10: #{iwae_forward.1} parent=5 // pred_check_branch
      %941 = sbr.rel (%p938) target = $region12
    $region11: #{iwae_forward.1} parent=5 // pred_region
      %s942 = ssub.s32 %s78, 1
      // Predicated region
      $region13: #{iwae_forward.1} parent=11 // pred_check
        %p943 = pneg %p116
      $region14: #{iwae_forward.1} parent=11 // pred_check_branch
        %945 = sbr.rel (%p943) target = $region16
      $region15: #{iwae_forward.1} parent=11 // pred_region
        %p946 = scmp.lt.s32.totalorder %s87, 0
        %s947 = scalar_select %p946, %s87, 0
        %s948 = smul.addr %s947, 7
        %s949 = smul.addr %s948, 8
        %s950 = scalar_lea.vmem %s1, %s949
      $region16: #{iwae_forward.1} parent=11 // pred_fallthru
        _
      // Predicated region
      $region17: #{iwae_forward.1} parent=11 // pred_check
        %p951 = pneg %p193
      $region18: #{iwae_forward.1} parent=11 // pred_check_branch
        %953 = sbr.rel (%p951) target = $region20
      $region19: #{iwae_forward.1} parent=11 // pred_region
        _
      $region20: #{iwae_forward.1} parent=11 // pred_fallthru
        _
      // Predicated region
      $region21: #{iwae_forward.1} parent=11 // pred_check
        %p954 = pneg %p214
      $region22: #{iwae_forward.1} parent=11 // pred_check_branch
        %956 = sbr.rel (%p954) target = $region24
      $region23: #{iwae_forward.1} parent=11 // pred_region
        _
      $region24: #{iwae_forward.1} parent=11 // pred_fallthru
        _
      // Predicated region
      $region25: #{iwae_forward.1} parent=11 // pred_check
        %p957 = pneg %p235
      $region26: #{iwae_forward.1} parent=11 // pred_check_branch
        %959 = sbr.rel (%p957) target = $region28
      $region27: #{iwae_forward.1} parent=11 // pred_region
        _
      $region28: #{iwae_forward.1} parent=11 // pred_fallthru
        _
      // Predicated region
      $region29: #{iwae_forward.1} parent=11 // pred_check
        %p960 = pneg %p256
      $region30: #{iwae_forward.1} parent=11 // pred_check_branch
        %962 = sbr.rel (%p960) target = $region32
      $region31: #{iwae_forward.1} parent=11 // pred_region
        _
      $region32: #{iwae_forward.1} parent=11 // pred_fallthru
        _
      // Predicated region
      $region33: #{iwae_forward.1} parent=11 // pred_check
        %p963 = pneg %p277
      $region34: #{iwae_forward.1} parent=11 // pred_check_branch
        %965 = sbr.rel (%p963) target = $region36
      $region35: #{iwae_forward.1} parent=11 // pred_region
        _
      $region36: #{iwae_forward.1} parent=11 // pred_fallthru
        _
      // Predicated region
      $region37: #{iwae_forward.1} parent=11 // pred_check
        %p966 = pneg %p298
      $region38: #{iwae_forward.1} parent=11 // pred_check_branch
        %968 = sbr.rel (%p966) target = $region40
      $region39: #{iwae_forward.1} parent=11 // pred_region
        _
      $region40: #{iwae_forward.1} parent=11 // pred_fallthru
        _
      // Predicated region
      $region41: #{iwae_forward.1} parent=11 // pred_check
        %p969 = pneg %p319
      $region42: #{iwae_forward.1} parent=11 // pred_check_branch
        %971 = sbr.rel (%p969) target = $region44
      $region43: #{iwae_forward.1} parent=11 // pred_region
        _
      $region44: #{iwae_forward.1} parent=11 // pred_fallthru
        _
      // Predicated region
      $region45: #{iwae_forward.1} parent=11 // pred_check
        %p972 = pneg %p340
      $region46: #{iwae_forward.1} parent=11 // pred_check_branch
        %974 = sbr.rel (%p972) target = $region48
      $region47: #{iwae_forward.1} parent=11 // pred_region
        _
      $region48: #{iwae_forward.1} parent=11 // pred_fallthru
        _
      // Predicated region
      $region49: #{iwae_forward.1} parent=11 // pred_check
        %p975 = pneg %p361
      $region50: #{iwae_forward.1} parent=11 // pred_check_branch
        %977 = sbr.rel (%p975) target = $region52
      $region51: #{iwae_forward.1} parent=11 // pred_region
        _
      $region52: #{iwae_forward.1} parent=11 // pred_fallthru
        _
      // Predicated region
      $region53: #{iwae_forward.1} parent=11 // pred_check
        %p978 = pneg %p382
      $region54: #{iwae_forward.1} parent=11 // pred_check_branch
        %980 = sbr.rel (%p978) target = $region56
      $region55: #{iwae_forward.1} parent=11 // pred_region
        _
      $region56: #{iwae_forward.1} parent=11 // pred_fallthru
        _
      // Predicated region
      $region57: #{iwae_forward.1} parent=11 // pred_check
        %p981 = pneg %p403
      $region58: #{iwae_forward.1} parent=11 // pred_check_branch
        %983 = sbr.rel (%p981) target = $region60
      $region59: #{iwae_forward.1} parent=11 // pred_region
        _
      $region60: #{iwae_forward.1} parent=11 // pred_fallthru
        _
      // Predicated region
      $region61: #{iwae_forward.1} parent=11 // pred_check
        %p984 = pneg %p424
      $region62: #{iwae_forward.1} parent=11 // pred_check_branch
        %986 = sbr.rel (%p984) target = $region64
      $region63: #{iwae_forward.1} parent=11 // pred_region
        _
      $region64: #{iwae_forward.1} parent=11 // pred_fallthru
        _
      // Predicated region
      $region65: #{iwae_forward.1} parent=11 // pred_check
        %p987 = pneg %p445
      $region66: #{iwae_forward.1} parent=11 // pred_check_branch
        %989 = sbr.rel (%p987) target = $region68
      $region67: #{iwae_forward.1} parent=11 // pred_region
        _
      $region68: #{iwae_forward.1} parent=11 // pred_fallthru
        _
      // Predicated region
      $region69: #{iwae_forward.1} parent=11 // pred_check
        %p990 = pneg %p466
      $region70: #{iwae_forward.1} parent=11 // pred_check_branch
        %992 = sbr.rel (%p990) target = $region72
      $region71: #{iwae_forward.1} parent=11 // pred_region
        _
      $region72: #{iwae_forward.1} parent=11 // pred_fallthru
        _
      // Predicated region
      $region73: #{iwae_forward.1} parent=11 // pred_check
        %p993 = pneg %p487
      $region74: #{iwae_forward.1} parent=11 // pred_check_branch
        %995 = sbr.rel (%p993) target = $region76
      $region75: #{iwae_forward.1} parent=11 // pred_region
        _
      $region76: #{iwae_forward.1} parent=11 // pred_fallthru
        _
      // Predicated region
      $region77: #{iwae_forward.1} parent=11 // pred_check
        %p996 = pneg %p508
      $region78: #{iwae_forward.1} parent=11 // pred_check_branch
        %998 = sbr.rel (%p996) target = $region80
      $region79: #{iwae_forward.1} parent=11 // pred_region
        _
      $region80: #{iwae_forward.1} parent=11 // pred_fallthru
        _
      // Predicated region
      $region81: #{iwae_forward.1} parent=11 // pred_check
        %p999 = pneg %p529
      $region82: #{iwae_forward.1} parent=11 // pred_check_branch
        %1001 = sbr.rel (%p999) target = $region84
      $region83: #{iwae_forward.1} parent=11 // pred_region
        _
      $region84: #{iwae_forward.1} parent=11 // pred_fallthru
        _
      // Predicated region
      $region85: #{iwae_forward.1} parent=11 // pred_check
        %p1002 = pneg %p550
      $region86: #{iwae_forward.1} parent=11 // pred_check_branch
        %1004 = sbr.rel (%p1002) target = $region88
      $region87: #{iwae_forward.1} parent=11 // pred_region
        _
      $region88: #{iwae_forward.1} parent=11 // pred_fallthru
        _
      // Predicated region
      $region89: #{iwae_forward.1} parent=11 // pred_check
        %p1005 = pneg %p571
      $region90: #{iwae_forward.1} parent=11 // pred_check_branch
        %1007 = sbr.rel (%p1005) target = $region92
      $region91: #{iwae_forward.1} parent=11 // pred_region
        _
      $region92: #{iwae_forward.1} parent=11 // pred_fallthru
        _
      // Predicated region
      $region93: #{iwae_forward.1} parent=11 // pred_check
        %p1008 = pneg %p592
      $region94: #{iwae_forward.1} parent=11 // pred_check_branch
        %1010 = sbr.rel (%p1008) target = $region96
      $region95: #{iwae_forward.1} parent=11 // pred_region
        _
      $region96: #{iwae_forward.1} parent=11 // pred_fallthru
        _
      // Predicated region
      $region97: #{iwae_forward.1} parent=11 // pred_check
        %p1011 = pneg %p613
      $region98: #{iwae_forward.1} parent=11 // pred_check_branch
        %1013 = sbr.rel (%p1011) target = $region100
      $region99: #{iwae_forward.1} parent=11 // pred_region
        _
      $region100: #{iwae_forward.1} parent=11 // pred_fallthru
        _
      // Predicated region
      $region101: #{iwae_forward.1} parent=11 // pred_check
        %p1014 = pneg %p634
      $region102: #{iwae_forward.1} parent=11 // pred_check_branch
        %1016 = sbr.rel (%p1014) target = $region104
      $region103: #{iwae_forward.1} parent=11 // pred_region
        _
      $region104: #{iwae_forward.1} parent=11 // pred_fallthru
        _
      // Predicated region
      $region105: #{iwae_forward.1} parent=11 // pred_check
        %p1017 = pneg %p655
      $region106: #{iwae_forward.1} parent=11 // pred_check_branch
        %1019 = sbr.rel (%p1017) target = $region108
      $region107: #{iwae_forward.1} parent=11 // pred_region
        _
      $region108: #{iwae_forward.1} parent=11 // pred_fallthru
        _
      // Predicated region
      $region109: #{iwae_forward.1} parent=11 // pred_check
        %p1020 = pneg %p676
      $region110: #{iwae_forward.1} parent=11 // pred_check_branch
        %1022 = sbr.rel (%p1020) target = $region112
      $region111: #{iwae_forward.1} parent=11 // pred_region
        _
      $region112: #{iwae_forward.1} parent=11 // pred_fallthru
        _
    $region12: #{iwae_forward.1} parent=5 // pred_fallthru
      _
    %p1023 = scmp.lt.s32.totalorder %s78, 4
    // Predicated region
    $region113: #{iwae_forward.1} parent=5 // pred_check
      %p1024 = pneg %p1023
    $region114: #{iwae_forward.1} parent=5 // pred_check_branch
      %1026 = sbr.rel (%p1024) target = $region116
    $region115: #{iwae_forward.1} parent=5 // pred_region
      // Predicated region
      $region117: #{iwae_forward.1} parent=115 // pred_check
        %p1027 = pneg %p138
      $region118: #{iwae_forward.1} parent=115 // pred_check_branch
        %1029 = sbr.rel (%p1027) target = $region120
      $region119: #{iwae_forward.1} parent=115 // pred_region
        %p1030 = scmp.lt.s32.totalorder %s86, 3
        %s1031 = scalar_select %p1030, %s86, 3
        %p1032 = scmp.lt.s32.totalorder %s85, 0
        %s1033 = scalar_select %p1032, %s85, 0
        %s1034 = sadd.s32 %s1033, %s1031
        %s1035 = smul.addr %s1034, 8
        %s1036 = scalar_lea.vmem %s3, %s1035
      $region120: #{iwae_forward.1} parent=115 // pred_fallthru
        _
      // Predicated region
      $region121: #{iwae_forward.1} parent=115 // pred_check
        %p1037 = pneg %p166
      $region122: #{iwae_forward.1} parent=115 // pred_check_branch
        %1039 = sbr.rel (%p1037) target = $region124
      $region123: #{iwae_forward.1} parent=115 // pred_region
        %p1040 = scmp.lt.s32.totalorder %s86, 3
        %s1041 = scalar_select %p1040, %s86, 3
        %p1042 = scmp.lt.s32.totalorder %s85, 0
        %s1043 = scalar_select %p1042, %s85, 0
        %s1044 = sadd.s32 %s1043, %s1041
        %s1045 = smul.addr %s1044, 8
        %s1046 = scalar_lea.vmem %s5, %s1045
      $region124: #{iwae_forward.1} parent=115 // pred_fallthru
        _
    $region116: #{iwae_forward.1} parent=5 // pred_fallthru
      _
    %p1047 = scmp.le.s32.totalorder 1, %s78
    %p1048 = scmp.lt.s32.totalorder %s78, 5
    %p1049 = pnand %p1047, %p1048
    %p1050 = pneg %p1049
    // Predicated region
    $region125: #{iwae_forward.1} parent=5 // pred_check
      _
    $region126: #{iwae_forward.1} parent=5 // pred_check_branch
      %1052 = sbr.rel (%p1049) target = $region128
    $region127: #{iwae_forward.1} parent=5 // pred_region
      %s1053 = ssub.s32 %s78, 1
      %p1054 = scmp.lt.s32.totalorder %s87, 0
      %s1055 = scalar_select %p1054, %s87, 0
      %s1056 = smul.addr %s1055, 7
      %s1057 = smul.addr %s1056, 8
      %s1058 = scalar_lea.vmem %s1, %s1057
      %p1059 = pneg %p116
      %p1060 = pneg %p113
      %p1061 = scmp.lt.s32.totalorder %s88, 3
      %s1062 = scalar_select %p1061, %s88, 3
      %p1063 = scmp.lt.s32.totalorder %s87, 0
      %s1064 = scalar_select %p1063, %s87, 0
      %s1065 = sadd.s32 %s1064, %s1062
      %s1066 = smul.addr %s1065, 8
      %s1067 = scalar_lea.vmem %s3, %s1066
      %p1068 = pneg %p144
      %p1069 = pneg %p141
      %p1070 = scmp.lt.s32.totalorder %s88, 3
      %s1071 = scalar_select %p1070, %s88, 3
      %p1072 = scmp.lt.s32.totalorder %s87, 0
      %s1073 = scalar_select %p1072, %s87, 0
      %s1074 = sadd.s32 %s1073, %s1071
      %s1075 = smul.addr %s1074, 8
      %s1076 = scalar_lea.vmem %s5, %s1075
      %p1077 = pneg %p172
      %p1078 = pneg %p169
      %p1079 = pneg %p193
      %p1080 = pneg %p190
      %p1081 = pneg %p214
      %p1082 = pneg %p211
      %p1083 = pneg %p235
      %p1084 = pneg %p232
      %p1085 = pneg %p256
      %p1086 = pneg %p253
      %p1087 = pneg %p277
      %p1088 = pneg %p274
      %p1089 = pneg %p298
      %p1090 = pneg %p295
      %p1091 = pneg %p319
      %p1092 = pneg %p316
      %p1093 = pneg %p340
      %p1094 = pneg %p337
      %p1095 = pneg %p361
      %p1096 = pneg %p358
      %p1097 = pneg %p382
      %p1098 = pneg %p379
      %p1099 = pneg %p403
      %p1100 = pneg %p400
      %p1101 = pneg %p424
      %p1102 = pneg %p421
      %p1103 = pneg %p445
      %p1104 = pneg %p442
      %p1105 = pneg %p466
      %p1106 = pneg %p463
      %p1107 = pneg %p487
      %p1108 = pneg %p484
      %p1109 = pneg %p508
      %p1110 = pneg %p505
      %p1111 = pneg %p529
      %p1112 = pneg %p526
      %p1113 = pneg %p550
      %p1114 = pneg %p547
      %p1115 = pneg %p571
      %p1116 = pneg %p568
      %p1117 = pneg %p592
      %p1118 = pneg %p589
      %p1119 = pneg %p613
      %p1120 = pneg %p610
      %p1121 = pneg %p634
      %p1122 = pneg %p631
      %p1123 = pneg %p655
      %p1124 = pneg %p652
      %p1125 = pneg %p676
      %p1126 = pneg %p673
      %p1127 = pneg %p704
      %p1128 = pneg %p701
      %p1129 = scmp.lt.s32.totalorder %s88, 3
      %s1130 = scalar_select %p1129, %s88, 3
      %p1131 = scmp.lt.s32.totalorder %s87, 0
      %s1132 = scalar_select %p1131, %s87, 0
      %s1133 = sadd.s32 %s1132, %s1130
      %s1134 = smul.addr %s1133, 8
      %s1135 = scalar_lea.vmem %s55, %s1134
      %p1136 = pneg %p732
      %p1137 = pneg %p729
      %p1138 = scmp.lt.s32.totalorder %s88, 3
      %s1139 = scalar_select %p1138, %s88, 3
      %p1140 = scmp.lt.s32.totalorder %s87, 0
      %s1141 = scalar_select %p1140, %s87, 0
      %s1142 = sadd.s32 %s1141, %s1139
      %s1143 = smul.addr %s1142, 8
      %s1144 = scalar_lea.vmem %s57, %s1143
      %p1145 = pneg %p760
      %p1146 = pneg %p757
      %p1147 = scmp.lt.s32.totalorder %s88, 3
      %s1148 = scalar_select %p1147, %s88, 3
      %p1149 = scmp.lt.s32.totalorder %s87, 0
      %s1150 = scalar_select %p1149, %s87, 0
      %s1151 = sadd.s32 %s1150, %s1148
      %s1152 = smul.addr %s1151, 8
      %s1153 = scalar_lea.vmem %s59, %s1152
      %p1154 = pneg %p788
      %p1155 = pneg %p785
      %p1156 = scmp.lt.s32.totalorder %s88, 3
      %s1157 = scalar_select %p1156, %s88, 3
      %p1158 = scmp.lt.s32.totalorder %s87, 0
      %s1159 = scalar_select %p1158, %s87, 0
      %s1160 = sadd.s32 %s1159, %s1157
      %s1161 = smul.addr %s1160, 8
      %s1162 = scalar_lea.vmem %s61, %s1161
      %p1163 = pneg %p816
      %p1164 = pneg %p813
      %p1165 = scmp.lt.s32.totalorder %s88, 3
      %s1166 = scalar_select %p1165, %s88, 3
      %p1167 = scmp.lt.s32.totalorder %s87, 0
      %s1168 = scalar_select %p1167, %s87, 0
      %s1169 = sadd.s32 %s1168, %s1166
      %s1170 = smul.addr %s1169, 8
      %s1171 = scalar_lea.vmem %s63, %s1170
      %p1172 = pneg %p844
      %p1173 = pneg %p841
      %p1174 = scmp.lt.s32.totalorder %s88, 3
      %s1175 = scalar_select %p1174, %s88, 3
      %p1176 = scmp.lt.s32.totalorder %s87, 0
      %s1177 = scalar_select %p1176, %s87, 0
      %s1178 = sadd.s32 %s1177, %s1175
      %s1179 = smul.addr %s1178, 8
      %s1180 = scalar_lea.vmem %s65, %s1179
      %p1181 = pneg %p872
      %p1182 = pneg %p869
      %p1183 = scmp.lt.s32.totalorder %s88, 3
      %s1184 = scalar_select %p1183, %s88, 3
      %p1185 = scmp.lt.s32.totalorder %s87, 0
      %s1186 = scalar_select %p1185, %s87, 0
      %s1187 = sadd.s32 %s1186, %s1184
      %s1188 = smul.addr %s1187, 8
      %s1189 = scalar_lea.vmem %s67, %s1188
      %p1190 = pneg %p900
      %p1191 = pneg %p897
      %p1192 = scmp.lt.s32.totalorder %s88, 3
      %s1193 = scalar_select %p1192, %s88, 3
      %p1194 = scmp.lt.s32.totalorder %s87, 0
      %s1195 = scalar_select %p1194, %s87, 0
      %s1196 = sadd.s32 %s1195, %s1193
      %s1197 = smul.addr %s1196, 8
      %s1198 = scalar_lea.vmem %s69, %s1197
      %p1199 = pneg %p928
      %p1200 = pneg %p925
      %p1201 = scmp.lt.s32.totalorder %s88, 3
      %s1202 = scalar_select %p1201, %s88, 3
      %p1203 = scmp.lt.s32.totalorder %s87, 0
      %s1204 = scalar_select %p1203, %s87, 0
      %s1205 = smul.addr %s1204, 7
      %s1206 = smul.addr %s1202, 7
      %s1207 = sadd.s32 %s1205, %s1206
      %s1208 = smul.addr %s1207, 8
      %s1209 = scalar_lea.vmem %s71, %s1208
      %p1210 = scmp.lt.s32.totalorder %s87, 0
      %s1211 = scalar_select %p1210, %s87, 0
      %s1212 = smul.addr %s1211, 7
      %s1213 = smul.addr %s1212, 8
      %s1214 = scalar_lea.vmem %s1, %s1213
      %p1215 = scmp.lt.s32.totalorder %s88, 3
      %s1216 = scalar_select %p1215, %s88, 3
      %p1217 = scmp.lt.s32.totalorder %s87, 0
      %s1218 = scalar_select %p1217, %s87, 0
      %s1219 = sadd.s32 %s1218, %s1216
      %s1220 = smul.addr %s1219, 8
      %s1221 = scalar_lea.vmem %s3, %s1220
      %p1222 = scmp.lt.s32.totalorder %s88, 3
      %s1223 = scalar_select %p1222, %s88, 3
      %p1224 = scmp.lt.s32.totalorder %s87, 0
      %s1225 = scalar_select %p1224, %s87, 0
      %s1226 = sadd.s32 %s1225, %s1223
      %s1227 = smul.addr %s1226, 8
      %s1228 = scalar_lea.vmem %s5, %s1227
      %p1229 = scmp.lt.s32.totalorder %s88, 3
      %s1230 = scalar_select %p1229, %s88, 3
      %p1231 = scmp.lt.s32.totalorder %s87, 0
      %s1232 = scalar_select %p1231, %s87, 0
      %s1233 = sadd.s32 %s1232, %s1230
      %s1234 = smul.addr %s1233, 8
      %s1235 = scalar_lea.vmem %s55, %s1234
      %p1236 = scmp.lt.s32.totalorder %s88, 3
      %s1237 = scalar_select %p1236, %s88, 3
      %p1238 = scmp.lt.s32.totalorder %s87, 0
      %s1239 = scalar_select %p1238, %s87, 0
      %s1240 = sadd.s32 %s1239, %s1237
      %s1241 = smul.addr %s1240, 8
      %s1242 = scalar_lea.vmem %s57, %s1241
      %p1243 = scmp.lt.s32.totalorder %s88, 3
      %s1244 = scalar_select %p1243, %s88, 3
      %p1245 = scmp.lt.s32.totalorder %s87, 0
      %s1246 = scalar_select %p1245, %s87, 0
      %s1247 = sadd.s32 %s1246, %s1244
      %s1248 = smul.addr %s1247, 8
      %s1249 = scalar_lea.vmem %s59, %s1248
      %p1250 = scmp.lt.s32.totalorder %s88, 3
      %s1251 = scalar_select %p1250, %s88, 3
      %p1252 = scmp.lt.s32.totalorder %s87, 0
      %s1253 = scalar_select %p1252, %s87, 0
      %s1254 = sadd.s32 %s1253, %s1251
      %s1255 = smul.addr %s1254, 8
      %s1256 = scalar_lea.vmem %s61, %s1255
      %p1257 = scmp.lt.s32.totalorder %s88, 3
      %s1258 = scalar_select %p1257, %s88, 3
      %p1259 = scmp.lt.s32.totalorder %s87, 0
      %s1260 = scalar_select %p1259, %s87, 0
      %s1261 = sadd.s32 %s1260, %s1258
      %s1262 = smul.addr %s1261, 8
      %s1263 = scalar_lea.vmem %s63, %s1262
      %p1264 = scmp.lt.s32.totalorder %s88, 3
      %s1265 = scalar_select %p1264, %s88, 3
      %p1266 = scmp.lt.s32.totalorder %s87, 0
      %s1267 = scalar_select %p1266, %s87, 0
      %s1268 = sadd.s32 %s1267, %s1265
      %s1269 = smul.addr %s1268, 8
      %s1270 = scalar_lea.vmem %s65, %s1269
      %p1271 = scmp.lt.s32.totalorder %s88, 3
      %s1272 = scalar_select %p1271, %s88, 3
      %p1273 = scmp.lt.s32.totalorder %s87, 0
      %s1274 = scalar_select %p1273, %s87, 0
      %s1275 = sadd.s32 %s1274, %s1272
      %s1276 = smul.addr %s1275, 8
      %s1277 = scalar_lea.vmem %s67, %s1276
      %p1278 = scmp.lt.s32.totalorder %s88, 3
      %s1279 = scalar_select %p1278, %s88, 3
      %p1280 = scmp.lt.s32.totalorder %s87, 0
      %s1281 = scalar_select %p1280, %s87, 0
      %s1282 = sadd.s32 %s1281, %s1279
      %s1283 = smul.addr %s1282, 8
      %s1284 = scalar_lea.vmem %s69, %s1283
      %p1285 = scmp.lt.s32.totalorder %s88, 3
      %s1286 = scalar_select %p1285, %s88, 3
      %p1287 = scmp.lt.s32.totalorder %s87, 0
      %s1288 = scalar_select %p1287, %s87, 0
      %s1289 = smul.addr %s1288, 7
      %s1290 = smul.addr %s1286, 7
      %s1291 = sadd.s32 %s1289, %s1290
      %s1292 = smul.addr %s1291, 8
      %s1293 = scalar_lea.vmem %s71, %s1292
      %v1294 = vld [vmem:[%s1214] sm:$0xff]
      %v1295 = vld [vmem:[%s1214 + $0x8] sm:$0xff]
      %v1296 = vld [vmem:[%s1214 + $0x10] sm:$0xff]
      %v1297 = vld [vmem:[%s1214 + $0x18] sm:$0xff]
      %v1298 = vld [vmem:[%s1214 + $0x20] sm:$0xff]
      %v1299 = vld [vmem:[%s1214 + $0x28] sm:$0xff]
      %v1300 = vld [vmem:[%s1214 + $0x30] sm:$0xff]
      %v1301 = vld [vmem:[%s7] sm:$0xff]
      %v1302 = vld [vmem:[%s7 + $0x8] sm:$0xff]
      %v1303 = vld [vmem:[%s7 + $0x10] sm:$0xff]
      %v1304 = vld [vmem:[%s7 + $0x18] sm:$0xff]
      %v1305 = vld [vmem:[%s7 + $0x20] sm:$0xff]
      %v1306 = vld [vmem:[%s7 + $0x28] sm:$0xff]
      %v1307 = vld [vmem:[%s7 + $0x30] sm:$0xff]
      %v1308 = vld [vmem:[%s7 + $0x38] sm:$0xff]
      %v1309 = vld [vmem:[%s7 + $0x40] sm:$0xff]
      %v1310 = vld [vmem:[%s7 + $0x48] sm:$0xff]
      %v1311 = vld [vmem:[%s7 + $0x50] sm:$0xff]
      %v1312 = vld [vmem:[%s7 + $0x58] sm:$0xff]
      %v1313 = vld [vmem:[%s7 + $0x60] sm:$0xff]
      %v1314 = vld [vmem:[%s7 + $0x68] sm:$0xff]
      %v1315 = vld [vmem:[%s7 + $0x70] sm:$0xff]
      %v1316 = vld [vmem:[%s7 + $0x78] sm:$0xff]
      %v1317 = vld [vmem:[%s7 + $0x80] sm:$0xff]
      %v1318 = vld [vmem:[%s7 + $0x88] sm:$0xff]
      %v1319 = vld [vmem:[%s7 + $0x90] sm:$0xff]
      %v1320 = vld [vmem:[%s7 + $0x98] sm:$0xff]
      %v1321 = vld [vmem:[%s7 + $0xa0] sm:$0xff]
      %v1322 = vld [vmem:[%s7 + $0xa8] sm:$0xff]
      %v1323 = vld [vmem:[%s7 + $0xb0] sm:$0xff]
      %v1324 = vld [vmem:[%s7 + $0xb8] sm:$0xff]
      %v1325 = vld [vmem:[%s7 + $0xc0] sm:$0xff]
      %v1326 = vld [vmem:[%s7 + $0xc8] sm:$0xff]
      %v1327 = vld [vmem:[%s7 + $0xd0] sm:$0xff]
      %v1328 = vld [vmem:[%s7 + $0xd8] sm:$0xff]
      %v1329 = vld [vmem:[%s7 + $0xe0] sm:$0xff]
      %v1330 = vld [vmem:[%s7 + $0xe8] sm:$0xff]
      %v1331 = vld [vmem:[%s7 + $0xf0] sm:$0xff]
      %v1332 = vld [vmem:[%s7 + $0xf8] sm:$0xff]
      %v1333 = vld [vmem:[%s7 + $0x100] sm:$0xff]
      %v1334 = vld [vmem:[%s7 + $0x108] sm:$0xff]
      %v1335 = vld [vmem:[%s7 + $0x110] sm:$0xff]
      %v1336 = vld [vmem:[%s7 + $0x118] sm:$0xff]
      %v1337 = vld [vmem:[%s7 + $0x120] sm:$0xff]
      %v1338 = vld [vmem:[%s7 + $0x128] sm:$0xff]
      %v1339 = vld [vmem:[%s7 + $0x130] sm:$0xff]
      %v1340 = vld [vmem:[%s7 + $0x138] sm:$0xff]
      %v1341 = vld [vmem:[%s7 + $0x140] sm:$0xff]
      %v1342 = vld [vmem:[%s7 + $0x148] sm:$0xff]
      %v1343 = vld [vmem:[%s7 + $0x150] sm:$0xff]
      %v1344 = vld [vmem:[%s7 + $0x158] sm:$0xff]
      %v1345 = vld [vmem:[%s7 + $0x160] sm:$0xff]
      %v1346 = vld [vmem:[%s7 + $0x168] sm:$0xff]
      %v1347 = vld [vmem:[%s7 + $0x170] sm:$0xff]
      %v1348 = vld [vmem:[%s7 + $0x178] sm:$0xff]
      %v1349 = vld [vmem:[%s7 + $0x180] sm:$0xff]
      %v1350 = vld [vmem:[%s7 + $0x188] sm:$0xff]
      %v1351 = vld [vmem:[%s7 + $0x190] sm:$0xff]
      %v1352 = vld [vmem:[%s7 + $0x198] sm:$0xff]
      %v1353 = vld [vmem:[%s7 + $0x1a0] sm:$0xff]
      %v1354 = vld [vmem:[%s7 + $0x1a8] sm:$0xff]
      %v1355 = vld [vmem:[%s7 + $0x1b0] sm:$0xff]
      %v1356 = vld [vmem:[%s7 + $0x1b8] sm:$0xff]
      %v1357 = vld [vmem:[%s7 + $0x1c0] sm:$0xff]
      %v1358 = vld [vmem:[%s7 + $0x1c8] sm:$0xff]
      %v1359 = vld [vmem:[%s7 + $0x1d0] sm:$0xff]
      %v1360 = vld [vmem:[%s7 + $0x1d8] sm:$0xff]
      %v1361 = vld [vmem:[%s7 + $0x1e0] sm:$0xff]
      %v1362 = vld [vmem:[%s7 + $0x1e8] sm:$0xff]
      %v1363 = vld [vmem:[%s7 + $0x1f0] sm:$0xff]
      %v1364 = vld [vmem:[%s7 + $0x1f8] sm:$0xff]
      %v1365 = vld [vmem:[%s7 + $0x200] sm:$0xff]
      %v1366 = vld [vmem:[%s7 + $0x208] sm:$0xff]
      %v1367 = vld [vmem:[%s7 + $0x210] sm:$0xff]
      %v1368 = vld [vmem:[%s7 + $0x218] sm:$0xff]
      %v1369 = vld [vmem:[%s7 + $0x220] sm:$0xff]
      %v1370 = vld [vmem:[%s7 + $0x228] sm:$0xff]
      %v1371 = vld [vmem:[%s7 + $0x230] sm:$0xff]
      %v1372 = vld [vmem:[%s7 + $0x238] sm:$0xff]
      %v1373 = vld [vmem:[%s7 + $0x240] sm:$0xff]
      %v1374 = vld [vmem:[%s7 + $0x248] sm:$0xff]
      %v1375 = vld [vmem:[%s7 + $0x250] sm:$0xff]
      %v1376 = vld [vmem:[%s7 + $0x258] sm:$0xff]
      %v1377 = vld [vmem:[%s7 + $0x260] sm:$0xff]
      %v1378 = vld [vmem:[%s7 + $0x268] sm:$0xff]
      %v1379 = vld [vmem:[%s7 + $0x270] sm:$0xff]
      %v1380 = vld [vmem:[%s7 + $0x278] sm:$0xff]
      %v1381 = vld [vmem:[%s7 + $0x280] sm:$0xff]
      %v1382 = vld [vmem:[%s7 + $0x288] sm:$0xff]
      %v1383 = vld [vmem:[%s7 + $0x290] sm:$0xff]
      %v1384 = vld [vmem:[%s7 + $0x298] sm:$0xff]
      %v1385 = vld [vmem:[%s7 + $0x2a0] sm:$0xff]
      %v1386 = vld [vmem:[%s7 + $0x2a8] sm:$0xff]
      %v1387 = vld [vmem:[%s7 + $0x2b0] sm:$0xff]
      %v1388 = vld [vmem:[%s7 + $0x2b8] sm:$0xff]
      %v1389 = vld [vmem:[%s7 + $0x2c0] sm:$0xff]
      %v1390 = vld [vmem:[%s7 + $0x2c8] sm:$0xff]
      %v1391 = vld [vmem:[%s7 + $0x2d0] sm:$0xff]
      %v1392 = vld [vmem:[%s7 + $0x2d8] sm:$0xff]
      %v1393 = vld [vmem:[%s7 + $0x2e0] sm:$0xff]
      %v1394 = vld [vmem:[%s7 + $0x2e8] sm:$0xff]
      %v1395 = vld [vmem:[%s7 + $0x2f0] sm:$0xff]
      %v1396 = vld [vmem:[%s7 + $0x2f8] sm:$0xff]
      %v1397 = vld [vmem:[%s7 + $0x300] sm:$0xff]
      %v1398 = vld [vmem:[%s7 + $0x308] sm:$0xff]
      %v1399 = vld [vmem:[%s7 + $0x310] sm:$0xff]
      %v1400 = vld [vmem:[%s7 + $0x318] sm:$0xff]
      %v1401 = vld [vmem:[%s7 + $0x320] sm:$0xff]
      %v1402 = vld [vmem:[%s7 + $0x328] sm:$0xff]
      %v1403 = vld [vmem:[%s7 + $0x330] sm:$0xff]
      %v1404 = vld [vmem:[%s7 + $0x338] sm:$0xff]
      %v1405 = vld [vmem:[%s7 + $0x340] sm:$0xff]
      %v1406 = vld [vmem:[%s7 + $0x348] sm:$0xff]
      %v1407 = vld [vmem:[%s7 + $0x350] sm:$0xff]
      %v1408 = vld [vmem:[%s7 + $0x358] sm:$0xff]
      %v1409 = vld [vmem:[%s7 + $0x360] sm:$0xff]
      %v1410 = vld [vmem:[%s7 + $0x368] sm:$0xff]
      %v1411 = vld [vmem:[%s7 + $0x370] sm:$0xff]
      %v1412 = vld [vmem:[%s7 + $0x378] sm:$0xff]
      %v1413 = vld [vmem:[%s7 + $0x380] sm:$0xff]
      %v1414 = vld [vmem:[%s7 + $0x388] sm:$0xff]
      %v1415 = vld [vmem:[%s7 + $0x390] sm:$0xff]
      %v1416 = vld [vmem:[%s7 + $0x398] sm:$0xff]
      %v1417 = vld [vmem:[%s7 + $0x3a0] sm:$0xff]
      %v1418 = vld [vmem:[%s7 + $0x3a8] sm:$0xff]
      %v1419 = vld [vmem:[%s7 + $0x3b0] sm:$0xff]
      %v1420 = vld [vmem:[%s7 + $0x3b8] sm:$0xff]
      %v1421 = vld [vmem:[%s7 + $0x3c0] sm:$0xff]
      %v1422 = vld [vmem:[%s7 + $0x3c8] sm:$0xff]
      %v1423 = vld [vmem:[%s7 + $0x3d0] sm:$0xff]
      %v1424 = vld [vmem:[%s7 + $0x3d8] sm:$0xff]
      %v1425 = vld [vmem:[%s7 + $0x3e0] sm:$0xff]
      %v1426 = vld [vmem:[%s7 + $0x3e8] sm:$0xff]
      %v1427 = vld [vmem:[%s7 + $0x3f0] sm:$0xff]
      %v1428 = vld [vmem:[%s7 + $0x3f8] sm:$0xff]
      %v1429 = vld [vmem:[%s7 + $0x400] sm:$0xff]
      %v1430 = vld [vmem:[%s7 + $0x408] sm:$0xff]
      %v1431 = vld [vmem:[%s7 + $0x410] sm:$0xff]
      %v1432 = vld [vmem:[%s7 + $0x418] sm:$0xff]
      %v1433 = vld [vmem:[%s7 + $0x420] sm:$0xff]
      %v1434 = vld [vmem:[%s7 + $0x428] sm:$0xff]
      %v1435 = vld [vmem:[%s7 + $0x430] sm:$0xff]
      %v1436 = vld [vmem:[%s7 + $0x438] sm:$0xff]
      %v1437 = vld [vmem:[%s7 + $0x440] sm:$0xff]
      %v1438 = vld [vmem:[%s7 + $0x448] sm:$0xff]
      %v1439 = vld [vmem:[%s7 + $0x450] sm:$0xff]
      %v1440 = vld [vmem:[%s7 + $0x458] sm:$0xff]
      %v1441 = vld [vmem:[%s7 + $0x460] sm:$0xff]
      %v1442 = vld [vmem:[%s7 + $0x468] sm:$0xff]
      %v1443 = vld [vmem:[%s7 + $0x470] sm:$0xff]
      %v1444 = vld [vmem:[%s7 + $0x478] sm:$0xff]
      %v1445 = vld [vmem:[%s7 + $0x480] sm:$0xff]
      %v1446 = vld [vmem:[%s7 + $0x488] sm:$0xff]
      %v1447 = vld [vmem:[%s7 + $0x490] sm:$0xff]
      %v1448 = vld [vmem:[%s7 + $0x498] sm:$0xff]
      %v1449 = vld [vmem:[%s7 + $0x4a0] sm:$0xff]
      %v1450 = vld [vmem:[%s7 + $0x4a8] sm:$0xff]
      %v1451 = vld [vmem:[%s7 + $0x4b0] sm:$0xff]
      %v1452 = vld [vmem:[%s7 + $0x4b8] sm:$0xff]
      %v1453 = vld [vmem:[%s7 + $0x4c0] sm:$0xff]
      %v1454 = vld [vmem:[%s7 + $0x4c8] sm:$0xff]
      %v1455 = vld [vmem:[%s7 + $0x4d0] sm:$0xff]
      %v1456 = vld [vmem:[%s7 + $0x4d8] sm:$0xff]
      %v1457 = vld [vmem:[%s7 + $0x4e0] sm:$0xff]
      %v1458 = vld [vmem:[%s7 + $0x4e8] sm:$0xff]
      %v1459 = vld [vmem:[%s7 + $0x4f0] sm:$0xff]
      %v1460 = vld [vmem:[%s7 + $0x4f8] sm:$0xff]
      %v1461 = vld [vmem:[%s7 + $0x500] sm:$0xff]
      %v1462 = vld [vmem:[%s7 + $0x508] sm:$0xff]
      %v1463 = vld [vmem:[%s7 + $0x510] sm:$0xff]
      %v1464 = vld [vmem:[%s7 + $0x518] sm:$0xff]
      %v1465 = vld [vmem:[%s7 + $0x520] sm:$0xff]
      %v1466 = vld [vmem:[%s7 + $0x528] sm:$0xff]
      %v1467 = vld [vmem:[%s7 + $0x530] sm:$0xff]
      %v1468 = vld [vmem:[%s7 + $0x538] sm:$0xff]
      %v1469 = vld [vmem:[%s7 + $0x540] sm:$0xff]
      %v1470 = vld [vmem:[%s7 + $0x548] sm:$0xff]
      %v1471 = vld [vmem:[%s7 + $0x550] sm:$0xff]
      %v1472 = vld [vmem:[%s7 + $0x558] sm:$0xff]
      %v1473 = vld [vmem:[%s7 + $0x560] sm:$0xff]
      %v1474 = vld [vmem:[%s7 + $0x568] sm:$0xff]
      %v1475 = vld [vmem:[%s7 + $0x570] sm:$0xff]
      %v1476 = vld [vmem:[%s7 + $0x578] sm:$0xff]
      %v1477 = vld [vmem:[%s7 + $0x580] sm:$0xff]
      %v1478 = vld [vmem:[%s7 + $0x588] sm:$0xff]
      %v1479 = vld [vmem:[%s7 + $0x590] sm:$0xff]
      %v1480 = vld [vmem:[%s7 + $0x598] sm:$0xff]
      %v1481 = vld [vmem:[%s7 + $0x5a0] sm:$0xff]
      %v1482 = vld [vmem:[%s7 + $0x5a8] sm:$0xff]
      %v1483 = vld [vmem:[%s7 + $0x5b0] sm:$0xff]
      %v1484 = vld [vmem:[%s7 + $0x5b8] sm:$0xff]
      %v1485 = vld [vmem:[%s7 + $0x5c0] sm:$0xff]
      %v1486 = vld [vmem:[%s7 + $0x5c8] sm:$0xff]
      %v1487 = vld [vmem:[%s7 + $0x5d0] sm:$0xff]
      %v1488 = vld [vmem:[%s7 + $0x5d8] sm:$0xff]
      %v1489 = vld [vmem:[%s7 + $0x5e0] sm:$0xff]
      %v1490 = vld [vmem:[%s7 + $0x5e8] sm:$0xff]
      %v1491 = vld [vmem:[%s7 + $0x5f0] sm:$0xff]
      %v1492 = vld [vmem:[%s7 + $0x5f8] sm:$0xff]
      %v1493 = vld [vmem:[%s7 + $0x600] sm:$0xff]
      %v1494 = vld [vmem:[%s7 + $0x608] sm:$0xff]
      %v1495 = vld [vmem:[%s7 + $0x610] sm:$0xff]
      %v1496 = vld [vmem:[%s7 + $0x618] sm:$0xff]
      %v1497 = vld [vmem:[%s7 + $0x620] sm:$0xff]
      %v1498 = vld [vmem:[%s7 + $0x628] sm:$0xff]
      %v1499 = vld [vmem:[%s7 + $0x630] sm:$0xff]
      %v1500 = vld [vmem:[%s7 + $0x638] sm:$0xff]
      %v1501 = vld [vmem:[%s7 + $0x640] sm:$0xff]
      %v1502 = vld [vmem:[%s7 + $0x648] sm:$0xff]
      %v1503 = vld [vmem:[%s7 + $0x650] sm:$0xff]
      %v1504 = vld [vmem:[%s7 + $0x658] sm:$0xff]
      %v1505 = vld [vmem:[%s7 + $0x660] sm:$0xff]
      %v1506 = vld [vmem:[%s7 + $0x668] sm:$0xff]
      %v1507 = vld [vmem:[%s7 + $0x670] sm:$0xff]
      %v1508 = vld [vmem:[%s7 + $0x678] sm:$0xff]
      %v1509 = vld [vmem:[%s7 + $0x680] sm:$0xff]
      %v1510 = vld [vmem:[%s7 + $0x688] sm:$0xff]
      %v1511 = vld [vmem:[%s7 + $0x690] sm:$0xff]
      %v1512 = vld [vmem:[%s7 + $0x698] sm:$0xff]
      %v1513 = vld [vmem:[%s7 + $0x6a0] sm:$0xff]
      %v1514 = vld [vmem:[%s7 + $0x6a8] sm:$0xff]
      %v1515 = vld [vmem:[%s7 + $0x6b0] sm:$0xff]
      %v1516 = vld [vmem:[%s7 + $0x6b8] sm:$0xff]
      %v1517 = vld [vmem:[%s7 + $0x6c0] sm:$0xff]
      %v1518 = vld [vmem:[%s7 + $0x6c8] sm:$0xff]
      %v1519 = vld [vmem:[%s7 + $0x6d0] sm:$0xff]
      %v1520 = vld [vmem:[%s7 + $0x6d8] sm:$0xff]
      %v1521 = vld [vmem:[%s7 + $0x6e0] sm:$0xff]
      %v1522 = vld [vmem:[%s7 + $0x6e8] sm:$0xff]
      %v1523 = vld [vmem:[%s7 + $0x6f0] sm:$0xff]
      %v1524 = vld [vmem:[%s7 + $0x6f8] sm:$0xff]
      %v1525 = vld [vmem:[%s9] sm:$0x3]
      %v1527 = vlaneseq
      %v1528 = vshrl.u32 %v1527, 7
      %v1529 = vsub.s32 0, %v1528
      %v1530 = vrot.slane %v1525, %v1529
      %v1531 = vlaneseq
      %v1532 = vshrl.u32 %v1531, 7
      %v1533 = vsub.s32 1, %v1532
      %v1534 = vrot.slane %v1525, %v1533
      %1537 = vmatprep.subr.mxu0 %v1332
      %1538 = vmatpush1.msra.mxu0 %v1331
      %1539 = vmatprep.subr.mxu0 %v1330
      %1540 = vmatpush1.msra.mxu0 %v1329
      %1541 = vmatprep.subr.mxu0 %v1328
      %1542 = vmatpush1.msra.mxu0 %v1327
      %1543 = vmatprep.subr.mxu0 %v1326
      %1544 = vmatpush1.msra.mxu0 %v1325
      %1545 = vmatprep.subr.mxu0 %v1324
      %1546 = vmatpush1.msra.mxu0 %v1323
      %1547 = vmatprep.subr.mxu0 %v1322
      %1548 = vmatpush1.msra.mxu0 %v1321
      %1549 = vmatprep.subr.mxu0 %v1320
      %1550 = vmatpush1.msra.mxu0 %v1319
      %1551 = vmatprep.subr.mxu0 %v1318
      %1552 = vmatpush1.msra.mxu0 %v1317
      %1553 = vmatprep.subr.mxu0 %v1316
      %1554 = vmatpush1.msra.mxu0 %v1315
      %1555 = vmatprep.subr.mxu0 %v1314
      %1556 = vmatpush1.msra.mxu0 %v1313
      %1557 = vmatprep.subr.mxu0 %v1312
      %1558 = vmatpush1.msra.mxu0 %v1311
      %1559 = vmatprep.subr.mxu0 %v1310
      %1560 = vmatpush1.msra.mxu0 %v1309
      %1561 = vmatprep.subr.mxu0 %v1308
      %1562 = vmatpush1.msra.mxu0 %v1307
      %1563 = vmatprep.subr.mxu0 %v1306
      %1564 = vmatpush1.msra.mxu0 %v1305
      %1565 = vmatprep.subr.mxu0 %v1304
      %1566 = vmatpush1.msra.mxu0 %v1303
      %1567 = vmatprep.subr.mxu0 %v1302
      %1568 = vmatpush1.msra.mxu0 %v1301
      %1569 = vmatprep.subr.mxu0 %v1364
      %1570 = vmatpush2.msra.mxu0 %v1363
      %1571 = vmatprep.subr.mxu0 %v1362
      %1572 = vmatpush2.msra.mxu0 %v1361
      %1573 = vmatprep.subr.mxu0 %v1360
      %1574 = vmatpush2.msra.mxu0 %v1359
      %1575 = vmatprep.subr.mxu0 %v1358
      %1576 = vmatpush2.msra.mxu0 %v1357
      %1577 = vmatprep.subr.mxu0 %v1356
      %1578 = vmatpush2.msra.mxu0 %v1355
      %1579 = vmatprep.subr.mxu0 %v1354
      %1580 = vmatpush2.msra.mxu0 %v1353
      %1581 = vmatprep.subr.mxu0 %v1352
      %1582 = vmatpush2.msra.mxu0 %v1351
      %1583 = vmatprep.subr.mxu0 %v1350
      %1584 = vmatpush2.msra.mxu0 %v1349
      %1585 = vmatprep.subr.mxu0 %v1348
      %1586 = vmatpush2.msra.mxu0 %v1347
      %1587 = vmatprep.subr.mxu0 %v1346
      %1588 = vmatpush2.msra.mxu0 %v1345
      %1589 = vmatprep.subr.mxu0 %v1344
      %1590 = vmatpush2.msra.mxu0 %v1343
      %1591 = vmatprep.subr.mxu0 %v1342
      %1592 = vmatpush2.msra.mxu0 %v1341
      %1593 = vmatprep.subr.mxu0 %v1340
      %1594 = vmatpush2.msra.mxu0 %v1339
      %1595 = vmatprep.subr.mxu0 %v1338
      %1596 = vmatpush2.msra.mxu0 %v1337
      %1597 = vmatprep.subr.mxu0 %v1336
      %1598 = vmatpush2.msra.mxu0 %v1335
      %1599 = vmatprep.subr.mxu0 %v1334
      %1600 = vmatpush2.msra.mxu0 %v1333
      %1601 = vmatprep.mubr.f32.mxu0 %v1295
      %1602 = vmatmul.mubr.f32.gmra.mxu0 %v1294
      %v1603 = vpop.f32.mrf.mxu0
      %v1604 = vadd.f32 %v1530, %v1603
      %v1605 = vpop.f32.mrf.mxu0
      %v1606 = vadd.f32 %v1534, %v1605
      %1607 = vdwg.mxu0
      %1608 = vmatprep.subr.mxu0 %v1396
      %1609 = vmatpush1.msra.mxu0 %v1395
      %1610 = vmatprep.subr.mxu0 %v1394
      %1611 = vmatpush1.msra.mxu0 %v1393
      %1612 = vmatprep.subr.mxu0 %v1392
      %1613 = vmatpush1.msra.mxu0 %v1391
      %1614 = vmatprep.subr.mxu0 %v1390
      %1615 = vmatpush1.msra.mxu0 %v1389
      %1616 = vmatprep.subr.mxu0 %v1388
      %1617 = vmatpush1.msra.mxu0 %v1387
      %1618 = vmatprep.subr.mxu0 %v1386
      %1619 = vmatpush1.msra.mxu0 %v1385
      %1620 = vmatprep.subr.mxu0 %v1384
      %1621 = vmatpush1.msra.mxu0 %v1383
      %1622 = vmatprep.subr.mxu0 %v1382
      %1623 = vmatpush1.msra.mxu0 %v1381
      %1624 = vmatprep.subr.mxu0 %v1380
      %1625 = vmatpush1.msra.mxu0 %v1379
      %1626 = vmatprep.subr.mxu0 %v1378
      %1627 = vmatpush1.msra.mxu0 %v1377
      %1628 = vmatprep.subr.mxu0 %v1376
      %1629 = vmatpush1.msra.mxu0 %v1375
      %1630 = vmatprep.subr.mxu0 %v1374
      %1631 = vmatpush1.msra.mxu0 %v1373
      %1632 = vmatprep.subr.mxu0 %v1372
      %1633 = vmatpush1.msra.mxu0 %v1371
      %1634 = vmatprep.subr.mxu0 %v1370
      %1635 = vmatpush1.msra.mxu0 %v1369
      %1636 = vmatprep.subr.mxu0 %v1368
      %1637 = vmatpush1.msra.mxu0 %v1367
      %1638 = vmatprep.subr.mxu0 %v1366
      %1639 = vmatpush1.msra.mxu0 %v1365
      %1640 = vmatprep.subr.mxu0 %v1428
      %1641 = vmatpush2.msra.mxu0 %v1427
      %1642 = vmatprep.subr.mxu0 %v1426
      %1643 = vmatpush2.msra.mxu0 %v1425
      %1644 = vmatprep.subr.mxu0 %v1424
      %1645 = vmatpush2.msra.mxu0 %v1423
      %1646 = vmatprep.subr.mxu0 %v1422
      %1647 = vmatpush2.msra.mxu0 %v1421
      %1648 = vmatprep.subr.mxu0 %v1420
      %1649 = vmatpush2.msra.mxu0 %v1419
      %1650 = vmatprep.subr.mxu0 %v1418
      %1651 = vmatpush2.msra.mxu0 %v1417
      %1652 = vmatprep.subr.mxu0 %v1416
      %1653 = vmatpush2.msra.mxu0 %v1415
      %1654 = vmatprep.subr.mxu0 %v1414
      %1655 = vmatpush2.msra.mxu0 %v1413
      %1656 = vmatprep.subr.mxu0 %v1412
      %1657 = vmatpush2.msra.mxu0 %v1411
      %1658 = vmatprep.subr.mxu0 %v1410
      %1659 = vmatpush2.msra.mxu0 %v1409
      %1660 = vmatprep.subr.mxu0 %v1408
      %1661 = vmatpush2.msra.mxu0 %v1407
      %1662 = vmatprep.subr.mxu0 %v1406
      %1663 = vmatpush2.msra.mxu0 %v1405
      %1664 = vmatprep.subr.mxu0 %v1404
      %1665 = vmatpush2.msra.mxu0 %v1403
      %1666 = vmatprep.subr.mxu0 %v1402
      %1667 = vmatpush2.msra.mxu0 %v1401
      %1668 = vmatprep.subr.mxu0 %v1400
      %1669 = vmatpush2.msra.mxu0 %v1399
      %1670 = vmatprep.subr.mxu0 %v1398
      %1671 = vmatpush2.msra.mxu0 %v1397
      %1672 = vmatprep.mubr.f32.mxu0 %v1297
      %1673 = vmatmul.mubr.f32.gmra.mxu0 %v1296
      %v1674 = vpop.f32.mrf.mxu0
      %v1675 = vadd.f32 %v1604, %v1674
      %v1676 = vpop.f32.mrf.mxu0
      %v1677 = vadd.f32 %v1606, %v1676
      %1678 = vdwg.mxu0
      %1679 = vmatprep.subr.mxu0 %v1460
      %1680 = vmatpush1.msra.mxu0 %v1459
      %1681 = vmatprep.subr.mxu0 %v1458
      %1682 = vmatpush1.msra.mxu0 %v1457
      %1683 = vmatprep.subr.mxu0 %v1456
      %1684 = vmatpush1.msra.mxu0 %v1455
      %1685 = vmatprep.subr.mxu0 %v1454
      %1686 = vmatpush1.msra.mxu0 %v1453
      %1687 = vmatprep.subr.mxu0 %v1452
      %1688 = vmatpush1.msra.mxu0 %v1451
      %1689 = vmatprep.subr.mxu0 %v1450
      %1690 = vmatpush1.msra.mxu0 %v1449
      %1691 = vmatprep.subr.mxu0 %v1448
      %1692 = vmatpush1.msra.mxu0 %v1447
      %1693 = vmatprep.subr.mxu0 %v1446
      %1694 = vmatpush1.msra.mxu0 %v1445
      %1695 = vmatprep.subr.mxu0 %v1444
      %1696 = vmatpush1.msra.mxu0 %v1443
      %1697 = vmatprep.subr.mxu0 %v1442
      %1698 = vmatpush1.msra.mxu0 %v1441
      %1699 = vmatprep.subr.mxu0 %v1440
      %1700 = vmatpush1.msra.mxu0 %v1439
      %1701 = vmatprep.subr.mxu0 %v1438
      %1702 = vmatpush1.msra.mxu0 %v1437
      %1703 = vmatprep.subr.mxu0 %v1436
      %1704 = vmatpush1.msra.mxu0 %v1435
      %1705 = vmatprep.subr.mxu0 %v1434
      %1706 = vmatpush1.msra.mxu0 %v1433
      %1707 = vmatprep.subr.mxu0 %v1432
      %1708 = vmatpush1.msra.mxu0 %v1431
      %1709 = vmatprep.subr.mxu0 %v1430
      %1710 = vmatpush1.msra.mxu0 %v1429
      %1711 = vmatprep.subr.mxu0 %v1492
      %1712 = vmatpush2.msra.mxu0 %v1491
      %1713 = vmatprep.subr.mxu0 %v1490
      %1714 = vmatpush2.msra.mxu0 %v1489
      %1715 = vmatprep.subr.mxu0 %v1488
      %1716 = vmatpush2.msra.mxu0 %v1487
      %1717 = vmatprep.subr.mxu0 %v1486
      %1718 = vmatpush2.msra.mxu0 %v1485
      %1719 = vmatprep.subr.mxu0 %v1484
      %1720 = vmatpush2.msra.mxu0 %v1483
      %1721 = vmatprep.subr.mxu0 %v1482
      %1722 = vmatpush2.msra.mxu0 %v1481
      %1723 = vmatprep.subr.mxu0 %v1480
      %1724 = vmatpush2.msra.mxu0 %v1479
      %1725 = vmatprep.subr.mxu0 %v1478
      %1726 = vmatpush2.msra.mxu0 %v1477
      %1727 = vmatprep.subr.mxu0 %v1476
      %1728 = vmatpush2.msra.mxu0 %v1475
      %1729 = vmatprep.subr.mxu0 %v1474
      %1730 = vmatpush2.msra.mxu0 %v1473
      %1731 = vmatprep.subr.mxu0 %v1472
      %1732 = vmatpush2.msra.mxu0 %v1471
      %1733 = vmatprep.subr.mxu0 %v1470
      %1734 = vmatpush2.msra.mxu0 %v1469
      %1735 = vmatprep.subr.mxu0 %v1468
      %1736 = vmatpush2.msra.mxu0 %v1467
      %1737 = vmatprep.subr.mxu0 %v1466
      %1738 = vmatpush2.msra.mxu0 %v1465
      %1739 = vmatprep.subr.mxu0 %v1464
      %1740 = vmatpush2.msra.mxu0 %v1463
      %1741 = vmatprep.subr.mxu0 %v1462
      %1742 = vmatpush2.msra.mxu0 %v1461
      %1743 = vmatprep.mubr.f32.mxu0 %v1299
      %1744 = vmatmul.mubr.f32.gmra.mxu0 %v1298
      %v1745 = vpop.f32.mrf.mxu0
      %v1746 = vadd.f32 %v1675, %v1745
      %v1747 = vpop.f32.mrf.mxu0
      %v1748 = vadd.f32 %v1677, %v1747
      %1749 = vdwg.mxu0
      %1750 = vmatprep.subr.mxu0 %v1524
      %1751 = vmatpush1.msra.mxu0 %v1523
      %1752 = vmatprep.subr.mxu0 %v1522
      %1753 = vmatpush1.msra.mxu0 %v1521
      %1754 = vmatprep.subr.mxu0 %v1520
      %1755 = vmatpush1.msra.mxu0 %v1519
      %1756 = vmatprep.subr.mxu0 %v1518
      %1757 = vmatpush1.msra.mxu0 %v1517
      %1758 = vmatprep.subr.mxu0 %v1516
      %1759 = vmatpush1.msra.mxu0 %v1515
      %1760 = vmatprep.subr.mxu0 %v1514
      %1761 = vmatpush1.msra.mxu0 %v1513
      %1762 = vmatprep.subr.mxu0 %v1512
      %1763 = vmatpush1.msra.mxu0 %v1511
      %1764 = vmatprep.subr.mxu0 %v1510
      %1765 = vmatpush1.msra.mxu0 %v1509
      %1766 = vmatprep.subr.mxu0 %v1508
      %1767 = vmatpush1.msra.mxu0 %v1507
      %1768 = vmatprep.subr.mxu0 %v1506
      %1769 = vmatpush1.msra.mxu0 %v1505
      %1770 = vmatprep.subr.mxu0 %v1504
      %1771 = vmatpush1.msra.mxu0 %v1503
      %1772 = vmatprep.subr.mxu0 %v1502
      %1773 = vmatpush1.msra.mxu0 %v1501
      %1774 = vmatprep.subr.mxu0 %v1500
      %1775 = vmatpush1.msra.mxu0 %v1499
      %1776 = vmatprep.subr.mxu0 %v1498
      %1777 = vmatpush1.msra.mxu0 %v1497
      %1778 = vmatprep.subr.mxu0 %v1496
      %1779 = vmatpush1.msra.mxu0 %v1495
      %1780 = vmatprep.subr.mxu0 %v1494
      %1781 = vmatpush1.msra.mxu0 %v1493
      %1782 = vmatprep.subr.mxu0 0.0
      %1783 = vmatpush2.msra.mxu0 0.0
      %1784 = vmatprep.subr.mxu0 0.0
      %1785 = vmatpush2.msra.mxu0 0.0
      %1786 = vmatprep.subr.mxu0 0.0
      %1787 = vmatpush2.msra.mxu0 0.0
      %1788 = vmatprep.subr.mxu0 0.0
      %1789 = vmatpush2.msra.mxu0 0.0
      %1790 = vmatprep.subr.mxu0 0.0
      %1791 = vmatpush2.msra.mxu0 0.0
      %1792 = vmatprep.subr.mxu0 0.0
      %1793 = vmatpush2.msra.mxu0 0.0
      %1794 = vmatprep.subr.mxu0 0.0
      %1795 = vmatpush2.msra.mxu0 0.0
      %1796 = vmatprep.subr.mxu0 0.0
      %1797 = vmatpush2.msra.mxu0 0.0
      %1798 = vmatprep.subr.mxu0 0.0
      %1799 = vmatpush2.msra.mxu0 0.0
      %1800 = vmatprep.subr.mxu0 0.0
      %1801 = vmatpush2.msra.mxu0 0.0
      %1802 = vmatprep.subr.mxu0 0.0
      %1803 = vmatpush2.msra.mxu0 0.0
      %1804 = vmatprep.subr.mxu0 0.0
      %1805 = vmatpush2.msra.mxu0 0.0
      %1806 = vmatprep.subr.mxu0 0.0
      %1807 = vmatpush2.msra.mxu0 0.0
      %1808 = vmatprep.subr.mxu0 0.0
      %1809 = vmatpush2.msra.mxu0 0.0
      %1810 = vmatprep.subr.mxu0 0.0
      %1811 = vmatpush2.msra.mxu0 0.0
      %1812 = vmatprep.subr.mxu0 0.0
      %1813 = vmatpush2.msra.mxu0 0.0
      %1814 = vmatprep.mubr.f32.mxu0 0.0
      %1815 = vmatmul.mubr.f32.gmra.mxu0 %v1300
      %v1816 = vpop.f32.mrf.mxu0
      %v1817 = vadd.f32 %v1746, %v1816
      %v1818 = vpop.f32.mrf.mxu0
      %v1819 = vadd.f32 %v1748, %v1818
      %1820 = vdwg.mxu0
      %v1821 = vtanh.pop %v1817
      %v1822 = vtanh.pop %v1819
      %v1823 = vld [vmem:[%s11] sm:$0xff]
      %v1824 = vld [vmem:[%s11 + $0x8] sm:$0xff]
      %v1825 = vld [vmem:[%s11 + $0x10] sm:$0xff]
      %v1826 = vld [vmem:[%s11 + $0x18] sm:$0xff]
      %v1827 = vld [vmem:[%s11 + $0x20] sm:$0xff]
      %v1828 = vld [vmem:[%s11 + $0x28] sm:$0xff]
      %v1829 = vld [vmem:[%s11 + $0x30] sm:$0xff]
      %v1830 = vld [vmem:[%s11 + $0x38] sm:$0xff]
      %v1831 = vld [vmem:[%s11 + $0x40] sm:$0xff]
      %v1832 = vld [vmem:[%s11 + $0x48] sm:$0xff]
      %v1833 = vld [vmem:[%s11 + $0x50] sm:$0xff]
      %v1834 = vld [vmem:[%s11 + $0x58] sm:$0xff]
      %v1835 = vld [vmem:[%s11 + $0x60] sm:$0xff]
      %v1836 = vld [vmem:[%s11 + $0x68] sm:$0xff]
      %v1837 = vld [vmem:[%s11 + $0x70] sm:$0xff]
      %v1838 = vld [vmem:[%s11 + $0x78] sm:$0xff]
      %v1839 = vld [vmem:[%s11 + $0x80] sm:$0xff]
      %v1840 = vld [vmem:[%s11 + $0x88] sm:$0xff]
      %v1841 = vld [vmem:[%s11 + $0x90] sm:$0xff]
      %v1842 = vld [vmem:[%s11 + $0x98] sm:$0xff]
      %v1843 = vld [vmem:[%s11 + $0xa0] sm:$0xff]
      %v1844 = vld [vmem:[%s11 + $0xa8] sm:$0xff]
      %v1845 = vld [vmem:[%s11 + $0xb0] sm:$0xff]
      %v1846 = vld [vmem:[%s11 + $0xb8] sm:$0xff]
      %v1847 = vld [vmem:[%s11 + $0xc0] sm:$0xff]
      %v1848 = vld [vmem:[%s11 + $0xc8] sm:$0xff]
      %v1849 = vld [vmem:[%s11 + $0xd0] sm:$0xff]
      %v1850 = vld [vmem:[%s11 + $0xd8] sm:$0xff]
      %v1851 = vld [vmem:[%s11 + $0xe0] sm:$0xff]
      %v1852 = vld [vmem:[%s11 + $0xe8] sm:$0xff]
      %v1853 = vld [vmem:[%s11 + $0xf0] sm:$0xff]
      %v1854 = vld [vmem:[%s11 + $0xf8] sm:$0xff]
      %v1855 = vld [vmem:[%s11 + $0x100] sm:$0xff]
      %v1856 = vld [vmem:[%s11 + $0x108] sm:$0xff]
      %v1857 = vld [vmem:[%s11 + $0x110] sm:$0xff]
      %v1858 = vld [vmem:[%s11 + $0x118] sm:$0xff]
      %v1859 = vld [vmem:[%s11 + $0x120] sm:$0xff]
      %v1860 = vld [vmem:[%s11 + $0x128] sm:$0xff]
      %v1861 = vld [vmem:[%s11 + $0x130] sm:$0xff]
      %v1862 = vld [vmem:[%s11 + $0x138] sm:$0xff]
      %v1863 = vld [vmem:[%s11 + $0x140] sm:$0xff]
      %v1864 = vld [vmem:[%s11 + $0x148] sm:$0xff]
      %v1865 = vld [vmem:[%s11 + $0x150] sm:$0xff]
      %v1866 = vld [vmem:[%s11 + $0x158] sm:$0xff]
      %v1867 = vld [vmem:[%s11 + $0x160] sm:$0xff]
      %v1868 = vld [vmem:[%s11 + $0x168] sm:$0xff]
      %v1869 = vld [vmem:[%s11 + $0x170] sm:$0xff]
      %v1870 = vld [vmem:[%s11 + $0x178] sm:$0xff]
      %v1871 = vld [vmem:[%s11 + $0x180] sm:$0xff]
      %v1872 = vld [vmem:[%s11 + $0x188] sm:$0xff]
      %v1873 = vld [vmem:[%s11 + $0x190] sm:$0xff]
      %v1874 = vld [vmem:[%s11 + $0x198] sm:$0xff]
      %v1875 = vld [vmem:[%s11 + $0x1a0] sm:$0xff]
      %v1876 = vld [vmem:[%s11 + $0x1a8] sm:$0xff]
      %v1877 = vld [vmem:[%s11 + $0x1b0] sm:$0xff]
      %v1878 = vld [vmem:[%s11 + $0x1b8] sm:$0xff]
      %v1879 = vld [vmem:[%s11 + $0x1c0] sm:$0xff]
      %v1880 = vld [vmem:[%s11 + $0x1c8] sm:$0xff]
      %v1881 = vld [vmem:[%s11 + $0x1d0] sm:$0xff]
      %v1882 = vld [vmem:[%s11 + $0x1d8] sm:$0xff]
      %v1883 = vld [vmem:[%s11 + $0x1e0] sm:$0xff]
      %v1884 = vld [vmem:[%s11 + $0x1e8] sm:$0xff]
      %v1885 = vld [vmem:[%s11 + $0x1f0] sm:$0xff]
      %v1886 = vld [vmem:[%s11 + $0x1f8] sm:$0xff]
      %v1887 = vld [vmem:[%s13] sm:$0x3]
      %v1889 = vlaneseq
      %v1890 = vshrl.u32 %v1889, 7
      %v1891 = vsub.s32 0, %v1890
      %v1892 = vrot.slane %v1887, %v1891
      %v1893 = vlaneseq
      %v1894 = vshrl.u32 %v1893, 7
      %v1895 = vsub.s32 1, %v1894
      %v1896 = vrot.slane %v1887, %v1895
      %1899 = vmatprep.subr.mxu0 %v1854
      %1900 = vmatpush1.msra.mxu0 %v1853
      %1901 = vmatprep.subr.mxu0 %v1852
      %1902 = vmatpush1.msra.mxu0 %v1851
      %1903 = vmatprep.subr.mxu0 %v1850
      %1904 = vmatpush1.msra.mxu0 %v1849
      %1905 = vmatprep.subr.mxu0 %v1848
      %1906 = vmatpush1.msra.mxu0 %v1847
      %1907 = vmatprep.subr.mxu0 %v1846
      %1908 = vmatpush1.msra.mxu0 %v1845
      %1909 = vmatprep.subr.mxu0 %v1844
      %1910 = vmatpush1.msra.mxu0 %v1843
      %1911 = vmatprep.subr.mxu0 %v1842
      %1912 = vmatpush1.msra.mxu0 %v1841
      %1913 = vmatprep.subr.mxu0 %v1840
      %1914 = vmatpush1.msra.mxu0 %v1839
      %1915 = vmatprep.subr.mxu0 %v1838
      %1916 = vmatpush1.msra.mxu0 %v1837
      %1917 = vmatprep.subr.mxu0 %v1836
      %1918 = vmatpush1.msra.mxu0 %v1835
      %1919 = vmatprep.subr.mxu0 %v1834
      %1920 = vmatpush1.msra.mxu0 %v1833
      %1921 = vmatprep.subr.mxu0 %v1832
      %1922 = vmatpush1.msra.mxu0 %v1831
      %1923 = vmatprep.subr.mxu0 %v1830
      %1924 = vmatpush1.msra.mxu0 %v1829
      %1925 = vmatprep.subr.mxu0 %v1828
      %1926 = vmatpush1.msra.mxu0 %v1827
      %1927 = vmatprep.subr.mxu0 %v1826
      %1928 = vmatpush1.msra.mxu0 %v1825
      %1929 = vmatprep.subr.mxu0 %v1824
      %1930 = vmatpush1.msra.mxu0 %v1823
      %1931 = vmatprep.subr.mxu0 %v1886
      %1932 = vmatpush2.msra.mxu0 %v1885
      %1933 = vmatprep.subr.mxu0 %v1884
      %1934 = vmatpush2.msra.mxu0 %v1883
      %1935 = vmatprep.subr.mxu0 %v1882
      %1936 = vmatpush2.msra.mxu0 %v1881
      %1937 = vmatprep.subr.mxu0 %v1880
      %1938 = vmatpush2.msra.mxu0 %v1879
      %1939 = vmatprep.subr.mxu0 %v1878
      %1940 = vmatpush2.msra.mxu0 %v1877
      %1941 = vmatprep.subr.mxu0 %v1876
      %1942 = vmatpush2.msra.mxu0 %v1875
      %1943 = vmatprep.subr.mxu0 %v1874
      %1944 = vmatpush2.msra.mxu0 %v1873
      %1945 = vmatprep.subr.mxu0 %v1872
      %1946 = vmatpush2.msra.mxu0 %v1871
      %1947 = vmatprep.subr.mxu0 %v1870
      %1948 = vmatpush2.msra.mxu0 %v1869
      %1949 = vmatprep.subr.mxu0 %v1868
      %1950 = vmatpush2.msra.mxu0 %v1867
      %1951 = vmatprep.subr.mxu0 %v1866
      %1952 = vmatpush2.msra.mxu0 %v1865
      %1953 = vmatprep.subr.mxu0 %v1864
      %1954 = vmatpush2.msra.mxu0 %v1863
      %1955 = vmatprep.subr.mxu0 %v1862
      %1956 = vmatpush2.msra.mxu0 %v1861
      %1957 = vmatprep.subr.mxu0 %v1860
      %1958 = vmatpush2.msra.mxu0 %v1859
      %1959 = vmatprep.subr.mxu0 %v1858
      %1960 = vmatpush2.msra.mxu0 %v1857
      %1961 = vmatprep.subr.mxu0 %v1856
      %1962 = vmatpush2.msra.mxu0 %v1855
      %1963 = vmatprep.mubr.f32.mxu0 %v1822
      %1964 = vmatmul.mubr.f32.gmra.mxu0 %v1821
      %v1965 = vpop.f32.mrf.mxu0
      %v1966 = vadd.f32 %v1892, %v1965
      %v1967 = vpop.f32.mrf.mxu0
      %v1968 = vadd.f32 %v1896, %v1967
      %1969 = vdwg.mxu0
      %v1970 = vtanh.pop %v1966
      %v1971 = vtanh.pop %v1968
      %v1972 = vld [vmem:[%s15] sm:$0xff]
      %v1973 = vld [vmem:[%s15 + $0x8] sm:$0xff]
      %v1974 = vld [vmem:[%s15 + $0x10] sm:$0xff]
      %v1975 = vld [vmem:[%s15 + $0x18] sm:$0xff]
      %v1976 = vld [vmem:[%s15 + $0x20] sm:$0xff]
      %v1977 = vld [vmem:[%s15 + $0x28] sm:$0xff]
      %v1978 = vld [vmem:[%s15 + $0x30] sm:$0xff]
      %v1979 = vld [vmem:[%s15 + $0x38] sm:$0xff]
      %v1980 = vld [vmem:[%s15 + $0x40] sm:$0xff]
      %v1981 = vld [vmem:[%s15 + $0x48] sm:$0xff]
      %v1982 = vld [vmem:[%s15 + $0x50] sm:$0xff]
      %v1983 = vld [vmem:[%s15 + $0x58] sm:$0xff]
      %v1984 = vld [vmem:[%s15 + $0x60] sm:$0xff]
      %v1985 = vld [vmem:[%s15 + $0x68] sm:$0xff]
      %v1986 = vld [vmem:[%s15 + $0x70] sm:$0xff]
      %v1987 = vld [vmem:[%s15 + $0x78] sm:$0xff]
      %v1988 = vld [vmem:[%s15 + $0x80] sm:$0xff]
      %v1989 = vld [vmem:[%s15 + $0x88] sm:$0xff]
      %v1990 = vld [vmem:[%s15 + $0x90] sm:$0xff]
      %v1991 = vld [vmem:[%s15 + $0x98] sm:$0xff]
      %v1992 = vld [vmem:[%s15 + $0xa0] sm:$0xff]
      %v1993 = vld [vmem:[%s15 + $0xa8] sm:$0xff]
      %v1994 = vld [vmem:[%s15 + $0xb0] sm:$0xff]
      %v1995 = vld [vmem:[%s15 + $0xb8] sm:$0xff]
      %v1996 = vld [vmem:[%s15 + $0xc0] sm:$0xff]
      %v1997 = vld [vmem:[%s15 + $0xc8] sm:$0xff]
      %v1998 = vld [vmem:[%s15 + $0xd0] sm:$0xff]
      %v1999 = vld [vmem:[%s15 + $0xd8] sm:$0xff]
      %v2000 = vld [vmem:[%s15 + $0xe0] sm:$0xff]
      %v2001 = vld [vmem:[%s15 + $0xe8] sm:$0xff]
      %v2002 = vld [vmem:[%s15 + $0xf0] sm:$0xff]
      %v2003 = vld [vmem:[%s15 + $0xf8] sm:$0xff]
      %v2004 = vld [vmem:[%s15 + $0x100] sm:$0xff]
      %v2005 = vld [vmem:[%s15 + $0x108] sm:$0xff]
      %v2006 = vld [vmem:[%s15 + $0x110] sm:$0xff]
      %v2007 = vld [vmem:[%s15 + $0x118] sm:$0xff]
      %v2008 = vld [vmem:[%s15 + $0x120] sm:$0xff]
      %v2009 = vld [vmem:[%s15 + $0x128] sm:$0xff]
      %v2010 = vld [vmem:[%s15 + $0x130] sm:$0xff]
      %v2011 = vld [vmem:[%s15 + $0x138] sm:$0xff]
      %v2012 = vld [vmem:[%s15 + $0x140] sm:$0xff]
      %v2013 = vld [vmem:[%s15 + $0x148] sm:$0xff]
      %v2014 = vld [vmem:[%s15 + $0x150] sm:$0xff]
      %v2015 = vld [vmem:[%s15 + $0x158] sm:$0xff]
      %v2016 = vld [vmem:[%s15 + $0x160] sm:$0xff]
      %v2017 = vld [vmem:[%s15 + $0x168] sm:$0xff]
      %v2018 = vld [vmem:[%s15 + $0x170] sm:$0xff]
      %v2019 = vld [vmem:[%s15 + $0x178] sm:$0xff]
      %v2020 = vld [vmem:[%s15 + $0x180] sm:$0xff]
      %v2021 = vld [vmem:[%s15 + $0x188] sm:$0xff]
      %v2022 = vld [vmem:[%s15 + $0x190] sm:$0xff]
      %v2023 = vld [vmem:[%s15 + $0x198] sm:$0xff]
      %v2024 = vld [vmem:[%s15 + $0x1a0] sm:$0xff]
      %v2025 = vld [vmem:[%s15 + $0x1a8] sm:$0xff]
      %v2026 = vld [vmem:[%s15 + $0x1b0] sm:$0xff]
      %v2027 = vld [vmem:[%s15 + $0x1b8] sm:$0xff]
      %v2028 = vld [vmem:[%s15 + $0x1c0] sm:$0xff]
      %v2029 = vld [vmem:[%s15 + $0x1c8] sm:$0xff]
      %v2030 = vld [vmem:[%s15 + $0x1d0] sm:$0xff]
      %v2031 = vld [vmem:[%s15 + $0x1d8] sm:$0xff]
      %v2032 = vld [vmem:[%s15 + $0x1e0] sm:$0xff]
      %v2033 = vld [vmem:[%s15 + $0x1e8] sm:$0xff]
      %v2034 = vld [vmem:[%s15 + $0x1f0] sm:$0xff]
      %v2035 = vld [vmem:[%s15 + $0x1f8] sm:$0xff]
      %v2036 = vld [vmem:[%s17] sm:$0x3]
      %v2038 = vlaneseq
      %v2039 = vshrl.u32 %v2038, 7
      %v2040 = vsub.s32 0, %v2039
      %v2041 = vrot.slane %v2036, %v2040
      %v2042 = vlaneseq
      %v2043 = vshrl.u32 %v2042, 7
      %v2044 = vsub.s32 1, %v2043
      %v2045 = vrot.slane %v2036, %v2044
      %2048 = vmatprep.subr.mxu0 %v2003
      %2049 = vmatpush1.msra.mxu0 %v2002
      %2050 = vmatprep.subr.mxu0 %v2001
      %2051 = vmatpush1.msra.mxu0 %v2000
      %2052 = vmatprep.subr.mxu0 %v1999
      %2053 = vmatpush1.msra.mxu0 %v1998
      %2054 = vmatprep.subr.mxu0 %v1997
      %2055 = vmatpush1.msra.mxu0 %v1996
      %2056 = vmatprep.subr.mxu0 %v1995
      %2057 = vmatpush1.msra.mxu0 %v1994
      %2058 = vmatprep.subr.mxu0 %v1993
      %2059 = vmatpush1.msra.mxu0 %v1992
      %2060 = vmatprep.subr.mxu0 %v1991
      %2061 = vmatpush1.msra.mxu0 %v1990
      %2062 = vmatprep.subr.mxu0 %v1989
      %2063 = vmatpush1.msra.mxu0 %v1988
      %2064 = vmatprep.subr.mxu0 %v1987
      %2065 = vmatpush1.msra.mxu0 %v1986
      %2066 = vmatprep.subr.mxu0 %v1985
      %2067 = vmatpush1.msra.mxu0 %v1984
      %2068 = vmatprep.subr.mxu0 %v1983
      %2069 = vmatpush1.msra.mxu0 %v1982
      %2070 = vmatprep.subr.mxu0 %v1981
      %2071 = vmatpush1.msra.mxu0 %v1980
      %2072 = vmatprep.subr.mxu0 %v1979
      %2073 = vmatpush1.msra.mxu0 %v1978
      %2074 = vmatprep.subr.mxu0 %v1977
      %2075 = vmatpush1.msra.mxu0 %v1976
      %2076 = vmatprep.subr.mxu0 %v1975
      %2077 = vmatpush1.msra.mxu0 %v1974
      %2078 = vmatprep.subr.mxu0 %v1973
      %2079 = vmatpush1.msra.mxu0 %v1972
      %2080 = vmatprep.subr.mxu0 %v2035
      %2081 = vmatpush2.msra.mxu0 %v2034
      %2082 = vmatprep.subr.mxu0 %v2033
      %2083 = vmatpush2.msra.mxu0 %v2032
      %2084 = vmatprep.subr.mxu0 %v2031
      %2085 = vmatpush2.msra.mxu0 %v2030
      %2086 = vmatprep.subr.mxu0 %v2029
      %2087 = vmatpush2.msra.mxu0 %v2028
      %2088 = vmatprep.subr.mxu0 %v2027
      %2089 = vmatpush2.msra.mxu0 %v2026
      %2090 = vmatprep.subr.mxu0 %v2025
      %2091 = vmatpush2.msra.mxu0 %v2024
      %2092 = vmatprep.subr.mxu0 %v2023
      %2093 = vmatpush2.msra.mxu0 %v2022
      %2094 = vmatprep.subr.mxu0 %v2021
      %2095 = vmatpush2.msra.mxu0 %v2020
      %2096 = vmatprep.subr.mxu0 %v2019
      %2097 = vmatpush2.msra.mxu0 %v2018
      %2098 = vmatprep.subr.mxu0 %v2017
      %2099 = vmatpush2.msra.mxu0 %v2016
      %2100 = vmatprep.subr.mxu0 %v2015
      %2101 = vmatpush2.msra.mxu0 %v2014
      %2102 = vmatprep.subr.mxu0 %v2013
      %2103 = vmatpush2.msra.mxu0 %v2012
      %2104 = vmatprep.subr.mxu0 %v2011
      %2105 = vmatpush2.msra.mxu0 %v2010
      %2106 = vmatprep.subr.mxu0 %v2009
      %2107 = vmatpush2.msra.mxu0 %v2008
      %2108 = vmatprep.subr.mxu0 %v2007
      %2109 = vmatpush2.msra.mxu0 %v2006
      %2110 = vmatprep.subr.mxu0 %v2005
      %2111 = vmatpush2.msra.mxu0 %v2004
      %2112 = vmatprep.mubr.f32.mxu0 %v1971
      %2113 = vmatmul.mubr.f32.gmra.mxu0 %v1970
      %v2114 = vpop.f32.mrf.mxu0
      %v2115 = vadd.f32 %v2041, %v2114
      %v2116 = vpop.f32.mrf.mxu0
      %v2117 = vadd.f32 %v2045, %v2116
      %2118 = vdwg.mxu0
      %v2119 = vmul.f32 %v2117, 1.442695
      %v2120 = vpow.pop %v2119
      %v2121 = vld [vmem:[%s1221] sm:$0xff]
      %v2122 = vmul.f32 %v2121, %v2120
      %v2123 = vadd.f32 %v2115, %v2122
      %v2124 = vadd.f32 %v2123, 1e-06
      %v2125 = vld [vmem:[%s19] sm:$0xff]
      %v2126 = vld [vmem:[%s19 + $0x8] sm:$0xff]
      %v2127 = vld [vmem:[%s19 + $0x10] sm:$0xff]
      %v2128 = vld [vmem:[%s19 + $0x18] sm:$0xff]
      %v2129 = vld [vmem:[%s19 + $0x20] sm:$0xff]
      %v2130 = vld [vmem:[%s19 + $0x28] sm:$0xff]
      %v2131 = vld [vmem:[%s19 + $0x30] sm:$0xff]
      %v2132 = vld [vmem:[%s19 + $0x38] sm:$0xff]
      %v2133 = vld [vmem:[%s19 + $0x40] sm:$0xff]
      %v2134 = vld [vmem:[%s19 + $0x48] sm:$0xff]
      %v2135 = vld [vmem:[%s19 + $0x50] sm:$0xff]
      %v2136 = vld [vmem:[%s19 + $0x58] sm:$0xff]
      %v2137 = vld [vmem:[%s19 + $0x60] sm:$0xff]
      %v2138 = vld [vmem:[%s19 + $0x68] sm:$0xff]
      %v2139 = vld [vmem:[%s19 + $0x70] sm:$0xff]
      %v2140 = vld [vmem:[%s19 + $0x78] sm:$0xff]
      %v2141 = vld [vmem:[%s21] sm:$0x1]
      %v2143 = vlaneseq
      %v2144 = vshrl.u32 %v2143, 7
      %v2145 = vsub.s32 0, %v2144
      %v2146 = vrot.slane %v2141, %v2145
      %2148 = vmatprep.subr.mxu0 0.0
      %2149 = vmatpush1.msra.mxu0 %v2140
      %2150 = vmatprep.subr.mxu0 0.0
      %2151 = vmatpush1.msra.mxu0 %v2139
      %2152 = vmatprep.subr.mxu0 0.0
      %2153 = vmatpush1.msra.mxu0 %v2138
      %2154 = vmatprep.subr.mxu0 0.0
      %2155 = vmatpush1.msra.mxu0 %v2137
      %2156 = vmatprep.subr.mxu0 0.0
      %2157 = vmatpush1.msra.mxu0 %v2136
      %2158 = vmatprep.subr.mxu0 0.0
      %2159 = vmatpush1.msra.mxu0 %v2135
      %2160 = vmatprep.subr.mxu0 0.0
      %2161 = vmatpush1.msra.mxu0 %v2134
      %2162 = vmatprep.subr.mxu0 0.0
      %2163 = vmatpush1.msra.mxu0 %v2133
      %2164 = vmatprep.subr.mxu0 0.0
      %2165 = vmatpush1.msra.mxu0 %v2132
      %2166 = vmatprep.subr.mxu0 0.0
      %2167 = vmatpush1.msra.mxu0 %v2131
      %2168 = vmatprep.subr.mxu0 0.0
      %2169 = vmatpush1.msra.mxu0 %v2130
      %2170 = vmatprep.subr.mxu0 0.0
      %2171 = vmatpush1.msra.mxu0 %v2129
      %2172 = vmatprep.subr.mxu0 0.0
      %2173 = vmatpush1.msra.mxu0 %v2128
      %2174 = vmatprep.subr.mxu0 0.0
      %2175 = vmatpush1.msra.mxu0 %v2127
      %2176 = vmatprep.subr.mxu0 0.0
      %2177 = vmatpush1.msra.mxu0 %v2126
      %2178 = vmatprep.subr.mxu0 0.0
      %2179 = vmatpush1.msra.mxu0 %v2125
      %2180 = vmatprep.subr.mxu0 0.0
      %2181 = vmatpush2.msra.mxu0 0.0
      %2182 = vmatprep.subr.mxu0 0.0
      %2183 = vmatpush2.msra.mxu0 0.0
      %2184 = vmatprep.subr.mxu0 0.0
      %2185 = vmatpush2.msra.mxu0 0.0
      %2186 = vmatprep.subr.mxu0 0.0
      %2187 = vmatpush2.msra.mxu0 0.0
      %2188 = vmatprep.subr.mxu0 0.0
      %2189 = vmatpush2.msra.mxu0 0.0
      %2190 = vmatprep.subr.mxu0 0.0
      %2191 = vmatpush2.msra.mxu0 0.0
      %2192 = vmatprep.subr.mxu0 0.0
      %2193 = vmatpush2.msra.mxu0 0.0
      %2194 = vmatprep.subr.mxu0 0.0
      %2195 = vmatpush2.msra.mxu0 0.0
      %2196 = vmatprep.subr.mxu0 0.0
      %2197 = vmatpush2.msra.mxu0 0.0
      %2198 = vmatprep.subr.mxu0 0.0
      %2199 = vmatpush2.msra.mxu0 0.0
      %2200 = vmatprep.subr.mxu0 0.0
      %2201 = vmatpush2.msra.mxu0 0.0
      %2202 = vmatprep.subr.mxu0 0.0
      %2203 = vmatpush2.msra.mxu0 0.0
      %2204 = vmatprep.subr.mxu0 0.0
      %2205 = vmatpush2.msra.mxu0 0.0
      %2206 = vmatprep.subr.mxu0 0.0
      %2207 = vmatpush2.msra.mxu0 0.0
      %2208 = vmatprep.subr.mxu0 0.0
      %2209 = vmatpush2.msra.mxu0 0.0
      %2210 = vmatprep.subr.mxu0 0.0
      %2211 = vmatpush2.msra.mxu0 0.0
      %2212 = vmatprep.mubr.f32.mxu0 0.0
      %2213 = vmatmul.mubr.f32.gmra.mxu0 %v2124
      %v2214 = vpop.f32.mrf.mxu0
      %v2215 = vadd.f32 %v2146, %v2214
      %v2216 = vpop.f32.mrf.mxu0
      %2217 = vdwg.mxu0
      %v2218 = vtanh.pop %v2215
      %v2219 = vld [vmem:[%s23] sm:$0xff]
      %v2220 = vld [vmem:[%s23 + $0x8] sm:$0xff]
      %v2221 = vld [vmem:[%s23 + $0x10] sm:$0xff]
      %v2222 = vld [vmem:[%s23 + $0x18] sm:$0xff]
      %v2223 = vld [vmem:[%s23 + $0x20] sm:$0xff]
      %v2224 = vld [vmem:[%s23 + $0x28] sm:$0xff]
      %v2225 = vld [vmem:[%s23 + $0x30] sm:$0xff]
      %v2226 = vld [vmem:[%s23 + $0x38] sm:$0xff]
      %v2227 = vld [vmem:[%s23 + $0x40] sm:$0xff]
      %v2228 = vld [vmem:[%s23 + $0x48] sm:$0xff]
      %v2229 = vld [vmem:[%s23 + $0x50] sm:$0xff]
      %v2230 = vld [vmem:[%s23 + $0x58] sm:$0xff]
      %v2231 = vld [vmem:[%s23 + $0x60] sm:$0xff]
      %v2232 = vld [vmem:[%s23 + $0x68] sm:$0xff]
      %v2233 = vld [vmem:[%s23 + $0x70] sm:$0xff]
      %v2234 = vld [vmem:[%s23 + $0x78] sm:$0xff]
      %v2235 = vld [vmem:[%s25] sm:$0x1]
      %v2237 = vlaneseq
      %v2238 = vshrl.u32 %v2237, 7
      %v2239 = vsub.s32 0, %v2238
      %v2240 = vrot.slane %v2235, %v2239
      %2242 = vmatprep.subr.mxu0 0.0
      %2243 = vmatpush1.msra.mxu0 %v2234
      %2244 = vmatprep.subr.mxu0 0.0
      %2245 = vmatpush1.msra.mxu0 %v2233
      %2246 = vmatprep.subr.mxu0 0.0
      %2247 = vmatpush1.msra.mxu0 %v2232
      %2248 = vmatprep.subr.mxu0 0.0
      %2249 = vmatpush1.msra.mxu0 %v2231
      %2250 = vmatprep.subr.mxu0 0.0
      %2251 = vmatpush1.msra.mxu0 %v2230
      %2252 = vmatprep.subr.mxu0 0.0
      %2253 = vmatpush1.msra.mxu0 %v2229
      %2254 = vmatprep.subr.mxu0 0.0
      %2255 = vmatpush1.msra.mxu0 %v2228
      %2256 = vmatprep.subr.mxu0 0.0
      %2257 = vmatpush1.msra.mxu0 %v2227
      %2258 = vmatprep.subr.mxu0 0.0
      %2259 = vmatpush1.msra.mxu0 %v2226
      %2260 = vmatprep.subr.mxu0 0.0
      %2261 = vmatpush1.msra.mxu0 %v2225
      %2262 = vmatprep.subr.mxu0 0.0
      %2263 = vmatpush1.msra.mxu0 %v2224
      %2264 = vmatprep.subr.mxu0 0.0
      %2265 = vmatpush1.msra.mxu0 %v2223
      %2266 = vmatprep.subr.mxu0 0.0
      %2267 = vmatpush1.msra.mxu0 %v2222
      %2268 = vmatprep.subr.mxu0 0.0
      %2269 = vmatpush1.msra.mxu0 %v2221
      %2270 = vmatprep.subr.mxu0 0.0
      %2271 = vmatpush1.msra.mxu0 %v2220
      %2272 = vmatprep.subr.mxu0 0.0
      %2273 = vmatpush1.msra.mxu0 %v2219
      %2274 = vmatprep.subr.mxu0 0.0
      %2275 = vmatpush2.msra.mxu0 0.0
      %2276 = vmatprep.subr.mxu0 0.0
      %2277 = vmatpush2.msra.mxu0 0.0
      %2278 = vmatprep.subr.mxu0 0.0
      %2279 = vmatpush2.msra.mxu0 0.0
      %2280 = vmatprep.subr.mxu0 0.0
      %2281 = vmatpush2.msra.mxu0 0.0
      %2282 = vmatprep.subr.mxu0 0.0
      %2283 = vmatpush2.msra.mxu0 0.0
      %2284 = vmatprep.subr.mxu0 0.0
      %2285 = vmatpush2.msra.mxu0 0.0
      %2286 = vmatprep.subr.mxu0 0.0
      %2287 = vmatpush2.msra.mxu0 0.0
      %2288 = vmatprep.subr.mxu0 0.0
      %2289 = vmatpush2.msra.mxu0 0.0
      %2290 = vmatprep.subr.mxu0 0.0
      %2291 = vmatpush2.msra.mxu0 0.0
      %2292 = vmatprep.subr.mxu0 0.0
      %2293 = vmatpush2.msra.mxu0 0.0
      %2294 = vmatprep.subr.mxu0 0.0
      %2295 = vmatpush2.msra.mxu0 0.0
      %2296 = vmatprep.subr.mxu0 0.0
      %2297 = vmatpush2.msra.mxu0 0.0
      %2298 = vmatprep.subr.mxu0 0.0
      %2299 = vmatpush2.msra.mxu0 0.0
      %2300 = vmatprep.subr.mxu0 0.0
      %2301 = vmatpush2.msra.mxu0 0.0
      %2302 = vmatprep.subr.mxu0 0.0
      %2303 = vmatpush2.msra.mxu0 0.0
      %2304 = vmatprep.subr.mxu0 0.0
      %2305 = vmatpush2.msra.mxu0 0.0
      %2306 = vmatprep.mubr.f32.mxu0 0.0
      %2307 = vmatmul.mubr.f32.gmra.mxu0 %v2218
      %v2308 = vpop.f32.mrf.mxu0
      %v2309 = vadd.f32 %v2240, %v2308
      %v2310 = vpop.f32.mrf.mxu0
      %2311 = vdwg.mxu0
      %v2312 = vtanh.pop %v2309
      %v2313 = vld [vmem:[%s27] sm:$0xff]
      %v2314 = vld [vmem:[%s27 + $0x8] sm:$0xff]
      %v2315 = vld [vmem:[%s27 + $0x10] sm:$0xff]
      %v2316 = vld [vmem:[%s27 + $0x18] sm:$0xff]
      %v2317 = vld [vmem:[%s27 + $0x20] sm:$0xff]
      %v2318 = vld [vmem:[%s27 + $0x28] sm:$0xff]
      %v2319 = vld [vmem:[%s27 + $0x30] sm:$0xff]
      %v2320 = vld [vmem:[%s27 + $0x38] sm:$0xff]
      %v2321 = vld [vmem:[%s27 + $0x40] sm:$0xff]
      %v2322 = vld [vmem:[%s27 + $0x48] sm:$0xff]
      %v2323 = vld [vmem:[%s27 + $0x50] sm:$0xff]
      %v2324 = vld [vmem:[%s27 + $0x58] sm:$0xff]
      %v2325 = vld [vmem:[%s27 + $0x60] sm:$0xff]
      %v2326 = vld [vmem:[%s27 + $0x68] sm:$0xff]
      %v2327 = vld [vmem:[%s27 + $0x70] sm:$0xff]
      %v2328 = vld [vmem:[%s27 + $0x78] sm:$0xff]
      %v2329 = vld [vmem:[%s27 + $0x80] sm:$0xff]
      %v2330 = vld [vmem:[%s27 + $0x88] sm:$0xff]
      %v2331 = vld [vmem:[%s27 + $0x90] sm:$0xff]
      %v2332 = vld [vmem:[%s27 + $0x98] sm:$0xff]
      %v2333 = vld [vmem:[%s27 + $0xa0] sm:$0xff]
      %v2334 = vld [vmem:[%s27 + $0xa8] sm:$0xff]
      %v2335 = vld [vmem:[%s27 + $0xb0] sm:$0xff]
      %v2336 = vld [vmem:[%s27 + $0xb8] sm:$0xff]
      %v2337 = vld [vmem:[%s27 + $0xc0] sm:$0xff]
      %v2338 = vld [vmem:[%s27 + $0xc8] sm:$0xff]
      %v2339 = vld [vmem:[%s27 + $0xd0] sm:$0xff]
      %v2340 = vld [vmem:[%s27 + $0xd8] sm:$0xff]
      %v2341 = vld [vmem:[%s27 + $0xe0] sm:$0xff]
      %v2342 = vld [vmem:[%s27 + $0xe8] sm:$0xff]
      %v2343 = vld [vmem:[%s27 + $0xf0] sm:$0xff]
      %v2344 = vld [vmem:[%s27 + $0xf8] sm:$0xff]
      %v2345 = vld [vmem:[%s29] sm:$0x3]
      %v2347 = vlaneseq
      %v2348 = vshrl.u32 %v2347, 7
      %v2349 = vsub.s32 0, %v2348
      %v2350 = vrot.slane %v2345, %v2349
      %v2351 = vlaneseq
      %v2352 = vshrl.u32 %v2351, 7
      %v2353 = vsub.s32 1, %v2352
      %v2354 = vrot.slane %v2345, %v2353
      %2357 = vmatprep.subr.mxu0 %v2344
      %2358 = vmatpush1.msra.mxu0 %v2343
      %2359 = vmatprep.subr.mxu0 %v2342
      %2360 = vmatpush1.msra.mxu0 %v2341
      %2361 = vmatprep.subr.mxu0 %v2340
      %2362 = vmatpush1.msra.mxu0 %v2339
      %2363 = vmatprep.subr.mxu0 %v2338
      %2364 = vmatpush1.msra.mxu0 %v2337
      %2365 = vmatprep.subr.mxu0 %v2336
      %2366 = vmatpush1.msra.mxu0 %v2335
      %2367 = vmatprep.subr.mxu0 %v2334
      %2368 = vmatpush1.msra.mxu0 %v2333
      %2369 = vmatprep.subr.mxu0 %v2332
      %2370 = vmatpush1.msra.mxu0 %v2331
      %2371 = vmatprep.subr.mxu0 %v2330
      %2372 = vmatpush1.msra.mxu0 %v2329
      %2373 = vmatprep.subr.mxu0 %v2328
      %2374 = vmatpush1.msra.mxu0 %v2327
      %2375 = vmatprep.subr.mxu0 %v2326
      %2376 = vmatpush1.msra.mxu0 %v2325
      %2377 = vmatprep.subr.mxu0 %v2324
      %2378 = vmatpush1.msra.mxu0 %v2323
      %2379 = vmatprep.subr.mxu0 %v2322
      %2380 = vmatpush1.msra.mxu0 %v2321
      %2381 = vmatprep.subr.mxu0 %v2320
      %2382 = vmatpush1.msra.mxu0 %v2319
      %2383 = vmatprep.subr.mxu0 %v2318
      %2384 = vmatpush1.msra.mxu0 %v2317
      %2385 = vmatprep.subr.mxu0 %v2316
      %2386 = vmatpush1.msra.mxu0 %v2315
      %2387 = vmatprep.subr.mxu0 %v2314
      %2388 = vmatpush1.msra.mxu0 %v2313
      %2389 = vmatprep.subr.mxu0 0.0
      %2390 = vmatpush2.msra.mxu0 0.0
      %2391 = vmatprep.subr.mxu0 0.0
      %2392 = vmatpush2.msra.mxu0 0.0
      %2393 = vmatprep.subr.mxu0 0.0
      %2394 = vmatpush2.msra.mxu0 0.0
      %2395 = vmatprep.subr.mxu0 0.0
      %2396 = vmatpush2.msra.mxu0 0.0
      %2397 = vmatprep.subr.mxu0 0.0
      %2398 = vmatpush2.msra.mxu0 0.0
      %2399 = vmatprep.subr.mxu0 0.0
      %2400 = vmatpush2.msra.mxu0 0.0
      %2401 = vmatprep.subr.mxu0 0.0
      %2402 = vmatpush2.msra.mxu0 0.0
      %2403 = vmatprep.subr.mxu0 0.0
      %2404 = vmatpush2.msra.mxu0 0.0
      %2405 = vmatprep.subr.mxu0 0.0
      %2406 = vmatpush2.msra.mxu0 0.0
      %2407 = vmatprep.subr.mxu0 0.0
      %2408 = vmatpush2.msra.mxu0 0.0
      %2409 = vmatprep.subr.mxu0 0.0
      %2410 = vmatpush2.msra.mxu0 0.0
      %2411 = vmatprep.subr.mxu0 0.0
      %2412 = vmatpush2.msra.mxu0 0.0
      %2413 = vmatprep.subr.mxu0 0.0
      %2414 = vmatpush2.msra.mxu0 0.0
      %2415 = vmatprep.subr.mxu0 0.0
      %2416 = vmatpush2.msra.mxu0 0.0
      %2417 = vmatprep.subr.mxu0 0.0
      %2418 = vmatpush2.msra.mxu0 0.0
      %2419 = vmatprep.subr.mxu0 0.0
      %2420 = vmatpush2.msra.mxu0 0.0
      %2421 = vmatprep.mubr.f32.mxu0 0.0
      %2422 = vmatmul.mubr.f32.gmra.mxu0 %v2312
      %v2423 = vpop.f32.mrf.mxu0
      %v2424 = vadd.f32 %v2350, %v2423
      %v2425 = vpop.f32.mrf.mxu0
      %v2426 = vadd.f32 %v2354, %v2425
      %2427 = vdwg.mxu0
      %v2428 = vmul.f32 %v2426, 1.442695
      %v2429 = vpow.pop %v2428
      %v2430 = vld [vmem:[%s1228] sm:$0xff]
      %v2431 = vmul.f32 %v2430, %v2429
      %v2432 = vadd.f32 %v2424, %v2431
      %v2433 = vadd.f32 %v2432, 1e-06
      %v2434 = vld [vmem:[%s31] sm:$0xff]
      %v2435 = vld [vmem:[%s31 + $0x8] sm:$0xff]
      %v2436 = vld [vmem:[%s31 + $0x10] sm:$0xff]
      %v2437 = vld [vmem:[%s31 + $0x18] sm:$0xff]
      %v2438 = vld [vmem:[%s31 + $0x20] sm:$0xff]
      %v2439 = vld [vmem:[%s31 + $0x28] sm:$0xff]
      %v2440 = vld [vmem:[%s31 + $0x30] sm:$0xff]
      %v2441 = vld [vmem:[%s31 + $0x38] sm:$0xff]
      %v2442 = vld [vmem:[%s31 + $0x40] sm:$0xff]
      %v2443 = vld [vmem:[%s31 + $0x48] sm:$0xff]
      %v2444 = vld [vmem:[%s31 + $0x50] sm:$0xff]
      %v2445 = vld [vmem:[%s31 + $0x58] sm:$0xff]
      %v2446 = vld [vmem:[%s31 + $0x60] sm:$0xff]
      %v2447 = vld [vmem:[%s31 + $0x68] sm:$0xff]
      %v2448 = vld [vmem:[%s31 + $0x70] sm:$0xff]
      %v2449 = vld [vmem:[%s31 + $0x78] sm:$0xff]
      %v2450 = vld [vmem:[%s33] sm:$0x1]
      %v2452 = vlaneseq
      %v2453 = vshrl.u32 %v2452, 7
      %v2454 = vsub.s32 0, %v2453
      %v2455 = vrot.slane %v2450, %v2454
      %2457 = vmatprep.subr.mxu0 0.0
      %2458 = vmatpush1.msra.mxu0 %v2449
      %2459 = vmatprep.subr.mxu0 0.0
      %2460 = vmatpush1.msra.mxu0 %v2448
      %2461 = vmatprep.subr.mxu0 0.0
      %2462 = vmatpush1.msra.mxu0 %v2447
      %2463 = vmatprep.subr.mxu0 0.0
      %2464 = vmatpush1.msra.mxu0 %v2446
      %2465 = vmatprep.subr.mxu0 0.0
      %2466 = vmatpush1.msra.mxu0 %v2445
      %2467 = vmatprep.subr.mxu0 0.0
      %2468 = vmatpush1.msra.mxu0 %v2444
      %2469 = vmatprep.subr.mxu0 0.0
      %2470 = vmatpush1.msra.mxu0 %v2443
      %2471 = vmatprep.subr.mxu0 0.0
      %2472 = vmatpush1.msra.mxu0 %v2442
      %2473 = vmatprep.subr.mxu0 0.0
      %2474 = vmatpush1.msra.mxu0 %v2441
      %2475 = vmatprep.subr.mxu0 0.0
      %2476 = vmatpush1.msra.mxu0 %v2440
      %2477 = vmatprep.subr.mxu0 0.0
      %2478 = vmatpush1.msra.mxu0 %v2439
      %2479 = vmatprep.subr.mxu0 0.0
      %2480 = vmatpush1.msra.mxu0 %v2438
      %2481 = vmatprep.subr.mxu0 0.0
      %2482 = vmatpush1.msra.mxu0 %v2437
      %2483 = vmatprep.subr.mxu0 0.0
      %2484 = vmatpush1.msra.mxu0 %v2436
      %2485 = vmatprep.subr.mxu0 0.0
      %2486 = vmatpush1.msra.mxu0 %v2435
      %2487 = vmatprep.subr.mxu0 0.0
      %2488 = vmatpush1.msra.mxu0 %v2434
      %2489 = vmatprep.subr.mxu0 0.0
      %2490 = vmatpush2.msra.mxu0 0.0
      %2491 = vmatprep.subr.mxu0 0.0
      %2492 = vmatpush2.msra.mxu0 0.0
      %2493 = vmatprep.subr.mxu0 0.0
      %2494 = vmatpush2.msra.mxu0 0.0
      %2495 = vmatprep.subr.mxu0 0.0
      %2496 = vmatpush2.msra.mxu0 0.0
      %2497 = vmatprep.subr.mxu0 0.0
      %2498 = vmatpush2.msra.mxu0 0.0
      %2499 = vmatprep.subr.mxu0 0.0
      %2500 = vmatpush2.msra.mxu0 0.0
      %2501 = vmatprep.subr.mxu0 0.0
      %2502 = vmatpush2.msra.mxu0 0.0
      %2503 = vmatprep.subr.mxu0 0.0
      %2504 = vmatpush2.msra.mxu0 0.0
      %2505 = vmatprep.subr.mxu0 0.0
      %2506 = vmatpush2.msra.mxu0 0.0
      %2507 = vmatprep.subr.mxu0 0.0
      %2508 = vmatpush2.msra.mxu0 0.0
      %2509 = vmatprep.subr.mxu0 0.0
      %2510 = vmatpush2.msra.mxu0 0.0
      %2511 = vmatprep.subr.mxu0 0.0
      %2512 = vmatpush2.msra.mxu0 0.0
      %2513 = vmatprep.subr.mxu0 0.0
      %2514 = vmatpush2.msra.mxu0 0.0
      %2515 = vmatprep.subr.mxu0 0.0
      %2516 = vmatpush2.msra.mxu0 0.0
      %2517 = vmatprep.subr.mxu0 0.0
      %2518 = vmatpush2.msra.mxu0 0.0
      %2519 = vmatprep.subr.mxu0 0.0
      %2520 = vmatpush2.msra.mxu0 0.0
      %2521 = vmatprep.mubr.f32.mxu0 0.0
      %2522 = vmatmul.mubr.f32.gmra.mxu0 %v2433
      %v2523 = vpop.f32.mrf.mxu0
      %v2524 = vadd.f32 %v2455, %v2523
      %v2525 = vpop.f32.mrf.mxu0
      %2526 = vdwg.mxu0
      %v2527 = vtanh.pop %v2524
      %v2528 = vld [vmem:[%s35] sm:$0xff]
      %v2529 = vld [vmem:[%s35 + $0x8] sm:$0xff]
      %v2530 = vld [vmem:[%s35 + $0x10] sm:$0xff]
      %v2531 = vld [vmem:[%s35 + $0x18] sm:$0xff]
      %v2532 = vld [vmem:[%s35 + $0x20] sm:$0xff]
      %v2533 = vld [vmem:[%s35 + $0x28] sm:$0xff]
      %v2534 = vld [vmem:[%s35 + $0x30] sm:$0xff]
      %v2535 = vld [vmem:[%s35 + $0x38] sm:$0xff]
      %v2536 = vld [vmem:[%s35 + $0x40] sm:$0xff]
      %v2537 = vld [vmem:[%s35 + $0x48] sm:$0xff]
      %v2538 = vld [vmem:[%s35 + $0x50] sm:$0xff]
      %v2539 = vld [vmem:[%s35 + $0x58] sm:$0xff]
      %v2540 = vld [vmem:[%s35 + $0x60] sm:$0xff]
      %v2541 = vld [vmem:[%s35 + $0x68] sm:$0xff]
      %v2542 = vld [vmem:[%s35 + $0x70] sm:$0xff]
      %v2543 = vld [vmem:[%s35 + $0x78] sm:$0xff]
      %v2544 = vld [vmem:[%s37] sm:$0x1]
      %v2546 = vlaneseq
      %v2547 = vshrl.u32 %v2546, 7
      %v2548 = vsub.s32 0, %v2547
      %v2549 = vrot.slane %v2544, %v2548
      %2551 = vmatprep.subr.mxu0 0.0
      %2552 = vmatpush1.msra.mxu0 %v2543
      %2553 = vmatprep.subr.mxu0 0.0
      %2554 = vmatpush1.msra.mxu0 %v2542
      %2555 = vmatprep.subr.mxu0 0.0
      %2556 = vmatpush1.msra.mxu0 %v2541
      %2557 = vmatprep.subr.mxu0 0.0
      %2558 = vmatpush1.msra.mxu0 %v2540
      %2559 = vmatprep.subr.mxu0 0.0
      %2560 = vmatpush1.msra.mxu0 %v2539
      %2561 = vmatprep.subr.mxu0 0.0
      %2562 = vmatpush1.msra.mxu0 %v2538
      %2563 = vmatprep.subr.mxu0 0.0
      %2564 = vmatpush1.msra.mxu0 %v2537
      %2565 = vmatprep.subr.mxu0 0.0
      %2566 = vmatpush1.msra.mxu0 %v2536
      %2567 = vmatprep.subr.mxu0 0.0
      %2568 = vmatpush1.msra.mxu0 %v2535
      %2569 = vmatprep.subr.mxu0 0.0
      %2570 = vmatpush1.msra.mxu0 %v2534
      %2571 = vmatprep.subr.mxu0 0.0
      %2572 = vmatpush1.msra.mxu0 %v2533
      %2573 = vmatprep.subr.mxu0 0.0
      %2574 = vmatpush1.msra.mxu0 %v2532
      %2575 = vmatprep.subr.mxu0 0.0
      %2576 = vmatpush1.msra.mxu0 %v2531
      %2577 = vmatprep.subr.mxu0 0.0
      %2578 = vmatpush1.msra.mxu0 %v2530
      %2579 = vmatprep.subr.mxu0 0.0
      %2580 = vmatpush1.msra.mxu0 %v2529
      %2581 = vmatprep.subr.mxu0 0.0
      %2582 = vmatpush1.msra.mxu0 %v2528
      %2583 = vmatprep.subr.mxu0 0.0
      %2584 = vmatpush2.msra.mxu0 0.0
      %2585 = vmatprep.subr.mxu0 0.0
      %2586 = vmatpush2.msra.mxu0 0.0
      %2587 = vmatprep.subr.mxu0 0.0
      %2588 = vmatpush2.msra.mxu0 0.0
      %2589 = vmatprep.subr.mxu0 0.0
      %2590 = vmatpush2.msra.mxu0 0.0
      %2591 = vmatprep.subr.mxu0 0.0
      %2592 = vmatpush2.msra.mxu0 0.0
      %2593 = vmatprep.subr.mxu0 0.0
      %2594 = vmatpush2.msra.mxu0 0.0
      %2595 = vmatprep.subr.mxu0 0.0
      %2596 = vmatpush2.msra.mxu0 0.0
      %2597 = vmatprep.subr.mxu0 0.0
      %2598 = vmatpush2.msra.mxu0 0.0
      %2599 = vmatprep.subr.mxu0 0.0
      %2600 = vmatpush2.msra.mxu0 0.0
      %2601 = vmatprep.subr.mxu0 0.0
      %2602 = vmatpush2.msra.mxu0 0.0
      %2603 = vmatprep.subr.mxu0 0.0
      %2604 = vmatpush2.msra.mxu0 0.0
      %2605 = vmatprep.subr.mxu0 0.0
      %2606 = vmatpush2.msra.mxu0 0.0
      %2607 = vmatprep.subr.mxu0 0.0
      %2608 = vmatpush2.msra.mxu0 0.0
      %2609 = vmatprep.subr.mxu0 0.0
      %2610 = vmatpush2.msra.mxu0 0.0
      %2611 = vmatprep.subr.mxu0 0.0
      %2612 = vmatpush2.msra.mxu0 0.0
      %2613 = vmatprep.subr.mxu0 0.0
      %2614 = vmatpush2.msra.mxu0 0.0
      %2615 = vmatprep.mubr.f32.mxu0 0.0
      %2616 = vmatmul.mubr.f32.gmra.mxu0 %v2527
      %v2617 = vpop.f32.mrf.mxu0
      %v2618 = vadd.f32 %v2549, %v2617
      %v2619 = vpop.f32.mrf.mxu0
      %2620 = vdwg.mxu0
      %v2621 = vtanh.pop %v2618
      %v2622 = vld [vmem:[%s39] sm:$0xff]
      %v2623 = vld [vmem:[%s39 + $0x8] sm:$0xff]
      %v2624 = vld [vmem:[%s39 + $0x10] sm:$0xff]
      %v2625 = vld [vmem:[%s39 + $0x18] sm:$0xff]
      %v2626 = vld [vmem:[%s39 + $0x20] sm:$0xff]
      %v2627 = vld [vmem:[%s39 + $0x28] sm:$0xff]
      %v2628 = vld [vmem:[%s39 + $0x30] sm:$0xff]
      %v2629 = vld [vmem:[%s39 + $0x38] sm:$0xff]
      %v2630 = vld [vmem:[%s39 + $0x40] sm:$0xff]
      %v2631 = vld [vmem:[%s39 + $0x48] sm:$0xff]
      %v2632 = vld [vmem:[%s39 + $0x50] sm:$0xff]
      %v2633 = vld [vmem:[%s39 + $0x58] sm:$0xff]
      %v2634 = vld [vmem:[%s39 + $0x60] sm:$0xff]
      %v2635 = vld [vmem:[%s39 + $0x68] sm:$0xff]
      %v2636 = vld [vmem:[%s39 + $0x70] sm:$0xff]
      %v2637 = vld [vmem:[%s39 + $0x78] sm:$0xff]
      %v2638 = vld [vmem:[%s39 + $0x80] sm:$0xff]
      %v2639 = vld [vmem:[%s39 + $0x88] sm:$0xff]
      %v2640 = vld [vmem:[%s39 + $0x90] sm:$0xff]
      %v2641 = vld [vmem:[%s39 + $0x98] sm:$0xff]
      %v2642 = vld [vmem:[%s39 + $0xa0] sm:$0xff]
      %v2643 = vld [vmem:[%s39 + $0xa8] sm:$0xff]
      %v2644 = vld [vmem:[%s39 + $0xb0] sm:$0xff]
      %v2645 = vld [vmem:[%s39 + $0xb8] sm:$0xff]
      %v2646 = vld [vmem:[%s39 + $0xc0] sm:$0xff]
      %v2647 = vld [vmem:[%s39 + $0xc8] sm:$0xff]
      %v2648 = vld [vmem:[%s39 + $0xd0] sm:$0xff]
      %v2649 = vld [vmem:[%s39 + $0xd8] sm:$0xff]
      %v2650 = vld [vmem:[%s39 + $0xe0] sm:$0xff]
      %v2651 = vld [vmem:[%s39 + $0xe8] sm:$0xff]
      %v2652 = vld [vmem:[%s39 + $0xf0] sm:$0xff]
      %v2653 = vld [vmem:[%s39 + $0xf8] sm:$0xff]
      %v2654 = vld [vmem:[%s41] sm:$0x3]
      %v2656 = vlaneseq
      %v2657 = vshrl.u32 %v2656, 7
      %v2658 = vsub.s32 0, %v2657
      %v2659 = vrot.slane %v2654, %v2658
      %v2660 = vlaneseq
      %v2661 = vshrl.u32 %v2660, 7
      %v2662 = vsub.s32 1, %v2661
      %v2663 = vrot.slane %v2654, %v2662
      %2666 = vmatprep.subr.mxu0 %v2653
      %2667 = vmatpush1.msra.mxu0 %v2652
      %2668 = vmatprep.subr.mxu0 %v2651
      %2669 = vmatpush1.msra.mxu0 %v2650
      %2670 = vmatprep.subr.mxu0 %v2649
      %2671 = vmatpush1.msra.mxu0 %v2648
      %2672 = vmatprep.subr.mxu0 %v2647
      %2673 = vmatpush1.msra.mxu0 %v2646
      %2674 = vmatprep.subr.mxu0 %v2645
      %2675 = vmatpush1.msra.mxu0 %v2644
      %2676 = vmatprep.subr.mxu0 %v2643
      %2677 = vmatpush1.msra.mxu0 %v2642
      %2678 = vmatprep.subr.mxu0 %v2641
      %2679 = vmatpush1.msra.mxu0 %v2640
      %2680 = vmatprep.subr.mxu0 %v2639
      %2681 = vmatpush1.msra.mxu0 %v2638
      %2682 = vmatprep.subr.mxu0 %v2637
      %2683 = vmatpush1.msra.mxu0 %v2636
      %2684 = vmatprep.subr.mxu0 %v2635
      %2685 = vmatpush1.msra.mxu0 %v2634
      %2686 = vmatprep.subr.mxu0 %v2633
      %2687 = vmatpush1.msra.mxu0 %v2632
      %2688 = vmatprep.subr.mxu0 %v2631
      %2689 = vmatpush1.msra.mxu0 %v2630
      %2690 = vmatprep.subr.mxu0 %v2629
      %2691 = vmatpush1.msra.mxu0 %v2628
      %2692 = vmatprep.subr.mxu0 %v2627
      %2693 = vmatpush1.msra.mxu0 %v2626
      %2694 = vmatprep.subr.mxu0 %v2625
      %2695 = vmatpush1.msra.mxu0 %v2624
      %2696 = vmatprep.subr.mxu0 %v2623
      %2697 = vmatpush1.msra.mxu0 %v2622
      %2698 = vmatprep.subr.mxu0 0.0
      %2699 = vmatpush2.msra.mxu0 0.0
      %2700 = vmatprep.subr.mxu0 0.0
      %2701 = vmatpush2.msra.mxu0 0.0
      %2702 = vmatprep.subr.mxu0 0.0
      %2703 = vmatpush2.msra.mxu0 0.0
      %2704 = vmatprep.subr.mxu0 0.0
      %2705 = vmatpush2.msra.mxu0 0.0
      %2706 = vmatprep.subr.mxu0 0.0
      %2707 = vmatpush2.msra.mxu0 0.0
      %2708 = vmatprep.subr.mxu0 0.0
      %2709 = vmatpush2.msra.mxu0 0.0
      %2710 = vmatprep.subr.mxu0 0.0
      %2711 = vmatpush2.msra.mxu0 0.0
      %2712 = vmatprep.subr.mxu0 0.0
      %2713 = vmatpush2.msra.mxu0 0.0
      %2714 = vmatprep.subr.mxu0 0.0
      %2715 = vmatpush2.msra.mxu0 0.0
      %2716 = vmatprep.subr.mxu0 0.0
      %2717 = vmatpush2.msra.mxu0 0.0
      %2718 = vmatprep.subr.mxu0 0.0
      %2719 = vmatpush2.msra.mxu0 0.0
      %2720 = vmatprep.subr.mxu0 0.0
      %2721 = vmatpush2.msra.mxu0 0.0
      %2722 = vmatprep.subr.mxu0 0.0
      %2723 = vmatpush2.msra.mxu0 0.0
      %2724 = vmatprep.subr.mxu0 0.0
      %2725 = vmatpush2.msra.mxu0 0.0
      %2726 = vmatprep.subr.mxu0 0.0
      %2727 = vmatpush2.msra.mxu0 0.0
      %2728 = vmatprep.subr.mxu0 0.0
      %2729 = vmatpush2.msra.mxu0 0.0
      %2730 = vmatprep.mubr.f32.mxu0 0.0
      %2731 = vmatmul.mubr.f32.gmra.mxu0 %v2621
      %v2732 = vpop.f32.mrf.mxu0
      %v2733 = vadd.f32 %v2659, %v2732
      %v2734 = vpop.f32.mrf.mxu0
      %v2735 = vadd.f32 %v2663, %v2734
      %2736 = vdwg.mxu0
      %v2737 = vmul.f32 %v2735, 1.442695
      %v2738 = vpow.pop %v2737
      %v2739 = vld [vmem:[%s43] sm:$0xff]
      %v2740 = vld [vmem:[%s43 + $0x8] sm:$0xff]
      %v2741 = vld [vmem:[%s43 + $0x10] sm:$0xff]
      %v2742 = vld [vmem:[%s43 + $0x18] sm:$0xff]
      %v2743 = vld [vmem:[%s43 + $0x20] sm:$0xff]
      %v2744 = vld [vmem:[%s43 + $0x28] sm:$0xff]
      %v2745 = vld [vmem:[%s43 + $0x30] sm:$0xff]
      %v2746 = vld [vmem:[%s43 + $0x38] sm:$0xff]
      %v2747 = vld [vmem:[%s43 + $0x40] sm:$0xff]
      %v2748 = vld [vmem:[%s43 + $0x48] sm:$0xff]
      %v2749 = vld [vmem:[%s43 + $0x50] sm:$0xff]
      %v2750 = vld [vmem:[%s43 + $0x58] sm:$0xff]
      %v2751 = vld [vmem:[%s43 + $0x60] sm:$0xff]
      %v2752 = vld [vmem:[%s43 + $0x68] sm:$0xff]
      %v2753 = vld [vmem:[%s43 + $0x70] sm:$0xff]
      %v2754 = vld [vmem:[%s43 + $0x78] sm:$0xff]
      %v2755 = vld [vmem:[%s43 + $0x80] sm:$0xff]
      %v2756 = vld [vmem:[%s43 + $0x88] sm:$0xff]
      %v2757 = vld [vmem:[%s43 + $0x90] sm:$0xff]
      %v2758 = vld [vmem:[%s43 + $0x98] sm:$0xff]
      %v2759 = vld [vmem:[%s43 + $0xa0] sm:$0xff]
      %v2760 = vld [vmem:[%s43 + $0xa8] sm:$0xff]
      %v2761 = vld [vmem:[%s43 + $0xb0] sm:$0xff]
      %v2762 = vld [vmem:[%s43 + $0xb8] sm:$0xff]
      %v2763 = vld [vmem:[%s43 + $0xc0] sm:$0xff]
      %v2764 = vld [vmem:[%s43 + $0xc8] sm:$0xff]
      %v2765 = vld [vmem:[%s43 + $0xd0] sm:$0xff]
      %v2766 = vld [vmem:[%s43 + $0xd8] sm:$0xff]
      %v2767 = vld [vmem:[%s43 + $0xe0] sm:$0xff]
      %v2768 = vld [vmem:[%s43 + $0xe8] sm:$0xff]
      %v2769 = vld [vmem:[%s43 + $0xf0] sm:$0xff]
      %v2770 = vld [vmem:[%s43 + $0xf8] sm:$0xff]
      %v2771 = vld [vmem:[%s45] sm:$0x3]
      %v2773 = vlaneseq
      %v2774 = vshrl.u32 %v2773, 7
      %v2775 = vsub.s32 0, %v2774
      %v2776 = vrot.slane %v2771, %v2775
      %v2777 = vlaneseq
      %v2778 = vshrl.u32 %v2777, 7
      %v2779 = vsub.s32 1, %v2778
      %v2780 = vrot.slane %v2771, %v2779
      %2783 = vmatprep.subr.mxu0 %v2770
      %2784 = vmatpush1.msra.mxu0 %v2769
      %2785 = vmatprep.subr.mxu0 %v2768
      %2786 = vmatpush1.msra.mxu0 %v2767
      %2787 = vmatprep.subr.mxu0 %v2766
      %2788 = vmatpush1.msra.mxu0 %v2765
      %2789 = vmatprep.subr.mxu0 %v2764
      %2790 = vmatpush1.msra.mxu0 %v2763
      %2791 = vmatprep.subr.mxu0 %v2762
      %2792 = vmatpush1.msra.mxu0 %v2761
      %2793 = vmatprep.subr.mxu0 %v2760
      %2794 = vmatpush1.msra.mxu0 %v2759
      %2795 = vmatprep.subr.mxu0 %v2758
      %2796 = vmatpush1.msra.mxu0 %v2757
      %2797 = vmatprep.subr.mxu0 %v2756
      %2798 = vmatpush1.msra.mxu0 %v2755
      %2799 = vmatprep.subr.mxu0 %v2754
      %2800 = vmatpush1.msra.mxu0 %v2753
      %2801 = vmatprep.subr.mxu0 %v2752
      %2802 = vmatpush1.msra.mxu0 %v2751
      %2803 = vmatprep.subr.mxu0 %v2750
      %2804 = vmatpush1.msra.mxu0 %v2749
      %2805 = vmatprep.subr.mxu0 %v2748
      %2806 = vmatpush1.msra.mxu0 %v2747
      %2807 = vmatprep.subr.mxu0 %v2746
      %2808 = vmatpush1.msra.mxu0 %v2745
      %2809 = vmatprep.subr.mxu0 %v2744
      %2810 = vmatpush1.msra.mxu0 %v2743
      %2811 = vmatprep.subr.mxu0 %v2742
      %2812 = vmatpush1.msra.mxu0 %v2741
      %2813 = vmatprep.subr.mxu0 %v2740
      %2814 = vmatpush1.msra.mxu0 %v2739
      %2815 = vmatprep.subr.mxu0 0.0
      %2816 = vmatpush2.msra.mxu0 0.0
      %2817 = vmatprep.subr.mxu0 0.0
      %2818 = vmatpush2.msra.mxu0 0.0
      %2819 = vmatprep.subr.mxu0 0.0
      %2820 = vmatpush2.msra.mxu0 0.0
      %2821 = vmatprep.subr.mxu0 0.0
      %2822 = vmatpush2.msra.mxu0 0.0
      %2823 = vmatprep.subr.mxu0 0.0
      %2824 = vmatpush2.msra.mxu0 0.0
      %2825 = vmatprep.subr.mxu0 0.0
      %2826 = vmatpush2.msra.mxu0 0.0
      %2827 = vmatprep.subr.mxu0 0.0
      %2828 = vmatpush2.msra.mxu0 0.0
      %2829 = vmatprep.subr.mxu0 0.0
      %2830 = vmatpush2.msra.mxu0 0.0
      %2831 = vmatprep.subr.mxu0 0.0
      %2832 = vmatpush2.msra.mxu0 0.0
      %2833 = vmatprep.subr.mxu0 0.0
      %2834 = vmatpush2.msra.mxu0 0.0
      %2835 = vmatprep.subr.mxu0 0.0
      %2836 = vmatpush2.msra.mxu0 0.0
      %2837 = vmatprep.subr.mxu0 0.0
      %2838 = vmatpush2.msra.mxu0 0.0
      %2839 = vmatprep.subr.mxu0 0.0
      %2840 = vmatpush2.msra.mxu0 0.0
      %2841 = vmatprep.subr.mxu0 0.0
      %2842 = vmatpush2.msra.mxu0 0.0
      %2843 = vmatprep.subr.mxu0 0.0
      %2844 = vmatpush2.msra.mxu0 0.0
      %2845 = vmatprep.subr.mxu0 0.0
      %2846 = vmatpush2.msra.mxu0 0.0
      %2847 = vmatprep.mubr.f32.mxu0 0.0
      %2848 = vmatmul.mubr.f32.gmra.mxu0 %v2124
      %v2849 = vpop.f32.mrf.mxu0
      %v2850 = vadd.f32 %v2776, %v2849
      %v2851 = vpop.f32.mrf.mxu0
      %v2852 = vadd.f32 %v2780, %v2851
      %2853 = vdwg.mxu0
      %v2854 = vtanh.pop %v2850
      %v2855 = vtanh.pop %v2852
      %v2856 = vld [vmem:[%s47] sm:$0xff]
      %v2857 = vld [vmem:[%s47 + $0x8] sm:$0xff]
      %v2858 = vld [vmem:[%s47 + $0x10] sm:$0xff]
      %v2859 = vld [vmem:[%s47 + $0x18] sm:$0xff]
      %v2860 = vld [vmem:[%s47 + $0x20] sm:$0xff]
      %v2861 = vld [vmem:[%s47 + $0x28] sm:$0xff]
      %v2862 = vld [vmem:[%s47 + $0x30] sm:$0xff]
      %v2863 = vld [vmem:[%s47 + $0x38] sm:$0xff]
      %v2864 = vld [vmem:[%s47 + $0x40] sm:$0xff]
      %v2865 = vld [vmem:[%s47 + $0x48] sm:$0xff]
      %v2866 = vld [vmem:[%s47 + $0x50] sm:$0xff]
      %v2867 = vld [vmem:[%s47 + $0x58] sm:$0xff]
      %v2868 = vld [vmem:[%s47 + $0x60] sm:$0xff]
      %v2869 = vld [vmem:[%s47 + $0x68] sm:$0xff]
      %v2870 = vld [vmem:[%s47 + $0x70] sm:$0xff]
      %v2871 = vld [vmem:[%s47 + $0x78] sm:$0xff]
      %v2872 = vld [vmem:[%s47 + $0x80] sm:$0xff]
      %v2873 = vld [vmem:[%s47 + $0x88] sm:$0xff]
      %v2874 = vld [vmem:[%s47 + $0x90] sm:$0xff]
      %v2875 = vld [vmem:[%s47 + $0x98] sm:$0xff]
      %v2876 = vld [vmem:[%s47 + $0xa0] sm:$0xff]
      %v2877 = vld [vmem:[%s47 + $0xa8] sm:$0xff]
      %v2878 = vld [vmem:[%s47 + $0xb0] sm:$0xff]
      %v2879 = vld [vmem:[%s47 + $0xb8] sm:$0xff]
      %v2880 = vld [vmem:[%s47 + $0xc0] sm:$0xff]
      %v2881 = vld [vmem:[%s47 + $0xc8] sm:$0xff]
      %v2882 = vld [vmem:[%s47 + $0xd0] sm:$0xff]
      %v2883 = vld [vmem:[%s47 + $0xd8] sm:$0xff]
      %v2884 = vld [vmem:[%s47 + $0xe0] sm:$0xff]
      %v2885 = vld [vmem:[%s47 + $0xe8] sm:$0xff]
      %v2886 = vld [vmem:[%s47 + $0xf0] sm:$0xff]
      %v2887 = vld [vmem:[%s47 + $0xf8] sm:$0xff]
      %v2888 = vld [vmem:[%s47 + $0x100] sm:$0xff]
      %v2889 = vld [vmem:[%s47 + $0x108] sm:$0xff]
      %v2890 = vld [vmem:[%s47 + $0x110] sm:$0xff]
      %v2891 = vld [vmem:[%s47 + $0x118] sm:$0xff]
      %v2892 = vld [vmem:[%s47 + $0x120] sm:$0xff]
      %v2893 = vld [vmem:[%s47 + $0x128] sm:$0xff]
      %v2894 = vld [vmem:[%s47 + $0x130] sm:$0xff]
      %v2895 = vld [vmem:[%s47 + $0x138] sm:$0xff]
      %v2896 = vld [vmem:[%s47 + $0x140] sm:$0xff]
      %v2897 = vld [vmem:[%s47 + $0x148] sm:$0xff]
      %v2898 = vld [vmem:[%s47 + $0x150] sm:$0xff]
      %v2899 = vld [vmem:[%s47 + $0x158] sm:$0xff]
      %v2900 = vld [vmem:[%s47 + $0x160] sm:$0xff]
      %v2901 = vld [vmem:[%s47 + $0x168] sm:$0xff]
      %v2902 = vld [vmem:[%s47 + $0x170] sm:$0xff]
      %v2903 = vld [vmem:[%s47 + $0x178] sm:$0xff]
      %v2904 = vld [vmem:[%s47 + $0x180] sm:$0xff]
      %v2905 = vld [vmem:[%s47 + $0x188] sm:$0xff]
      %v2906 = vld [vmem:[%s47 + $0x190] sm:$0xff]
      %v2907 = vld [vmem:[%s47 + $0x198] sm:$0xff]
      %v2908 = vld [vmem:[%s47 + $0x1a0] sm:$0xff]
      %v2909 = vld [vmem:[%s47 + $0x1a8] sm:$0xff]
      %v2910 = vld [vmem:[%s47 + $0x1b0] sm:$0xff]
      %v2911 = vld [vmem:[%s47 + $0x1b8] sm:$0xff]
      %v2912 = vld [vmem:[%s47 + $0x1c0] sm:$0xff]
      %v2913 = vld [vmem:[%s47 + $0x1c8] sm:$0xff]
      %v2914 = vld [vmem:[%s47 + $0x1d0] sm:$0xff]
      %v2915 = vld [vmem:[%s47 + $0x1d8] sm:$0xff]
      %v2916 = vld [vmem:[%s47 + $0x1e0] sm:$0xff]
      %v2917 = vld [vmem:[%s47 + $0x1e8] sm:$0xff]
      %v2918 = vld [vmem:[%s47 + $0x1f0] sm:$0xff]
      %v2919 = vld [vmem:[%s47 + $0x1f8] sm:$0xff]
      %v2920 = vld [vmem:[%s49] sm:$0x3]
      %v2922 = vlaneseq
      %v2923 = vshrl.u32 %v2922, 7
      %v2924 = vsub.s32 0, %v2923
      %v2925 = vrot.slane %v2920, %v2924
      %v2926 = vlaneseq
      %v2927 = vshrl.u32 %v2926, 7
      %v2928 = vsub.s32 1, %v2927
      %v2929 = vrot.slane %v2920, %v2928
      %2932 = vmatprep.subr.mxu0 %v2887
      %2933 = vmatpush1.msra.mxu0 %v2886
      %2934 = vmatprep.subr.mxu0 %v2885
      %2935 = vmatpush1.msra.mxu0 %v2884
      %2936 = vmatprep.subr.mxu0 %v2883
      %2937 = vmatpush1.msra.mxu0 %v2882
      %2938 = vmatprep.subr.mxu0 %v2881
      %2939 = vmatpush1.msra.mxu0 %v2880
      %2940 = vmatprep.subr.mxu0 %v2879
      %2941 = vmatpush1.msra.mxu0 %v2878
      %2942 = vmatprep.subr.mxu0 %v2877
      %2943 = vmatpush1.msra.mxu0 %v2876
      %2944 = vmatprep.subr.mxu0 %v2875
      %2945 = vmatpush1.msra.mxu0 %v2874
      %2946 = vmatprep.subr.mxu0 %v2873
      %2947 = vmatpush1.msra.mxu0 %v2872
      %2948 = vmatprep.subr.mxu0 %v2871
      %2949 = vmatpush1.msra.mxu0 %v2870
      %2950 = vmatprep.subr.mxu0 %v2869
      %2951 = vmatpush1.msra.mxu0 %v2868
      %2952 = vmatprep.subr.mxu0 %v2867
      %2953 = vmatpush1.msra.mxu0 %v2866
      %2954 = vmatprep.subr.mxu0 %v2865
      %2955 = vmatpush1.msra.mxu0 %v2864
      %2956 = vmatprep.subr.mxu0 %v2863
      %2957 = vmatpush1.msra.mxu0 %v2862
      %2958 = vmatprep.subr.mxu0 %v2861
      %2959 = vmatpush1.msra.mxu0 %v2860
      %2960 = vmatprep.subr.mxu0 %v2859
      %2961 = vmatpush1.msra.mxu0 %v2858
      %2962 = vmatprep.subr.mxu0 %v2857
      %2963 = vmatpush1.msra.mxu0 %v2856
      %2964 = vmatprep.subr.mxu0 %v2919
      %2965 = vmatpush2.msra.mxu0 %v2918
      %2966 = vmatprep.subr.mxu0 %v2917
      %2967 = vmatpush2.msra.mxu0 %v2916
      %2968 = vmatprep.subr.mxu0 %v2915
      %2969 = vmatpush2.msra.mxu0 %v2914
      %2970 = vmatprep.subr.mxu0 %v2913
      %2971 = vmatpush2.msra.mxu0 %v2912
      %2972 = vmatprep.subr.mxu0 %v2911
      %2973 = vmatpush2.msra.mxu0 %v2910
      %2974 = vmatprep.subr.mxu0 %v2909
      %2975 = vmatpush2.msra.mxu0 %v2908
      %2976 = vmatprep.subr.mxu0 %v2907
      %2977 = vmatpush2.msra.mxu0 %v2906
      %2978 = vmatprep.subr.mxu0 %v2905
      %2979 = vmatpush2.msra.mxu0 %v2904
      %2980 = vmatprep.subr.mxu0 %v2903
      %2981 = vmatpush2.msra.mxu0 %v2902
      %2982 = vmatprep.subr.mxu0 %v2901
      %2983 = vmatpush2.msra.mxu0 %v2900
      %2984 = vmatprep.subr.mxu0 %v2899
      %2985 = vmatpush2.msra.mxu0 %v2898
      %2986 = vmatprep.subr.mxu0 %v2897
      %2987 = vmatpush2.msra.mxu0 %v2896
      %2988 = vmatprep.subr.mxu0 %v2895
      %2989 = vmatpush2.msra.mxu0 %v2894
      %2990 = vmatprep.subr.mxu0 %v2893
      %2991 = vmatpush2.msra.mxu0 %v2892
      %2992 = vmatprep.subr.mxu0 %v2891
      %2993 = vmatpush2.msra.mxu0 %v2890
      %2994 = vmatprep.subr.mxu0 %v2889
      %2995 = vmatpush2.msra.mxu0 %v2888
      %2996 = vmatprep.mubr.f32.mxu0 %v2855
      %2997 = vmatmul.mubr.f32.gmra.mxu0 %v2854
      %v2998 = vpop.f32.mrf.mxu0
      %v2999 = vadd.f32 %v2925, %v2998
      %v3000 = vpop.f32.mrf.mxu0
      %v3001 = vadd.f32 %v2929, %v3000
      %3002 = vdwg.mxu0
      %v3003 = vtanh.pop %v2999
      %v3004 = vtanh.pop %v3001
      %v3005 = vld [vmem:[%s51] sm:$0xff]
      %v3006 = vld [vmem:[%s51 + $0x8] sm:$0xff]
      %v3007 = vld [vmem:[%s51 + $0x10] sm:$0xff]
      %v3008 = vld [vmem:[%s51 + $0x18] sm:$0xff]
      %v3009 = vld [vmem:[%s51 + $0x20] sm:$0xff]
      %v3010 = vld [vmem:[%s51 + $0x28] sm:$0xff]
      %v3011 = vld [vmem:[%s51 + $0x30] sm:$0xff]
      %v3012 = vld [vmem:[%s51 + $0x38] sm:$0xff]
      %v3013 = vld [vmem:[%s51 + $0x40] sm:$0xff]
      %v3014 = vld [vmem:[%s51 + $0x48] sm:$0xff]
      %v3015 = vld [vmem:[%s51 + $0x50] sm:$0xff]
      %v3016 = vld [vmem:[%s51 + $0x58] sm:$0xff]
      %v3017 = vld [vmem:[%s51 + $0x60] sm:$0xff]
      %v3018 = vld [vmem:[%s51 + $0x68] sm:$0xff]
      %v3019 = vld [vmem:[%s51 + $0x70] sm:$0xff]
      %v3020 = vld [vmem:[%s51 + $0x78] sm:$0xff]
      %v3021 = vld [vmem:[%s51 + $0x80] sm:$0xff]
      %v3022 = vld [vmem:[%s51 + $0x88] sm:$0xff]
      %v3023 = vld [vmem:[%s51 + $0x90] sm:$0xff]
      %v3024 = vld [vmem:[%s51 + $0x98] sm:$0xff]
      %v3025 = vld [vmem:[%s51 + $0xa0] sm:$0xff]
      %v3026 = vld [vmem:[%s51 + $0xa8] sm:$0xff]
      %v3027 = vld [vmem:[%s51 + $0xb0] sm:$0xff]
      %v3028 = vld [vmem:[%s51 + $0xb8] sm:$0xff]
      %v3029 = vld [vmem:[%s51 + $0xc0] sm:$0xff]
      %v3030 = vld [vmem:[%s51 + $0xc8] sm:$0xff]
      %v3031 = vld [vmem:[%s51 + $0xd0] sm:$0xff]
      %v3032 = vld [vmem:[%s51 + $0xd8] sm:$0xff]
      %v3033 = vld [vmem:[%s51 + $0xe0] sm:$0xff]
      %v3034 = vld [vmem:[%s51 + $0xe8] sm:$0xff]
      %v3035 = vld [vmem:[%s51 + $0xf0] sm:$0xff]
      %v3036 = vld [vmem:[%s51 + $0xf8] sm:$0xff]
      %v3037 = vld [vmem:[%s51 + $0x100] sm:$0xff]
      %v3038 = vld [vmem:[%s51 + $0x108] sm:$0xff]
      %v3039 = vld [vmem:[%s51 + $0x110] sm:$0xff]
      %v3040 = vld [vmem:[%s51 + $0x118] sm:$0xff]
      %v3041 = vld [vmem:[%s51 + $0x120] sm:$0xff]
      %v3042 = vld [vmem:[%s51 + $0x128] sm:$0xff]
      %v3043 = vld [vmem:[%s51 + $0x130] sm:$0xff]
      %v3044 = vld [vmem:[%s51 + $0x138] sm:$0xff]
      %v3045 = vld [vmem:[%s51 + $0x140] sm:$0xff]
      %v3046 = vld [vmem:[%s51 + $0x148] sm:$0xff]
      %v3047 = vld [vmem:[%s51 + $0x150] sm:$0xff]
      %v3048 = vld [vmem:[%s51 + $0x158] sm:$0xff]
      %v3049 = vld [vmem:[%s51 + $0x160] sm:$0xff]
      %v3050 = vld [vmem:[%s51 + $0x168] sm:$0xff]
      %v3051 = vld [vmem:[%s51 + $0x170] sm:$0xff]
      %v3052 = vld [vmem:[%s51 + $0x178] sm:$0xff]
      %v3053 = vld [vmem:[%s51 + $0x180] sm:$0xff]
      %v3054 = vld [vmem:[%s51 + $0x188] sm:$0xff]
      %v3055 = vld [vmem:[%s51 + $0x190] sm:$0xff]
      %v3056 = vld [vmem:[%s51 + $0x198] sm:$0xff]
      %v3057 = vld [vmem:[%s51 + $0x1a0] sm:$0xff]
      %v3058 = vld [vmem:[%s51 + $0x1a8] sm:$0xff]
      %v3059 = vld [vmem:[%s51 + $0x1b0] sm:$0xff]
      %v3060 = vld [vmem:[%s51 + $0x1b8] sm:$0xff]
      %v3061 = vld [vmem:[%s51 + $0x1c0] sm:$0xff]
      %v3062 = vld [vmem:[%s51 + $0x1c8] sm:$0xff]
      %v3063 = vld [vmem:[%s51 + $0x1d0] sm:$0xff]
      %v3064 = vld [vmem:[%s51 + $0x1d8] sm:$0xff]
      %v3065 = vld [vmem:[%s51 + $0x1e0] sm:$0xff]
      %v3066 = vld [vmem:[%s51 + $0x1e8] sm:$0xff]
      %v3067 = vld [vmem:[%s51 + $0x1f0] sm:$0xff]
      %v3068 = vld [vmem:[%s51 + $0x1f8] sm:$0xff]
      %v3069 = vld [vmem:[%s51 + $0x200] sm:$0xff]
      %v3070 = vld [vmem:[%s51 + $0x208] sm:$0xff]
      %v3071 = vld [vmem:[%s51 + $0x210] sm:$0xff]
      %v3072 = vld [vmem:[%s51 + $0x218] sm:$0xff]
      %v3073 = vld [vmem:[%s51 + $0x220] sm:$0xff]
      %v3074 = vld [vmem:[%s51 + $0x228] sm:$0xff]
      %v3075 = vld [vmem:[%s51 + $0x230] sm:$0xff]
      %v3076 = vld [vmem:[%s51 + $0x238] sm:$0xff]
      %v3077 = vld [vmem:[%s51 + $0x240] sm:$0xff]
      %v3078 = vld [vmem:[%s51 + $0x248] sm:$0xff]
      %v3079 = vld [vmem:[%s51 + $0x250] sm:$0xff]
      %v3080 = vld [vmem:[%s51 + $0x258] sm:$0xff]
      %v3081 = vld [vmem:[%s51 + $0x260] sm:$0xff]
      %v3082 = vld [vmem:[%s51 + $0x268] sm:$0xff]
      %v3083 = vld [vmem:[%s51 + $0x270] sm:$0xff]
      %v3084 = vld [vmem:[%s51 + $0x278] sm:$0xff]
      %v3085 = vld [vmem:[%s51 + $0x280] sm:$0xff]
      %v3086 = vld [vmem:[%s51 + $0x288] sm:$0xff]
      %v3087 = vld [vmem:[%s51 + $0x290] sm:$0xff]
      %v3088 = vld [vmem:[%s51 + $0x298] sm:$0xff]
      %v3089 = vld [vmem:[%s51 + $0x2a0] sm:$0xff]
      %v3090 = vld [vmem:[%s51 + $0x2a8] sm:$0xff]
      %v3091 = vld [vmem:[%s51 + $0x2b0] sm:$0xff]
      %v3092 = vld [vmem:[%s51 + $0x2b8] sm:$0xff]
      %v3093 = vld [vmem:[%s51 + $0x2c0] sm:$0xff]
      %v3094 = vld [vmem:[%s51 + $0x2c8] sm:$0xff]
      %v3095 = vld [vmem:[%s51 + $0x2d0] sm:$0xff]
      %v3096 = vld [vmem:[%s51 + $0x2d8] sm:$0xff]
      %v3097 = vld [vmem:[%s51 + $0x2e0] sm:$0xff]
      %v3098 = vld [vmem:[%s51 + $0x2e8] sm:$0xff]
      %v3099 = vld [vmem:[%s51 + $0x2f0] sm:$0xff]
      %v3100 = vld [vmem:[%s51 + $0x2f8] sm:$0xff]
      %v3101 = vld [vmem:[%s51 + $0x300] sm:$0xff]
      %v3102 = vld [vmem:[%s51 + $0x308] sm:$0xff]
      %v3103 = vld [vmem:[%s51 + $0x310] sm:$0xff]
      %v3104 = vld [vmem:[%s51 + $0x318] sm:$0xff]
      %v3105 = vld [vmem:[%s51 + $0x320] sm:$0xff]
      %v3106 = vld [vmem:[%s51 + $0x328] sm:$0xff]
      %v3107 = vld [vmem:[%s51 + $0x330] sm:$0xff]
      %v3108 = vld [vmem:[%s51 + $0x338] sm:$0xff]
      %v3109 = vld [vmem:[%s51 + $0x340] sm:$0xff]
      %v3110 = vld [vmem:[%s51 + $0x348] sm:$0xff]
      %v3111 = vld [vmem:[%s51 + $0x350] sm:$0xff]
      %v3112 = vld [vmem:[%s51 + $0x358] sm:$0xff]
      %v3113 = vld [vmem:[%s51 + $0x360] sm:$0xff]
      %v3114 = vld [vmem:[%s51 + $0x368] sm:$0xff]
      %v3115 = vld [vmem:[%s51 + $0x370] sm:$0xff]
      %v3116 = vld [vmem:[%s51 + $0x378] sm:$0xff]
      %v3117 = vld [vmem:[%s51 + $0x380] sm:$0xff]
      %v3118 = vld [vmem:[%s51 + $0x388] sm:$0xff]
      %v3119 = vld [vmem:[%s51 + $0x390] sm:$0xff]
      %v3120 = vld [vmem:[%s51 + $0x398] sm:$0xff]
      %v3121 = vld [vmem:[%s51 + $0x3a0] sm:$0xff]
      %v3122 = vld [vmem:[%s51 + $0x3a8] sm:$0xff]
      %v3123 = vld [vmem:[%s51 + $0x3b0] sm:$0xff]
      %v3124 = vld [vmem:[%s51 + $0x3b8] sm:$0xff]
      %v3125 = vld [vmem:[%s51 + $0x3c0] sm:$0xff]
      %v3126 = vld [vmem:[%s51 + $0x3c8] sm:$0xff]
      %v3127 = vld [vmem:[%s51 + $0x3d0] sm:$0xff]
      %v3128 = vld [vmem:[%s51 + $0x3d8] sm:$0xff]
      %v3129 = vld [vmem:[%s51 + $0x3e0] sm:$0xff]
      %v3130 = vld [vmem:[%s51 + $0x3e8] sm:$0xff]
      %v3131 = vld [vmem:[%s51 + $0x3f0] sm:$0xff]
      %v3132 = vld [vmem:[%s51 + $0x3f8] sm:$0xff]
      %v3133 = vld [vmem:[%s51 + $0x400] sm:$0xff]
      %v3134 = vld [vmem:[%s51 + $0x408] sm:$0xff]
      %v3135 = vld [vmem:[%s51 + $0x410] sm:$0xff]
      %v3136 = vld [vmem:[%s51 + $0x418] sm:$0xff]
      %v3137 = vld [vmem:[%s51 + $0x420] sm:$0xff]
      %v3138 = vld [vmem:[%s51 + $0x428] sm:$0xff]
      %v3139 = vld [vmem:[%s51 + $0x430] sm:$0xff]
      %v3140 = vld [vmem:[%s51 + $0x438] sm:$0xff]
      %v3141 = vld [vmem:[%s51 + $0x440] sm:$0xff]
      %v3142 = vld [vmem:[%s51 + $0x448] sm:$0xff]
      %v3143 = vld [vmem:[%s51 + $0x450] sm:$0xff]
      %v3144 = vld [vmem:[%s51 + $0x458] sm:$0xff]
      %v3145 = vld [vmem:[%s51 + $0x460] sm:$0xff]
      %v3146 = vld [vmem:[%s51 + $0x468] sm:$0xff]
      %v3147 = vld [vmem:[%s51 + $0x470] sm:$0xff]
      %v3148 = vld [vmem:[%s51 + $0x478] sm:$0xff]
      %v3149 = vld [vmem:[%s51 + $0x480] sm:$0xff]
      %v3150 = vld [vmem:[%s51 + $0x488] sm:$0xff]
      %v3151 = vld [vmem:[%s51 + $0x490] sm:$0xff]
      %v3152 = vld [vmem:[%s51 + $0x498] sm:$0xff]
      %v3153 = vld [vmem:[%s51 + $0x4a0] sm:$0xff]
      %v3154 = vld [vmem:[%s51 + $0x4a8] sm:$0xff]
      %v3155 = vld [vmem:[%s51 + $0x4b0] sm:$0xff]
      %v3156 = vld [vmem:[%s51 + $0x4b8] sm:$0xff]
      %v3157 = vld [vmem:[%s51 + $0x4c0] sm:$0xff]
      %v3158 = vld [vmem:[%s51 + $0x4c8] sm:$0xff]
      %v3159 = vld [vmem:[%s51 + $0x4d0] sm:$0xff]
      %v3160 = vld [vmem:[%s51 + $0x4d8] sm:$0xff]
      %v3161 = vld [vmem:[%s51 + $0x4e0] sm:$0xff]
      %v3162 = vld [vmem:[%s51 + $0x4e8] sm:$0xff]
      %v3163 = vld [vmem:[%s51 + $0x4f0] sm:$0xff]
      %v3164 = vld [vmem:[%s51 + $0x4f8] sm:$0xff]
      %v3165 = vld [vmem:[%s51 + $0x500] sm:$0xff]
      %v3166 = vld [vmem:[%s51 + $0x508] sm:$0xff]
      %v3167 = vld [vmem:[%s51 + $0x510] sm:$0xff]
      %v3168 = vld [vmem:[%s51 + $0x518] sm:$0xff]
      %v3169 = vld [vmem:[%s51 + $0x520] sm:$0xff]
      %v3170 = vld [vmem:[%s51 + $0x528] sm:$0xff]
      %v3171 = vld [vmem:[%s51 + $0x530] sm:$0xff]
      %v3172 = vld [vmem:[%s51 + $0x538] sm:$0xff]
      %v3173 = vld [vmem:[%s51 + $0x540] sm:$0xff]
      %v3174 = vld [vmem:[%s51 + $0x548] sm:$0xff]
      %v3175 = vld [vmem:[%s51 + $0x550] sm:$0xff]
      %v3176 = vld [vmem:[%s51 + $0x558] sm:$0xff]
      %v3177 = vld [vmem:[%s51 + $0x560] sm:$0xff]
      %v3178 = vld [vmem:[%s51 + $0x568] sm:$0xff]
      %v3179 = vld [vmem:[%s51 + $0x570] sm:$0xff]
      %v3180 = vld [vmem:[%s51 + $0x578] sm:$0xff]
      %v3181 = vld [vmem:[%s51 + $0x580] sm:$0xff]
      %v3182 = vld [vmem:[%s51 + $0x588] sm:$0xff]
      %v3183 = vld [vmem:[%s51 + $0x590] sm:$0xff]
      %v3184 = vld [vmem:[%s51 + $0x598] sm:$0xff]
      %v3185 = vld [vmem:[%s51 + $0x5a0] sm:$0xff]
      %v3186 = vld [vmem:[%s51 + $0x5a8] sm:$0xff]
      %v3187 = vld [vmem:[%s51 + $0x5b0] sm:$0xff]
      %v3188 = vld [vmem:[%s51 + $0x5b8] sm:$0xff]
      %v3189 = vld [vmem:[%s51 + $0x5c0] sm:$0xff]
      %v3190 = vld [vmem:[%s51 + $0x5c8] sm:$0xff]
      %v3191 = vld [vmem:[%s51 + $0x5d0] sm:$0xff]
      %v3192 = vld [vmem:[%s51 + $0x5d8] sm:$0xff]
      %v3193 = vld [vmem:[%s51 + $0x5e0] sm:$0xff]
      %v3194 = vld [vmem:[%s51 + $0x5e8] sm:$0xff]
      %v3195 = vld [vmem:[%s51 + $0x5f0] sm:$0xff]
      %v3196 = vld [vmem:[%s51 + $0x5f8] sm:$0xff]
      %v3197 = vld [vmem:[%s51 + $0x600] sm:$0xff]
      %v3198 = vld [vmem:[%s51 + $0x608] sm:$0xff]
      %v3199 = vld [vmem:[%s51 + $0x610] sm:$0xff]
      %v3200 = vld [vmem:[%s51 + $0x618] sm:$0xff]
      %v3201 = vld [vmem:[%s51 + $0x620] sm:$0xff]
      %v3202 = vld [vmem:[%s51 + $0x628] sm:$0xff]
      %v3203 = vld [vmem:[%s51 + $0x630] sm:$0xff]
      %v3204 = vld [vmem:[%s51 + $0x638] sm:$0xff]
      %v3205 = vld [vmem:[%s51 + $0x640] sm:$0xff]
      %v3206 = vld [vmem:[%s51 + $0x648] sm:$0xff]
      %v3207 = vld [vmem:[%s51 + $0x650] sm:$0xff]
      %v3208 = vld [vmem:[%s51 + $0x658] sm:$0xff]
      %v3209 = vld [vmem:[%s51 + $0x660] sm:$0xff]
      %v3210 = vld [vmem:[%s51 + $0x668] sm:$0xff]
      %v3211 = vld [vmem:[%s51 + $0x670] sm:$0xff]
      %v3212 = vld [vmem:[%s51 + $0x678] sm:$0xff]
      %v3213 = vld [vmem:[%s51 + $0x680] sm:$0xff]
      %v3214 = vld [vmem:[%s51 + $0x688] sm:$0xff]
      %v3215 = vld [vmem:[%s51 + $0x690] sm:$0xff]
      %v3216 = vld [vmem:[%s51 + $0x698] sm:$0xff]
      %v3217 = vld [vmem:[%s51 + $0x6a0] sm:$0xff]
      %v3218 = vld [vmem:[%s51 + $0x6a8] sm:$0xff]
      %v3219 = vld [vmem:[%s51 + $0x6b0] sm:$0xff]
      %v3220 = vld [vmem:[%s51 + $0x6b8] sm:$0xff]
      %v3221 = vld [vmem:[%s51 + $0x6c0] sm:$0xff]
      %v3222 = vld [vmem:[%s51 + $0x6c8] sm:$0xff]
      %v3223 = vld [vmem:[%s51 + $0x6d0] sm:$0xff]
      %v3224 = vld [vmem:[%s51 + $0x6d8] sm:$0xff]
      %v3225 = vld [vmem:[%s51 + $0x6e0] sm:$0xff]
      %v3226 = vld [vmem:[%s51 + $0x6e8] sm:$0xff]
      %v3227 = vld [vmem:[%s51 + $0x6f0] sm:$0xff]
      %v3228 = vld [vmem:[%s51 + $0x6f8] sm:$0xff]
      %v3229 = vld [vmem:[%s53] sm:$0xff]
      %v3231 = vlaneseq
      %v3232 = vshrl.u32 %v3231, 7
      %v3233 = vsub.s32 0, %v3232
      %v3234 = vrot.slane %v3229, %v3233
      %v3235 = vlaneseq
      %v3236 = vshrl.u32 %v3235, 7
      %v3237 = vsub.s32 1, %v3236
      %v3238 = vrot.slane %v3229, %v3237
      %v3239 = vlaneseq
      %v3240 = vshrl.u32 %v3239, 7
      %v3241 = vsub.s32 2, %v3240
      %v3242 = vrot.slane %v3229, %v3241
      %v3243 = vlaneseq
      %v3244 = vshrl.u32 %v3243, 7
      %v3245 = vsub.s32 3, %v3244
      %v3246 = vrot.slane %v3229, %v3245
      %v3247 = vlaneseq
      %v3248 = vshrl.u32 %v3247, 7
      %v3249 = vsub.s32 4, %v3248
      %v3250 = vrot.slane %v3229, %v3249
      %v3251 = vlaneseq
      %v3252 = vshrl.u32 %v3251, 7
      %v3253 = vsub.s32 5, %v3252
      %v3254 = vrot.slane %v3229, %v3253
      %v3255 = vlaneseq
      %v3256 = vshrl.u32 %v3255, 7
      %v3257 = vsub.s32 6, %v3256
      %v3258 = vrot.slane %v3229, %v3257
      %3266 = vmatprep.subr.mxu0 %v3111
      %3267 = vmatpush1.msra.mxu0 %v3110
      %3268 = vmatprep.subr.mxu0 %v3104
      %3269 = vmatpush1.msra.mxu0 %v3103
      %3270 = vmatprep.subr.mxu0 %v3097
      %3271 = vmatpush1.msra.mxu0 %v3096
      %3272 = vmatprep.subr.mxu0 %v3090
      %3273 = vmatpush1.msra.mxu0 %v3089
      %3274 = vmatprep.subr.mxu0 %v3083
      %3275 = vmatpush1.msra.mxu0 %v3082
      %3276 = vmatprep.subr.mxu0 %v3076
      %3277 = vmatpush1.msra.mxu0 %v3075
      %3278 = vmatprep.subr.mxu0 %v3069
      %3279 = vmatpush1.msra.mxu0 %v3068
      %3280 = vmatprep.subr.mxu0 %v3062
      %3281 = vmatpush1.msra.mxu0 %v3061
      %3282 = vmatprep.subr.mxu0 %v3055
      %3283 = vmatpush1.msra.mxu0 %v3054
      %3284 = vmatprep.subr.mxu0 %v3048
      %3285 = vmatpush1.msra.mxu0 %v3047
      %3286 = vmatprep.subr.mxu0 %v3041
      %3287 = vmatpush1.msra.mxu0 %v3040
      %3288 = vmatprep.subr.mxu0 %v3034
      %3289 = vmatpush1.msra.mxu0 %v3033
      %3290 = vmatprep.subr.mxu0 %v3027
      %3291 = vmatpush1.msra.mxu0 %v3026
      %3292 = vmatprep.subr.mxu0 %v3020
      %3293 = vmatpush1.msra.mxu0 %v3019
      %3294 = vmatprep.subr.mxu0 %v3013
      %3295 = vmatpush1.msra.mxu0 %v3012
      %3296 = vmatprep.subr.mxu0 %v3006
      %3297 = vmatpush1.msra.mxu0 %v3005
      %3298 = vmatprep.subr.mxu0 %v3223
      %3299 = vmatpush2.msra.mxu0 %v3222
      %3300 = vmatprep.subr.mxu0 %v3216
      %3301 = vmatpush2.msra.mxu0 %v3215
      %3302 = vmatprep.subr.mxu0 %v3209
      %3303 = vmatpush2.msra.mxu0 %v3208
      %3304 = vmatprep.subr.mxu0 %v3202
      %3305 = vmatpush2.msra.mxu0 %v3201
      %3306 = vmatprep.subr.mxu0 %v3195
      %3307 = vmatpush2.msra.mxu0 %v3194
      %3308 = vmatprep.subr.mxu0 %v3188
      %3309 = vmatpush2.msra.mxu0 %v3187
      %3310 = vmatprep.subr.mxu0 %v3181
      %3311 = vmatpush2.msra.mxu0 %v3180
      %3312 = vmatprep.subr.mxu0 %v3174
      %3313 = vmatpush2.msra.mxu0 %v3173
      %3314 = vmatprep.subr.mxu0 %v3167
      %3315 = vmatpush2.msra.mxu0 %v3166
      %3316 = vmatprep.subr.mxu0 %v3160
      %3317 = vmatpush2.msra.mxu0 %v3159
      %3318 = vmatprep.subr.mxu0 %v3153
      %3319 = vmatpush2.msra.mxu0 %v3152
      %3320 = vmatprep.subr.mxu0 %v3146
      %3321 = vmatpush2.msra.mxu0 %v3145
      %3322 = vmatprep.subr.mxu0 %v3139
      %3323 = vmatpush2.msra.mxu0 %v3138
      %3324 = vmatprep.subr.mxu0 %v3132
      %3325 = vmatpush2.msra.mxu0 %v3131
      %3326 = vmatprep.subr.mxu0 %v3125
      %3327 = vmatpush2.msra.mxu0 %v3124
      %3328 = vmatprep.subr.mxu0 %v3118
      %3329 = vmatpush2.msra.mxu0 %v3117
      %3330 = vmatprep.mubr.f32.mxu0 %v3004
      %3331 = vmatmul.mubr.f32.gmra.mxu0 %v3003
      %v3332 = vpop.f32.mrf.mxu0
      %v3333 = vadd.f32 %v3234, %v3332
      %v3334 = vpop.f32.mrf.mxu0
      %v3335 = vadd.f32 %v3238, %v3334
      %3336 = vdwg.mxu0
      %3337 = vmatprep.subr.mxu0 %v3113
      %3338 = vmatpush1.msra.mxu0 %v3112
      %3339 = vmatprep.subr.mxu0 %v3106
      %3340 = vmatpush1.msra.mxu0 %v3105
      %3341 = vmatprep.subr.mxu0 %v3099
      %3342 = vmatpush1.msra.mxu0 %v3098
      %3343 = vmatprep.subr.mxu0 %v3092
      %3344 = vmatpush1.msra.mxu0 %v3091
      %3345 = vmatprep.subr.mxu0 %v3085
      %3346 = vmatpush1.msra.mxu0 %v3084
      %3347 = vmatprep.subr.mxu0 %v3078
      %3348 = vmatpush1.msra.mxu0 %v3077
      %3349 = vmatprep.subr.mxu0 %v3071
      %3350 = vmatpush1.msra.mxu0 %v3070
      %3351 = vmatprep.subr.mxu0 %v3064
      %3352 = vmatpush1.msra.mxu0 %v3063
      %3353 = vmatprep.subr.mxu0 %v3057
      %3354 = vmatpush1.msra.mxu0 %v3056
      %3355 = vmatprep.subr.mxu0 %v3050
      %3356 = vmatpush1.msra.mxu0 %v3049
      %3357 = vmatprep.subr.mxu0 %v3043
      %3358 = vmatpush1.msra.mxu0 %v3042
      %3359 = vmatprep.subr.mxu0 %v3036
      %3360 = vmatpush1.msra.mxu0 %v3035
      %3361 = vmatprep.subr.mxu0 %v3029
      %3362 = vmatpush1.msra.mxu0 %v3028
      %3363 = vmatprep.subr.mxu0 %v3022
      %3364 = vmatpush1.msra.mxu0 %v3021
      %3365 = vmatprep.subr.mxu0 %v3015
      %3366 = vmatpush1.msra.mxu0 %v3014
      %3367 = vmatprep.subr.mxu0 %v3008
      %3368 = vmatpush1.msra.mxu0 %v3007
      %3369 = vmatprep.subr.mxu0 %v3225
      %3370 = vmatpush2.msra.mxu0 %v3224
      %3371 = vmatprep.subr.mxu0 %v3218
      %3372 = vmatpush2.msra.mxu0 %v3217
      %3373 = vmatprep.subr.mxu0 %v3211
      %3374 = vmatpush2.msra.mxu0 %v3210
      %3375 = vmatprep.subr.mxu0 %v3204
      %3376 = vmatpush2.msra.mxu0 %v3203
      %3377 = vmatprep.subr.mxu0 %v3197
      %3378 = vmatpush2.msra.mxu0 %v3196
      %3379 = vmatprep.subr.mxu0 %v3190
      %3380 = vmatpush2.msra.mxu0 %v3189
      %3381 = vmatprep.subr.mxu0 %v3183
      %3382 = vmatpush2.msra.mxu0 %v3182
      %3383 = vmatprep.subr.mxu0 %v3176
      %3384 = vmatpush2.msra.mxu0 %v3175
      %3385 = vmatprep.subr.mxu0 %v3169
      %3386 = vmatpush2.msra.mxu0 %v3168
      %3387 = vmatprep.subr.mxu0 %v3162
      %3388 = vmatpush2.msra.mxu0 %v3161
      %3389 = vmatprep.subr.mxu0 %v3155
      %3390 = vmatpush2.msra.mxu0 %v3154
      %3391 = vmatprep.subr.mxu0 %v3148
      %3392 = vmatpush2.msra.mxu0 %v3147
      %3393 = vmatprep.subr.mxu0 %v3141
      %3394 = vmatpush2.msra.mxu0 %v3140
      %3395 = vmatprep.subr.mxu0 %v3134
      %3396 = vmatpush2.msra.mxu0 %v3133
      %3397 = vmatprep.subr.mxu0 %v3127
      %3398 = vmatpush2.msra.mxu0 %v3126
      %3399 = vmatprep.subr.mxu0 %v3120
      %3400 = vmatpush2.msra.mxu0 %v3119
      %3401 = vmatprep.mubr.f32.mxu0 %v3004
      %3402 = vmatmul.mubr.f32.gmra.mxu0 %v3003
      %v3403 = vpop.f32.mrf.mxu0
      %v3404 = vadd.f32 %v3242, %v3403
      %v3405 = vpop.f32.mrf.mxu0
      %v3406 = vadd.f32 %v3246, %v3405
      %3407 = vdwg.mxu0
      %3408 = vmatprep.subr.mxu0 %v3115
      %3409 = vmatpush1.msra.mxu0 %v3114
      %3410 = vmatprep.subr.mxu0 %v3108
      %3411 = vmatpush1.msra.mxu0 %v3107
      %3412 = vmatprep.subr.mxu0 %v3101
      %3413 = vmatpush1.msra.mxu0 %v3100
      %3414 = vmatprep.subr.mxu0 %v3094
      %3415 = vmatpush1.msra.mxu0 %v3093
      %3416 = vmatprep.subr.mxu0 %v3087
      %3417 = vmatpush1.msra.mxu0 %v3086
      %3418 = vmatprep.subr.mxu0 %v3080
      %3419 = vmatpush1.msra.mxu0 %v3079
      %3420 = vmatprep.subr.mxu0 %v3073
      %3421 = vmatpush1.msra.mxu0 %v3072
      %3422 = vmatprep.subr.mxu0 %v3066
      %3423 = vmatpush1.msra.mxu0 %v3065
      %3424 = vmatprep.subr.mxu0 %v3059
      %3425 = vmatpush1.msra.mxu0 %v3058
      %3426 = vmatprep.subr.mxu0 %v3052
      %3427 = vmatpush1.msra.mxu0 %v3051
      %3428 = vmatprep.subr.mxu0 %v3045
      %3429 = vmatpush1.msra.mxu0 %v3044
      %3430 = vmatprep.subr.mxu0 %v3038
      %3431 = vmatpush1.msra.mxu0 %v3037
      %3432 = vmatprep.subr.mxu0 %v3031
      %3433 = vmatpush1.msra.mxu0 %v3030
      %3434 = vmatprep.subr.mxu0 %v3024
      %3435 = vmatpush1.msra.mxu0 %v3023
      %3436 = vmatprep.subr.mxu0 %v3017
      %3437 = vmatpush1.msra.mxu0 %v3016
      %3438 = vmatprep.subr.mxu0 %v3010
      %3439 = vmatpush1.msra.mxu0 %v3009
      %3440 = vmatprep.subr.mxu0 %v3227
      %3441 = vmatpush2.msra.mxu0 %v3226
      %3442 = vmatprep.subr.mxu0 %v3220
      %3443 = vmatpush2.msra.mxu0 %v3219
      %3444 = vmatprep.subr.mxu0 %v3213
      %3445 = vmatpush2.msra.mxu0 %v3212
      %3446 = vmatprep.subr.mxu0 %v3206
      %3447 = vmatpush2.msra.mxu0 %v3205
      %3448 = vmatprep.subr.mxu0 %v3199
      %3449 = vmatpush2.msra.mxu0 %v3198
      %3450 = vmatprep.subr.mxu0 %v3192
      %3451 = vmatpush2.msra.mxu0 %v3191
      %3452 = vmatprep.subr.mxu0 %v3185
      %3453 = vmatpush2.msra.mxu0 %v3184
      %3454 = vmatprep.subr.mxu0 %v3178
      %3455 = vmatpush2.msra.mxu0 %v3177
      %3456 = vmatprep.subr.mxu0 %v3171
      %3457 = vmatpush2.msra.mxu0 %v3170
      %3458 = vmatprep.subr.mxu0 %v3164
      %3459 = vmatpush2.msra.mxu0 %v3163
      %3460 = vmatprep.subr.mxu0 %v3157
      %3461 = vmatpush2.msra.mxu0 %v3156
      %3462 = vmatprep.subr.mxu0 %v3150
      %3463 = vmatpush2.msra.mxu0 %v3149
      %3464 = vmatprep.subr.mxu0 %v3143
      %3465 = vmatpush2.msra.mxu0 %v3142
      %3466 = vmatprep.subr.mxu0 %v3136
      %3467 = vmatpush2.msra.mxu0 %v3135
      %3468 = vmatprep.subr.mxu0 %v3129
      %3469 = vmatpush2.msra.mxu0 %v3128
      %3470 = vmatprep.subr.mxu0 %v3122
      %3471 = vmatpush2.msra.mxu0 %v3121
      %3472 = vmatprep.mubr.f32.mxu0 %v3004
      %3473 = vmatmul.mubr.f32.gmra.mxu0 %v3003
      %v3474 = vpop.f32.mrf.mxu0
      %v3475 = vadd.f32 %v3250, %v3474
      %v3476 = vpop.f32.mrf.mxu0
      %v3477 = vadd.f32 %v3254, %v3476
      %3478 = vdwg.mxu0
      %3479 = vmatprep.subr.mxu0 0.0
      %3480 = vmatpush1.msra.mxu0 %v3116
      %3481 = vmatprep.subr.mxu0 0.0
      %3482 = vmatpush1.msra.mxu0 %v3109
      %3483 = vmatprep.subr.mxu0 0.0
      %3484 = vmatpush1.msra.mxu0 %v3102
      %3485 = vmatprep.subr.mxu0 0.0
      %3486 = vmatpush1.msra.mxu0 %v3095
      %3487 = vmatprep.subr.mxu0 0.0
      %3488 = vmatpush1.msra.mxu0 %v3088
      %3489 = vmatprep.subr.mxu0 0.0
      %3490 = vmatpush1.msra.mxu0 %v3081
      %3491 = vmatprep.subr.mxu0 0.0
      %3492 = vmatpush1.msra.mxu0 %v3074
      %3493 = vmatprep.subr.mxu0 0.0
      %3494 = vmatpush1.msra.mxu0 %v3067
      %3495 = vmatprep.subr.mxu0 0.0
      %3496 = vmatpush1.msra.mxu0 %v3060
      %3497 = vmatprep.subr.mxu0 0.0
      %3498 = vmatpush1.msra.mxu0 %v3053
      %3499 = vmatprep.subr.mxu0 0.0
      %3500 = vmatpush1.msra.mxu0 %v3046
      %3501 = vmatprep.subr.mxu0 0.0
      %3502 = vmatpush1.msra.mxu0 %v3039
      %3503 = vmatprep.subr.mxu0 0.0
      %3504 = vmatpush1.msra.mxu0 %v3032
      %3505 = vmatprep.subr.mxu0 0.0
      %3506 = vmatpush1.msra.mxu0 %v3025
      %3507 = vmatprep.subr.mxu0 0.0
      %3508 = vmatpush1.msra.mxu0 %v3018
      %3509 = vmatprep.subr.mxu0 0.0
      %3510 = vmatpush1.msra.mxu0 %v3011
      %3511 = vmatprep.subr.mxu0 0.0
      %3512 = vmatpush2.msra.mxu0 %v3228
      %3513 = vmatprep.subr.mxu0 0.0
      %3514 = vmatpush2.msra.mxu0 %v3221
      %3515 = vmatprep.subr.mxu0 0.0
      %3516 = vmatpush2.msra.mxu0 %v3214
      %3517 = vmatprep.subr.mxu0 0.0
      %3518 = vmatpush2.msra.mxu0 %v3207
      %3519 = vmatprep.subr.mxu0 0.0
      %3520 = vmatpush2.msra.mxu0 %v3200
      %3521 = vmatprep.subr.mxu0 0.0
      %3522 = vmatpush2.msra.mxu0 %v3193
      %3523 = vmatprep.subr.mxu0 0.0
      %3524 = vmatpush2.msra.mxu0 %v3186
      %3525 = vmatprep.subr.mxu0 0.0
      %3526 = vmatpush2.msra.mxu0 %v3179
      %3527 = vmatprep.subr.mxu0 0.0
      %3528 = vmatpush2.msra.mxu0 %v3172
      %3529 = vmatprep.subr.mxu0 0.0
      %3530 = vmatpush2.msra.mxu0 %v3165
      %3531 = vmatprep.subr.mxu0 0.0
      %3532 = vmatpush2.msra.mxu0 %v3158
      %3533 = vmatprep.subr.mxu0 0.0
      %3534 = vmatpush2.msra.mxu0 %v3151
      %3535 = vmatprep.subr.mxu0 0.0
      %3536 = vmatpush2.msra.mxu0 %v3144
      %3537 = vmatprep.subr.mxu0 0.0
      %3538 = vmatpush2.msra.mxu0 %v3137
      %3539 = vmatprep.subr.mxu0 0.0
      %3540 = vmatpush2.msra.mxu0 %v3130
      %3541 = vmatprep.subr.mxu0 0.0
      %3542 = vmatpush2.msra.mxu0 %v3123
      %3543 = vmatprep.mubr.f32.mxu0 %v3004
      %3544 = vmatmul.mubr.f32.gmra.mxu0 %v3003
      %v3545 = vpop.f32.mrf.mxu0
      %v3546 = vadd.f32 %v3258, %v3545
      %v3547 = vpop.f32.mrf.mxu0
      %3548 = vdwg.mxu0
      %v3549 = vxor.u32 %v3333, 2147483648
      %v3550 = vxor.u32 %v3335, 2147483648
      %v3551 = vxor.u32 %v3404, 2147483648
      %v3552 = vxor.u32 %v3406, 2147483648
      %v3553 = vxor.u32 %v3475, 2147483648
      %v3554 = vxor.u32 %v3477, 2147483648
      %v3555 = vxor.u32 %v3546, 2147483648
      %v3556 = vmul.f32 %v3549, 1.442695
      %v3557 = vpow.pop %v3556
      %v3558 = vmul.f32 %v3550, 1.442695
      %v3559 = vpow.pop %v3558
      %v3560 = vmul.f32 %v3551, 1.442695
      %v3561 = vpow.pop %v3560
      %v3562 = vmul.f32 %v3552, 1.442695
      %v3563 = vpow.pop %v3562
      %v3564 = vmul.f32 %v3553, 1.442695
      %v3565 = vpow.pop %v3564
      %v3566 = vmul.f32 %v3554, 1.442695
      %v3567 = vpow.pop %v3566
      %v3568 = vmul.f32 %v3555, 1.442695
      %v3569 = vpow.pop %v3568
      %v3570 = vadd.f32 %v3557, 1.0
      %v3571 = vadd.f32 %v3559, 1.0
      %v3572 = vadd.f32 %v3561, 1.0
      %v3573 = vadd.f32 %v3563, 1.0
      %v3574 = vadd.f32 %v3565, 1.0
      %v3575 = vadd.f32 %v3567, 1.0
      %v3576 = vadd.f32 %v3569, 1.0
      %v3577 = vrcp.pop %v3570
      %v3578 = vmul.f32 1.0, %v3577
      %v3579 = vrcp.pop %v3571
      %v3580 = vmul.f32 1.0, %v3579
      %v3581 = vrcp.pop %v3572
      %v3582 = vmul.f32 1.0, %v3581
      %v3583 = vrcp.pop %v3573
      %v3584 = vmul.f32 1.0, %v3583
      %v3585 = vrcp.pop %v3574
      %v3586 = vmul.f32 1.0, %v3585
      %v3587 = vrcp.pop %v3575
      %v3588 = vmul.f32 1.0, %v3587
      %v3589 = vrcp.pop %v3576
      %v3590 = vmul.f32 1.0, %v3589
      %3591 = vst [vmem:[%s1235] sm:$0xff] %v2124
      %3592 = vst [vmem:[%s1242] sm:$0xff] %v2115
      %3593 = vst [vmem:[%s1249] sm:$0xff] %v2120
      %3594 = vst [vmem:[%s1256] sm:$0xff] %v2433
      %3595 = vst [vmem:[%s1263] sm:$0xff] %v2424
      %3596 = vst [vmem:[%s1270] sm:$0xff] %v2429
      %3597 = vst [vmem:[%s1277] sm:$0xff] %v2733
      %3598 = vst [vmem:[%s1284] sm:$0xff] %v2738
      %3599 = vst [vmem:[%s1293] sm:$0xff] %v3578
      %3600 = vst [vmem:[%s1293 + $0x8] sm:$0xff] %v3580
      %3601 = vst [vmem:[%s1293 + $0x10] sm:$0xff] %v3582
      %3602 = vst [vmem:[%s1293 + $0x18] sm:$0xff] %v3584
      %3603 = vst [vmem:[%s1293 + $0x20] sm:$0xff] %v3586
      %3604 = vst [vmem:[%s1293 + $0x28] sm:$0xff] %v3588
      %3605 = vst [vmem:[%s1293 + $0x30] sm:$0xff] %v3590
      %p3606 = scmp.lt.s32.totalorder %s88, 3
      %s3607 = scalar_select %p3606, %s88, 3
      %p3608 = scmp.lt.s32.totalorder %s87, 0
      %s3609 = scalar_select %p3608, %s87, 0
      %s3610 = sadd.s32 %s3609, %s3607
      %s3611 = smul.addr %s3610, 8
      %s3612 = scalar_lea.vmem %s55, %s3611
      %p3613 = scmp.lt.s32.totalorder %s88, 3
      %s3614 = scalar_select %p3613, %s88, 3
      %p3615 = scmp.lt.s32.totalorder %s87, 0
      %s3616 = scalar_select %p3615, %s87, 0
      %s3617 = sadd.s32 %s3616, %s3614
      %s3618 = smul.addr %s3617, 8
      %s3619 = scalar_lea.vmem %s57, %s3618
      %p3620 = scmp.lt.s32.totalorder %s88, 3
      %s3621 = scalar_select %p3620, %s88, 3
      %p3622 = scmp.lt.s32.totalorder %s87, 0
      %s3623 = scalar_select %p3622, %s87, 0
      %s3624 = sadd.s32 %s3623, %s3621
      %s3625 = smul.addr %s3624, 8
      %s3626 = scalar_lea.vmem %s59, %s3625
      %p3627 = scmp.lt.s32.totalorder %s88, 3
      %s3628 = scalar_select %p3627, %s88, 3
      %p3629 = scmp.lt.s32.totalorder %s87, 0
      %s3630 = scalar_select %p3629, %s87, 0
      %s3631 = sadd.s32 %s3630, %s3628
      %s3632 = smul.addr %s3631, 8
      %s3633 = scalar_lea.vmem %s61, %s3632
      %p3634 = scmp.lt.s32.totalorder %s88, 3
      %s3635 = scalar_select %p3634, %s88, 3
      %p3636 = scmp.lt.s32.totalorder %s87, 0
      %s3637 = scalar_select %p3636, %s87, 0
      %s3638 = sadd.s32 %s3637, %s3635
      %s3639 = smul.addr %s3638, 8
      %s3640 = scalar_lea.vmem %s63, %s3639
      %p3641 = scmp.lt.s32.totalorder %s88, 3
      %s3642 = scalar_select %p3641, %s88, 3
      %p3643 = scmp.lt.s32.totalorder %s87, 0
      %s3644 = scalar_select %p3643, %s87, 0
      %s3645 = sadd.s32 %s3644, %s3642
      %s3646 = smul.addr %s3645, 8
      %s3647 = scalar_lea.vmem %s65, %s3646
      %p3648 = scmp.lt.s32.totalorder %s88, 3
      %s3649 = scalar_select %p3648, %s88, 3
      %p3650 = scmp.lt.s32.totalorder %s87, 0
      %s3651 = scalar_select %p3650, %s87, 0
      %s3652 = sadd.s32 %s3651, %s3649
      %s3653 = smul.addr %s3652, 8
      %s3654 = scalar_lea.vmem %s67, %s3653
      %p3655 = scmp.lt.s32.totalorder %s88, 3
      %s3656 = scalar_select %p3655, %s88, 3
      %p3657 = scmp.lt.s32.totalorder %s87, 0
      %s3658 = scalar_select %p3657, %s87, 0
      %s3659 = sadd.s32 %s3658, %s3656
      %s3660 = smul.addr %s3659, 8
      %s3661 = scalar_lea.vmem %s69, %s3660
      %p3662 = scmp.lt.s32.totalorder %s88, 3
      %s3663 = scalar_select %p3662, %s88, 3
      %p3664 = scmp.lt.s32.totalorder %s87, 0
      %s3665 = scalar_select %p3664, %s87, 0
      %s3666 = smul.addr %s3665, 7
      %s3667 = smul.addr %s3663, 7
      %s3668 = sadd.s32 %s3666, %s3667
      %s3669 = smul.addr %s3668, 8
      %s3670 = scalar_lea.vmem %s71, %s3669
      // Predicated region
      $region129: #{iwae_forward.1} parent=127 // pred_check
        %p3671 = pneg %p701
      $region130: #{iwae_forward.1} parent=127 // pred_check_branch
        %3673 = sbr.rel (%p3671) target = $region132
      $region131: #{iwae_forward.1} parent=127 // pred_region
        _
      $region132: #{iwae_forward.1} parent=127 // pred_fallthru
        _
      // Predicated region
      $region133: #{iwae_forward.1} parent=127 // pred_check
        %p3674 = pneg %p729
      $region134: #{iwae_forward.1} parent=127 // pred_check_branch
        %3676 = sbr.rel (%p3674) target = $region136
      $region135: #{iwae_forward.1} parent=127 // pred_region
        _
      $region136: #{iwae_forward.1} parent=127 // pred_fallthru
        _
      // Predicated region
      $region137: #{iwae_forward.1} parent=127 // pred_check
        %p3677 = pneg %p757
      $region138: #{iwae_forward.1} parent=127 // pred_check_branch
        %3679 = sbr.rel (%p3677) target = $region140
      $region139: #{iwae_forward.1} parent=127 // pred_region
        _
      $region140: #{iwae_forward.1} parent=127 // pred_fallthru
        _
      // Predicated region
      $region141: #{iwae_forward.1} parent=127 // pred_check
        %p3680 = pneg %p785
      $region142: #{iwae_forward.1} parent=127 // pred_check_branch
        %3682 = sbr.rel (%p3680) target = $region144
      $region143: #{iwae_forward.1} parent=127 // pred_region
        _
      $region144: #{iwae_forward.1} parent=127 // pred_fallthru
        _
      // Predicated region
      $region145: #{iwae_forward.1} parent=127 // pred_check
        %p3683 = pneg %p813
      $region146: #{iwae_forward.1} parent=127 // pred_check_branch
        %3685 = sbr.rel (%p3683) target = $region148
      $region147: #{iwae_forward.1} parent=127 // pred_region
        _
      $region148: #{iwae_forward.1} parent=127 // pred_fallthru
        _
      // Predicated region
      $region149: #{iwae_forward.1} parent=127 // pred_check
        %p3686 = pneg %p841
      $region150: #{iwae_forward.1} parent=127 // pred_check_branch
        %3688 = sbr.rel (%p3686) target = $region152
      $region151: #{iwae_forward.1} parent=127 // pred_region
        _
      $region152: #{iwae_forward.1} parent=127 // pred_fallthru
        _
      // Predicated region
      $region153: #{iwae_forward.1} parent=127 // pred_check
        %p3689 = pneg %p869
      $region154: #{iwae_forward.1} parent=127 // pred_check_branch
        %3691 = sbr.rel (%p3689) target = $region156
      $region155: #{iwae_forward.1} parent=127 // pred_region
        _
      $region156: #{iwae_forward.1} parent=127 // pred_fallthru
        _
      // Predicated region
      $region157: #{iwae_forward.1} parent=127 // pred_check
        %p3692 = pneg %p897
      $region158: #{iwae_forward.1} parent=127 // pred_check_branch
        %3694 = sbr.rel (%p3692) target = $region160
      $region159: #{iwae_forward.1} parent=127 // pred_region
        _
      $region160: #{iwae_forward.1} parent=127 // pred_fallthru
        _
      // Predicated region
      $region161: #{iwae_forward.1} parent=127 // pred_check
        %p3695 = pneg %p925
      $region162: #{iwae_forward.1} parent=127 // pred_check_branch
        %3697 = sbr.rel (%p3695) target = $region164
      $region163: #{iwae_forward.1} parent=127 // pred_region
        _
      $region164: #{iwae_forward.1} parent=127 // pred_fallthru
        _
    $region128: #{iwae_forward.1} parent=5 // pred_fallthru
      _
    %p3698 = scmp.le.s32.totalorder 2, %s78
    // Predicated region
    $region165: #{iwae_forward.1} parent=5 // pred_check
      %p3699 = pneg %p3698
    $region166: #{iwae_forward.1} parent=5 // pred_check_branch
      %3701 = sbr.rel (%p3699) target = $region168
    $region167: #{iwae_forward.1} parent=5 // pred_region
      %s3702 = ssub.s32 %s78, 2
      // Predicated region
      $region169: #{iwae_forward.1} parent=167 // pred_check
        %p3703 = pneg %p707
      $region170: #{iwae_forward.1} parent=167 // pred_check_branch
        %3705 = sbr.rel (%p3703) target = $region172
      $region171: #{iwae_forward.1} parent=167 // pred_region
        %p3706 = scmp.lt.s32.totalorder %s90, 3
        %s3707 = scalar_select %p3706, %s90, 3
        %p3708 = scmp.lt.s32.totalorder %s89, 0
        %s3709 = scalar_select %p3708, %s89, 0
        %s3710 = sadd.s32 %s3709, %s3707
        %s3711 = smul.addr %s3710, 8
        %s3712 = scalar_lea.vmem %s55, %s3711
      $region172: #{iwae_forward.1} parent=167 // pred_fallthru
        _
      // Predicated region
      $region173: #{iwae_forward.1} parent=167 // pred_check
        %p3713 = pneg %p735
      $region174: #{iwae_forward.1} parent=167 // pred_check_branch
        %3715 = sbr.rel (%p3713) target = $region176
      $region175: #{iwae_forward.1} parent=167 // pred_region
        %p3716 = scmp.lt.s32.totalorder %s90, 3
        %s3717 = scalar_select %p3716, %s90, 3
        %p3718 = scmp.lt.s32.totalorder %s89, 0
        %s3719 = scalar_select %p3718, %s89, 0
        %s3720 = sadd.s32 %s3719, %s3717
        %s3721 = smul.addr %s3720, 8
        %s3722 = scalar_lea.vmem %s57, %s3721
      $region176: #{iwae_forward.1} parent=167 // pred_fallthru
        _
      // Predicated region
      $region177: #{iwae_forward.1} parent=167 // pred_check
        %p3723 = pneg %p763
      $region178: #{iwae_forward.1} parent=167 // pred_check_branch
        %3725 = sbr.rel (%p3723) target = $region180
      $region179: #{iwae_forward.1} parent=167 // pred_region
        %p3726 = scmp.lt.s32.totalorder %s90, 3
        %s3727 = scalar_select %p3726, %s90, 3
        %p3728 = scmp.lt.s32.totalorder %s89, 0
        %s3729 = scalar_select %p3728, %s89, 0
        %s3730 = sadd.s32 %s3729, %s3727
        %s3731 = smul.addr %s3730, 8
        %s3732 = scalar_lea.vmem %s59, %s3731
      $region180: #{iwae_forward.1} parent=167 // pred_fallthru
        _
      // Predicated region
      $region181: #{iwae_forward.1} parent=167 // pred_check
        %p3733 = pneg %p791
      $region182: #{iwae_forward.1} parent=167 // pred_check_branch
        %3735 = sbr.rel (%p3733) target = $region184
      $region183: #{iwae_forward.1} parent=167 // pred_region
        %p3736 = scmp.lt.s32.totalorder %s90, 3
        %s3737 = scalar_select %p3736, %s90, 3
        %p3738 = scmp.lt.s32.totalorder %s89, 0
        %s3739 = scalar_select %p3738, %s89, 0
        %s3740 = sadd.s32 %s3739, %s3737
        %s3741 = smul.addr %s3740, 8
        %s3742 = scalar_lea.vmem %s61, %s3741
      $region184: #{iwae_forward.1} parent=167 // pred_fallthru
        _
      // Predicated region
      $region185: #{iwae_forward.1} parent=167 // pred_check
        %p3743 = pneg %p819
      $region186: #{iwae_forward.1} parent=167 // pred_check_branch
        %3745 = sbr.rel (%p3743) target = $region188
      $region187: #{iwae_forward.1} parent=167 // pred_region
        %p3746 = scmp.lt.s32.totalorder %s90, 3
        %s3747 = scalar_select %p3746, %s90, 3
        %p3748 = scmp.lt.s32.totalorder %s89, 0
        %s3749 = scalar_select %p3748, %s89, 0
        %s3750 = sadd.s32 %s3749, %s3747
        %s3751 = smul.addr %s3750, 8
        %s3752 = scalar_lea.vmem %s63, %s3751
      $region188: #{iwae_forward.1} parent=167 // pred_fallthru
        _
      // Predicated region
      $region189: #{iwae_forward.1} parent=167 // pred_check
        %p3753 = pneg %p847
      $region190: #{iwae_forward.1} parent=167 // pred_check_branch
        %3755 = sbr.rel (%p3753) target = $region192
      $region191: #{iwae_forward.1} parent=167 // pred_region
        %p3756 = scmp.lt.s32.totalorder %s90, 3
        %s3757 = scalar_select %p3756, %s90, 3
        %p3758 = scmp.lt.s32.totalorder %s89, 0
        %s3759 = scalar_select %p3758, %s89, 0
        %s3760 = sadd.s32 %s3759, %s3757
        %s3761 = smul.addr %s3760, 8
        %s3762 = scalar_lea.vmem %s65, %s3761
      $region192: #{iwae_forward.1} parent=167 // pred_fallthru
        _
      // Predicated region
      $region193: #{iwae_forward.1} parent=167 // pred_check
        %p3763 = pneg %p875
      $region194: #{iwae_forward.1} parent=167 // pred_check_branch
        %3765 = sbr.rel (%p3763) target = $region196
      $region195: #{iwae_forward.1} parent=167 // pred_region
        %p3766 = scmp.lt.s32.totalorder %s90, 3
        %s3767 = scalar_select %p3766, %s90, 3
        %p3768 = scmp.lt.s32.totalorder %s89, 0
        %s3769 = scalar_select %p3768, %s89, 0
        %s3770 = sadd.s32 %s3769, %s3767
        %s3771 = smul.addr %s3770, 8
        %s3772 = scalar_lea.vmem %s67, %s3771
      $region196: #{iwae_forward.1} parent=167 // pred_fallthru
        _
      // Predicated region
      $region197: #{iwae_forward.1} parent=167 // pred_check
        %p3773 = pneg %p903
      $region198: #{iwae_forward.1} parent=167 // pred_check_branch
        %3775 = sbr.rel (%p3773) target = $region200
      $region199: #{iwae_forward.1} parent=167 // pred_region
        %p3776 = scmp.lt.s32.totalorder %s90, 3
        %s3777 = scalar_select %p3776, %s90, 3
        %p3778 = scmp.lt.s32.totalorder %s89, 0
        %s3779 = scalar_select %p3778, %s89, 0
        %s3780 = sadd.s32 %s3779, %s3777
        %s3781 = smul.addr %s3780, 8
        %s3782 = scalar_lea.vmem %s69, %s3781
      $region200: #{iwae_forward.1} parent=167 // pred_fallthru
        _
      // Predicated region
      $region201: #{iwae_forward.1} parent=167 // pred_check
        %p3783 = pneg %p931
      $region202: #{iwae_forward.1} parent=167 // pred_check_branch
        %3785 = sbr.rel (%p3783) target = $region204
      $region203: #{iwae_forward.1} parent=167 // pred_region
        %p3786 = scmp.lt.s32.totalorder %s90, 3
        %s3787 = scalar_select %p3786, %s90, 3
        %p3788 = scmp.lt.s32.totalorder %s89, 0
        %s3789 = scalar_select %p3788, %s89, 0
        %s3790 = smul.addr %s3789, 7
        %s3791 = smul.addr %s3787, 7
        %s3792 = sadd.s32 %s3790, %s3791
        %s3793 = smul.addr %s3792, 8
        %s3794 = scalar_lea.vmem %s71, %s3793
      $region204: #{iwae_forward.1} parent=167 // pred_fallthru
        _
    $region168: #{iwae_forward.1} parent=5 // pred_fallthru
      _
  $region6: #{iwae_forward.1} parent=0 // loop_footer
    %s82 = sadd.s32 1, %s78
  $region7: #{iwae_forward.1} parent=0 // loop_footer_branch
    %77 = sbr.rel target = $region3
  $region8: #{iwae_forward.1} parent=0 // loop_exit
    _

</llo_original>
